<compile_context>
chip_gen: v5e
topology: v5e:2x2
jax: 0.10.0
libtpu: 0.0.40
codegen_flags: <defaults>
</compile_context>

<pallas_src>
import functools

import jax
import jax.numpy as jnp
from jax.experimental import pallas as pl
from jax.experimental.pallas import tpu as pltpu

EPS = 1e-5
LANE = 128


def _round_up(n, m):
    return (n + m - 1) // m * m


def _vmem_budget_bytes():
    """~75% of physical VMEM: 48 MiB on v7x (64 MiB), 96 MiB on v5e/v6e."""
    try:
        cap = int(pltpu.get_tpu_info().vmem_capacity_bytes)
    except Exception:
        cap = 64 * 1024 * 1024
    return min(cap * 3 // 4, 100 * 1024 * 1024)


_VMEM_BUDGET = _vmem_budget_bytes()


def _pick_h_tile(h, cap):
    """Largest divisor of h that is <= cap."""
    cap = max(1, min(cap, h))
    for t in range(cap, 0, -1):
        if h % t == 0:
            return t
    return h


def _derive_row_tile(cap, budget, cin_p, cm_p, co_p, bpe):
    """Largest row tile (multiple of 8, <= cap) whose double-buffered in/out
    blocks plus resident weights fit the per-call VMEM budget."""
    budget = budget - (8 << 20)                       # headroom (stats, misc)

    def rows(ci, co, in_b, out_b, wt_b):
        fixed = 2 * ci * co * wt_b                    # double-buffered weight
        per_row = 2 * (ci * in_b + co * out_b)        # double-buffered blocks
        return max(8, (budget - fixed) // per_row)

    cap = min(cap,
              rows(cin_p, cm_p, bpe, bpe, bpe),       # conv1 (1x1)
              rows(cm_p, co_p, bpe, bpe, bpe),        # conv3 (1x1)
              rows(co_p, co_p, bpe + 4, 4, 0))        # bn3 + add + relu
    return max(8, cap // 8 * 8)


def _finalize_bn(stats, count, gamma, beta):
    """stats: (..., 2, C) per-tile [sum, sum_sq] partials -> (scale, bias)."""
    s = jnp.sum(stats.reshape(-1, 2, stats.shape[-1]), axis=0)      # (2, C)
    mean = s[0] / count
    var = jnp.maximum(s[1] / count - mean * mean, 0.0)              # biased
    scale = gamma * jax.lax.rsqrt(var + EPS)
    bias = beta - mean * scale
    return scale.reshape(1, -1), bias.reshape(1, -1)


# ---------------------------------------------------------------------------
# kernels
# ---------------------------------------------------------------------------
def _matmul_stats_kernel(x_ref, w_ref, y_ref, st_ref):
    """x @ w (f32 acc) + per-tile [sum, sum_sq] stats; stores x.dtype output."""
    y = jnp.dot(x_ref[...], w_ref[...], preferred_element_type=jnp.float32)
    y_ref[...] = y.astype(y_ref.dtype)
    st_ref[...] = jnp.concatenate(
        [jnp.sum(y, axis=0, keepdims=True),
         jnp.sum(y * y, axis=0, keepdims=True)], axis=0)


def _act_matmul_stats_kernel(x_ref, s_ref, b_ref, w_ref, y_ref, st_ref, *,
                             m_valid):
    """relu(x*scale+bias) @ w (f32 acc) + per-tile stats.

    m_valid (static): if set, rows with global index >= m_valid are padding
    rows and are zeroed before the matmul so they do not pollute the stats.
    """
    tm = x_ref.shape[0]
    a = jnp.maximum(x_ref[...].astype(jnp.float32) * s_ref[...] + b_ref[...],
                    0.0)
    if m_valid is not None:
        row = (pl.program_id(0) * tm
               + jax.lax.broadcasted_iota(jnp.int32, (tm, 1), 0))
        a = jnp.where(row < m_valid, a, 0.0)
    y = jnp.dot(a.astype(w_ref.dtype), w_ref[...],
                preferred_element_type=jnp.float32)
    y_ref[...] = y.astype(y_ref.dtype)
    st_ref[...] = jnp.concatenate(
        [jnp.sum(y, axis=0, keepdims=True),
         jnp.sum(y * y, axis=0, keepdims=True)], axis=0)


def _conv3x3_stats_kernel(y_ref, s_ref, b_ref, w_ref, z_ref, st_ref, pad_ref):
    """bn1(affine)+relu -> 3x3 conv (pad=1, stride=1), row-tiled with halo.

    y_ref : (H, W, C) full image (resident across the row-tile axis)
    z_ref : (th, W, C) output row tile;  st_ref : (2, C) per-tile stats
    pad_ref: (th+2, W+2, C) scratch in the matmul dtype (halo zeroed)
    """
    th, W, C = z_ref.shape
    j = pl.program_id(1)
    n_jt = pl.num_programs(1)
    row0 = j * th

    s = s_ref[...]                       # (1, C) f32
    b = b_ref[...]

    def act(rows):                       # rows: (r, W, C) low-precision
        return jnp.maximum(rows.astype(jnp.float32) * s + b, 0.0)

    # zero the 1-pixel halo (columns + rows); interior overwritten below
    zero_col = jnp.zeros((th + 2, 1, C), pad_ref.dtype)
    pad_ref[:, 0:1, :] = zero_col
    pad_ref[:, W + 1:W + 2, :] = zero_col
    zero_row = jnp.zeros((1, W + 2, C), pad_ref.dtype)
    pad_ref[0:1, :, :] = zero_row
    pad_ref[th + 1:th + 2, :, :] = zero_row

    # interior rows of this tile
    a = act(y_ref[pl.ds(row0, th), :, :])
    pad_ref[1:th + 1, 1:W + 1, :] = a.astype(pad_ref.dtype)

    # 1-row halos from neighbouring tiles (stay zero at the image border)
    @pl.when(j > 0)
    def _():
        top = act(y_ref[pl.ds(row0 - 1, 1), :, :])
        pad_ref[0:1, 1:W + 1, :] = top.astype(pad_ref.dtype)

    @pl.when(j < n_jt - 1)
    def _():
        bot = act(y_ref[pl.ds(row0 + th, 1), :, :])
        pad_ref[th + 1:th + 2, 1:W + 1, :] = bot.astype(pad_ref.dtype)

    # 3x3 conv as tap-PAIR matmuls accumulated in f32 (K = 2*C fills a
    # 256-deep MXU when C == 128); no 9x im2col buffer is ever built.
    taps = [(dh, dw) for dh in range(3) for dw in range(3)]
    acc = jnp.zeros((th * W, C), jnp.float32)
    k = 0
    while k < 9:
        g = 2 if k + 1 < 9 else 1
        cols = [pad_ref[dh:dh + th, dw:dw + W, :].reshape(th * W, C)
                for dh, dw in taps[k:k + g]]
        patch = cols[0] if g == 1 else jnp.concatenate(cols, axis=-1)
        acc = acc + jnp.dot(patch, w_ref[k * C:(k + g) * C, :],
                            preferred_element_type=jnp.float32)
        k += g

    z_ref[...] = acc.reshape(th, W, C).astype(z_ref.dtype)
    st_ref[...] = jnp.concatenate(
        [jnp.sum(acc, axis=0, keepdims=True),
         jnp.sum(acc * acc, axis=0, keepdims=True)], axis=0)


def _bn_add_relu_kernel(y_ref, r_ref, s_ref, b_ref, o_ref):
    y = y_ref[...].astype(jnp.float32)
    o_ref[...] = jnp.maximum(y * s_ref[...] + b_ref[...] + r_ref[...], 0.0)


# ---------------------------------------------------------------------------
# pallas_call wrappers
# ---------------------------------------------------------------------------
def _matmul_stats(x_flat, w, *, tm, act=None, m_valid=None):
    Mr, Ci = x_flat.shape
    Co = w.shape[1]
    gm = Mr // tm
    if act is None:
        kern = _matmul_stats_kernel
        extra_args, extra_specs = (), ()
    else:
        s_in, b_in = act
        kern = functools.partial(_act_matmul_stats_kernel, m_valid=m_valid)
        extra_args = (s_in, b_in)
        extra_specs = (pl.BlockSpec((1, Ci), lambda i: (0, 0)),
                       pl.BlockSpec((1, Ci), lambda i: (0, 0)))
    return pl.pallas_call(
        kern,
        out_shape=(jax.ShapeDtypeStruct((Mr, Co), x_flat.dtype),
                   jax.ShapeDtypeStruct((gm, 2, Co), jnp.float32)),
        grid_spec=pltpu.PrefetchScalarGridSpec(
            num_scalar_prefetch=0,
            grid=(gm,),
            in_specs=[pl.BlockSpec((tm, Ci), lambda i: (i, 0)),
                      *extra_specs,
                      pl.BlockSpec((Ci, Co), lambda i: (0, 0))],
            out_specs=[pl.BlockSpec((tm, Co), lambda i: (i, 0)),
                       pl.BlockSpec((None, 2, Co), lambda i: (i, 0, 0))],
        ),
        compiler_params=pltpu.CompilerParams(
            dimension_semantics=("parallel",),
            vmem_limit_bytes=_VMEM_BUDGET),
    )(x_flat, *extra_args, w)


def _conv3x3_stats(y_img, s_in, b_in, w2cat, *, th):
    N, H, W, C = y_img.shape
    n_jt = H // th
    return pl.pallas_call(
        _conv3x3_stats_kernel,
        out_shape=(jax.ShapeDtypeStruct((N, H, W, C), y_img.dtype),
                   jax.ShapeDtypeStruct((N, n_jt, 2, C), jnp.float32)),
        grid_spec=pltpu.PrefetchScalarGridSpec(
            num_scalar_prefetch=0,
            grid=(N, n_jt),
            in_specs=[
                pl.BlockSpec((None, H, W, C), lambda n, j: (n, 0, 0, 0)),
                pl.BlockSpec((1, C), lambda n, j: (0, 0)),
                pl.BlockSpec((1, C), lambda n, j: (0, 0)),
                pl.BlockSpec((9 * C, C), lambda n, j: (0, 0)),
            ],
            out_specs=[
                pl.BlockSpec((None, th, W, C), lambda n, j: (n, j, 0, 0)),
                pl.BlockSpec((None, None, 2, C), lambda n, j: (n, j, 0, 0)),
            ],
            scratch_shapes=[pltpu.VMEM((th + 2, W + 2, C), y_img.dtype)],
        ),
        compiler_params=pltpu.CompilerParams(
            dimension_semantics=("parallel", "parallel"),
            vmem_limit_bytes=_VMEM_BUDGET),
    )(y_img, s_in, b_in, w2cat)


def _bn_add_relu(y, resid, s_in, b_in, *, tm):
    Mr, C = y.shape
    gm = Mr // tm
    return pl.pallas_call(
        _bn_add_relu_kernel,
        out_shape=jax.ShapeDtypeStruct((Mr, C), jnp.float32),
        grid_spec=pltpu.PrefetchScalarGridSpec(
            num_scalar_prefetch=0,
            grid=(gm,),
            in_specs=[pl.BlockSpec((tm, C), lambda i: (i, 0)),
                      pl.BlockSpec((tm, C), lambda i: (i, 0)),
                      pl.BlockSpec((1, C), lambda i: (0, 0)),
                      pl.BlockSpec((1, C), lambda i: (0, 0))],
            out_specs=pl.BlockSpec((tm, C), lambda i: (i, 0)),
        ),
        compiler_params=pltpu.CompilerParams(
            dimension_semantics=("parallel",),
            vmem_limit_bytes=_VMEM_BUDGET),
    )(y, resid, s_in, b_in)


# ---------------------------------------------------------------------------
# public forward
# ---------------------------------------------------------------------------
@functools.partial(jax.jit,
                   static_argnames=("row_tile", "h_tile", "compute_dtype"))
def bottleneck_forward(x_nhwc, params, *, row_tile=512, h_tile=8,
                       compute_dtype=jnp.bfloat16):
    """Bottleneck forward.  x_nhwc: (N, H, W, Cin) f32 -> (N, H, W, Cout) f32."""
    w1, g1, b1, w2, g2, b2, w3, g3, b3 = params
    N, H, W, Cin = x_nhwc.shape
    Cmid = w1.shape[1]
    Cout = w3.shape[1]
    if Cin != Cout:
        raise ValueError(
            "downsample=None requires in_channels == expansion*mid_channels "
            f"(got Cin={Cin}, Cout={Cout})")

    Cin_p = _round_up(Cin, LANE)
    Cm_p = _round_up(Cmid, LANE)
    Co_p = _round_up(Cout, LANE)
    M = N * H * W
    bpe = jnp.dtype(compute_dtype).itemsize

    tm = _derive_row_tile(row_tile, _VMEM_BUDGET, Cin_p, Cm_p, Co_p, bpe)
    tm = min(tm, max(8, _round_up((M + 1) // 2, 8)))   # ensure >= 2 grid steps
    Mp = _round_up(M, tm)
    th = _pick_h_tile(H, h_tile)

    # lane-dense, matmul-ready weights / BN params (padded channels are zero)
    w1p = jnp.pad(w1, ((0, Cin_p - Cin), (0, Cm_p - Cmid))).astype(compute_dtype)
    w2p = jnp.pad(w2, ((0, 0), (0, Cm_p - Cmid), (0, Cm_p - Cmid)))
    w2cat = w2p.reshape(9 * Cm_p, Cm_p).astype(compute_dtype)
    w3p = jnp.pad(w3, ((0, Cm_p - Cmid), (0, Co_p - Cout))).astype(compute_dtype)
    g1p = jnp.pad(g1, (0, Cm_p - Cmid)); b1p = jnp.pad(b1, (0, Cm_p - Cmid))
    g2p = jnp.pad(g2, (0, Cm_p - Cmid)); b2p = jnp.pad(b2, (0, Cm_p - Cmid))
    g3p = jnp.pad(g3, (0, Co_p - Cout)); b3p = jnp.pad(b3, (0, Co_p - Cout))

    # f32 residual copy + low-precision matmul copy, rows zero-padded to Mp
    x_res = jnp.pad(x_nhwc.astype(jnp.float32),
                    ((0, 0), (0, 0), (0, 0), (0, Cin_p - Cin))).reshape(M, Cin_p)
    x_mm = x_res.astype(compute_dtype)
    if Mp != M:
        x_res = jnp.pad(x_res, ((0, Mp - M), (0, 0)))
        x_mm = jnp.pad(x_mm, ((0, Mp - M), (0, 0)))

    # stage 1: conv1 (1x1) + bn1 stat partials (zero-padded rows contribute 0)
    y1, st1 = _matmul_stats(x_mm, w1p, tm=tm)
    s1, o1 = _finalize_bn(st1, M, g1p, b1p)

    # stage 2: bn1+relu fused into conv2 (3x3, row-tiled, per-tap-pair matmuls)
    z, st2 = _conv3x3_stats(y1[:M].reshape(N, H, W, Cm_p), s1, o1, w2cat, th=th)
    s2, o2 = _finalize_bn(st2, M, g2p, b2p)

    # stage 3: bn2+relu fused into conv3 (1x1); padded rows masked out of stats
    z_flat = z.reshape(M, Cm_p)
    if Mp != M:
        z_flat = jnp.pad(z_flat, ((0, Mp - M), (0, 0)))
    y3, st3 = _matmul_stats(z_flat, w3p, tm=tm, act=(s2, o2),
                            m_valid=None if Mp == M else M)
    s3, o3 = _finalize_bn(st3, M, g3p, b3p)

    # stage 4: bn3 + residual add + relu (residual in f32)
    out = _bn_add_relu(y3, x_res, s3, o3, tm=tm)
    return out[:M].reshape(N, H, W, Co_p)[..., :Cout]


# ---------------------------------------------------------------------------
# pure-JAX reference (training-mode BatchNorm, eps=1e-5).  With
# compute_dtype=bf16 it mirrors the kernel's rounding exactly: bf16 matmul
# inputs AND bf16 intermediate storage, with f32 accumulation and f32 BN
# statistics / affine / residual.  compute_dtype=f32 is the exact module.
# ---------------------------------------------------------------------------
def reference_forward(x_nhwc, params, compute_dtype=jnp.float32):
    w1, g1, b1, w2, g2, b2, w3, g3, b3 = params
    Cmid = w1.shape[1]
    dn = ("NHWC", "HWIO", "NHWC")

    def conv(x, k, pad):
        return jax.lax.conv_general_dilated(
            x.astype(compute_dtype), k.astype(compute_dtype),
            window_strides=(1, 1), padding=pad, dimension_numbers=dn,
            preferred_element_type=jnp.float32)

    def bn_scale_bias(y, g, b):
        mu = jnp.mean(y, axis=(0, 1, 2))
        var = jnp.maximum(jnp.mean(y * y, axis=(0, 1, 2)) - mu * mu, 0.0)
        scale = g * jax.lax.rsqrt(var + EPS)
        return scale, b - mu * scale

    store = lambda y: y.astype(compute_dtype).astype(jnp.float32)
    k1 = w1.reshape(1, 1, *w1.shape)
    k2 = w2.reshape(3, 3, Cmid, Cmid)          # tap k = kh*3 + kw
    k3 = w3.reshape(1, 1, *w3.shape)

    y1 = conv(x_nhwc, k1, "VALID")
    s1, o1 = bn_scale_bias(y1, g1, b1)
    a1 = jax.nn.relu(store(y1) * s1 + o1)
    y2 = conv(a1, k2, ((1, 1), (1, 1)))
    s2, o2 = bn_scale_bias(y2, g2, b2)
    a2 = jax.nn.relu(store(y2) * s2 + o2)
    y3 = conv(a2, k3, "VALID")
    s3, o3 = bn_scale_bias(y3, g3, b3)
    return jax.nn.relu(store(y3) * s3 + o3 + x_nhwc)


def make_params(key, in_channels, mid_channels):
    expansion = 4
    out_channels = mid_channels * expansion
    ks = jax.random.split(key, 8)
    w1 = 0.1 * jax.random.normal(ks[0], (in_channels, mid_channels), jnp.float32)
    w2 = 0.1 * jax.random.normal(ks[1], (9, mid_channels, mid_channels), jnp.float32)
    w3 = 0.1 * jax.random.normal(ks[2], (mid_channels, out_channels), jnp.float32)
    g1 = 1.0 + 0.05 * jax.random.normal(ks[3], (mid_channels,), jnp.float32)
    b1 = 0.05 * jax.random.normal(ks[4], (mid_channels,), jnp.float32)
    g2 = 1.0 + 0.05 * jax.random.normal(ks[5], (mid_channels,), jnp.float32)
    b2 = 0.05 * jax.random.normal(ks[6], (mid_channels,), jnp.float32)
    g3 = 1.0 + 0.05 * jax.random.normal(ks[7], (out_channels,), jnp.float32)
    b3 = jnp.full((out_channels,), 0.01, jnp.float32)
    return (w1, g1, b1, w2, g2, b2, w3, g3, b3)


if __name__ == "__main__":
    key = jax.random.PRNGKey(0)
    k_x, k_p = jax.random.split(key)

    # downsample=None  =>  in_channels == mid_channels * 4 and stride == 1
    N, Cmid, H, W = 2, 8, 16, 16
    Cin = Cmid * 4                                           # 32
    x = jax.random.normal(k_x, (N, H, W, Cin), jnp.float32)  # NHWC
    params = make_params(k_p, Cin, Cmid)

    # row_tile=96 makes M=512 -> Mp=576, exercising the row-padding +
    # masked-stats path as well as the conv2 halo tiling (H=16, th=8).
    out = jax.block_until_ready(bottleneck_forward(x, params, row_tile=96))
    assert out.shape == (N, H, W, Cin)

    # precision-matched reference (bf16 matmul inputs + bf16 intermediate
    # storage, f32 BN statistics / affine / residual, like the kernel).
    ref = jax.block_until_ready(
        reference_forward(x, params, compute_dtype=jnp.bfloat16))
    max_err = float(jnp.max(jnp.abs(out - ref)))
    assert jnp.allclose(out, ref, atol=5e-2, rtol=5e-2), \
        f"max abs err {max_err}"

    print("KERNEL_OK")
</pallas_src>

<mosaic_0001>
module attributes {stable_mosaic.version = 11 : i64} {
  func.func @_matmul_stats_kernel(%arg0: i32, %arg1: memref<96x128xbf16, #tpu.memory_space<vmem>>, %arg2: memref<128x128xbf16, #tpu.memory_space<vmem>>, %arg3: memref<96x128xbf16, #tpu.memory_space<vmem>>, %arg4: memref<1x2x128xf32, #tpu.memory_space<vmem>>) attributes {dimension_semantics = [#tpu.dimension_semantics<parallel>], iteration_bounds = array<i64: 6>, scalar_prefetch = 0 : i64, scratch_operands = 0 : i64, tpu.core_type = #tpu.core_type<tc>, window_params = [{transform_indices = @transform_0, window_bounds = array<i64: 96, 128>}, {pipeline_mode = #tpu.pipeline_mode<synchronous>, transform_indices = @transform_1, window_bounds = array<i64: 128, 128>}, {transform_indices = @transform_2, window_bounds = array<i64: 96, 128>}, {transform_indices = @transform_3, window_bounds = array<i64: 1, 2, 128>}]} {
    %c0 = arith.constant 0 : index
    %c0_0 = arith.constant 0 : index
    %0 = vector.load %arg1[%c0, %c0_0] : memref<96x128xbf16, #tpu.memory_space<vmem>>, vector<96x128xbf16>
    %c0_1 = arith.constant 0 : index
    %c0_2 = arith.constant 0 : index
    %1 = vector.load %arg2[%c0_1, %c0_2] : memref<128x128xbf16, #tpu.memory_space<vmem>>, vector<128x128xbf16>
    %cst = arith.constant dense<0.000000e+00> : vector<96x128xf32>
    %2 = tpu.matmul %0, %1, %cst {dimension_numbers = #tpu.dot_dimension_numbers<[1], [0], [0], [1], [0, 0, 1, 1], [], []>} : vector<96x128xbf16>, vector<128x128xbf16>, vector<96x128xf32> -> vector<96x128xf32>
    %3 = arith.truncf %2 : vector<96x128xf32> to vector<96x128xbf16>
    %c0_3 = arith.constant 0 : index
    %c0_4 = arith.constant 0 : index
    %4 = vector.load %arg3[%c0_3, %c0_4] : memref<96x128xbf16, #tpu.memory_space<vmem>>, vector<96x128xbf16>
    tpu.vector_store %arg3[%c0_3, %c0_4], %3 {strides = array<i32>} : memref<96x128xbf16, #tpu.memory_space<vmem>>, vector<96x128xbf16>,
    %cst_5 = arith.constant dense<0.000000e+00> : vector<128xf32>
    %5 = vector.multi_reduction <add>, %2, %cst_5 [0] : vector<96x128xf32> to vector<128xf32>
    %6 = vector.shape_cast %5 : vector<128xf32> to vector<1x128xf32>
    %7 = arith.mulf %2, %2 : vector<96x128xf32>
    %cst_6 = arith.constant dense<0.000000e+00> : vector<128xf32>
    %8 = vector.multi_reduction <add>, %7, %cst_6 [0] : vector<96x128xf32> to vector<128xf32>
    %9 = vector.shape_cast %8 : vector<128xf32> to vector<1x128xf32>
    %10 = tpu.concatenate %6, %9 in 0 : vector<1x128xf32>, vector<1x128xf32> -> vector<2x128xf32>
    %c0_7 = arith.constant 0 : index
    %c0_8 = arith.constant 0 : index
    %c0_9 = arith.constant 0 : index
    %11 = vector.load %arg4[%c0_7, %c0_8, %c0_9] : memref<1x2x128xf32, #tpu.memory_space<vmem>>, vector<1x2x128xf32>
    %12 = vector.shape_cast %11 : vector<1x2x128xf32> to vector<2x128xf32>
    %13 = vector.shape_cast %10 : vector<2x128xf32> to vector<1x2x128xf32>
    tpu.vector_store %arg4[%c0_7, %c0_8, %c0_9], %13 {strides = array<i32>} : memref<1x2x128xf32, #tpu.memory_space<vmem>>, vector<1x2x128xf32>,
    return
  }
  func.func @transform_0(%arg0: i32) -> (i32, i32) {
    %c0_i32 = arith.constant 0 : i32
    %c0_i32_0 = arith.constant 0 : i32
    return %arg0, %c0_i32 : i32, i32
  }
  func.func @transform_1(%arg0: i32) -> (i32, i32) {
    %c0_i32 = arith.constant 0 : i32
    %c0_i32_0 = arith.constant 0 : i32
    %c0_i32_1 = arith.constant 0 : i32
    return %c0_i32, %c0_i32_0 : i32, i32
  }
  func.func @transform_2(%arg0: i32) -> (i32, i32) {
    %c0_i32 = arith.constant 0 : i32
    %c0_i32_0 = arith.constant 0 : i32
    return %arg0, %c0_i32 : i32, i32
  }
  func.func @transform_3(%arg0: i32) -> (i32, i32, i32) {
    %c0_i32 = arith.constant 0 : i32
    %c0_i32_0 = arith.constant 0 : i32
    %c0_i32_1 = arith.constant 0 : i32
    return %arg0, %c0_i32, %c0_i32_0 : i32, i32, i32
  }
}

module attributes {stable_mosaic.version = 11 : i64} {
  func.func @_conv3x3_stats_kernel(%arg0: i32, %arg1: i32, %arg2: memref<1x16x16x128xbf16, #tpu.memory_space<vmem>>, %arg3: memref<1x128xf32, #tpu.memory_space<vmem>>, %arg4: memref<1x128xf32, #tpu.memory_space<vmem>>, %arg5: memref<1152x128xbf16, #tpu.memory_space<vmem>>, %arg6: memref<1x8x16x128xbf16, #tpu.memory_space<vmem>>, %arg7: memref<1x1x2x128xf32, #tpu.memory_space<vmem>>, %arg8: memref<10x18x128xbf16, #tpu.memory_space<vmem>>) attributes {dimension_semantics = [#tpu.dimension_semantics<parallel>, #tpu.dimension_semantics<parallel>], iteration_bounds = array<i64: 2, 2>, scalar_prefetch = 0 : i64, scratch_operands = 1 : i64, tpu.core_type = #tpu.core_type<tc>, window_params = [{transform_indices = @transform_0, window_bounds = array<i64: 1, 16, 16, 128>}, {pipeline_mode = #tpu.pipeline_mode<synchronous>, transform_indices = @transform_1, window_bounds = array<i64: 1, 128>}, {pipeline_mode = #tpu.pipeline_mode<synchronous>, transform_indices = @transform_2, window_bounds = array<i64: 1, 128>}, {pipeline_mode = #tpu.pipeline_mode<synchronous>, transform_indices = @transform_3, window_bounds = array<i64: 1152, 128>}, {transform_indices = @transform_4, window_bounds = array<i64: 1, 8, 16, 128>}, {transform_indices = @transform_5, window_bounds = array<i64: 1, 1, 2, 128>}]} {
    %c8_i32 = arith.constant 8 : i32
    %0 = arith.muli %arg1, %c8_i32 : i32
    %c0 = arith.constant 0 : index
    %c0_0 = arith.constant 0 : index
    %1 = vector.load %arg3[%c0, %c0_0] : memref<1x128xf32, #tpu.memory_space<vmem>>, vector<1x128xf32>
    %c0_1 = arith.constant 0 : index
    %c0_2 = arith.constant 0 : index
    %2 = vector.load %arg4[%c0_1, %c0_2] : memref<1x128xf32, #tpu.memory_space<vmem>>, vector<1x128xf32>
    %cst = arith.constant 0.000000e+00 : bf16
    %3 = vector.broadcast %cst : bf16 to vector<10x1x128xbf16>
    %c0_3 = arith.constant 0 : index
    %c0_4 = arith.constant 0 : index
    %c0_5 = arith.constant 0 : index
    %4 = vector.load %arg8[%c0_3, %c0_4, %c0_5] : memref<10x18x128xbf16, #tpu.memory_space<vmem>>, vector<10x1x128xbf16>
    tpu.vector_store %arg8[%c0_3, %c0_4, %c0_5], %3 {strides = array<i32>} : memref<10x18x128xbf16, #tpu.memory_space<vmem>>, vector<10x1x128xbf16>,
    %c0_6 = arith.constant 0 : index
    %c17 = arith.constant 17 : index
    %c0_7 = arith.constant 0 : index
    %5 = vector.load %arg8[%c0_6, %c17, %c0_7] : memref<10x18x128xbf16, #tpu.memory_space<vmem>>, vector<10x1x128xbf16>
    tpu.vector_store %arg8[%c0_6, %c17, %c0_7], %3 {strides = array<i32>} : memref<10x18x128xbf16, #tpu.memory_space<vmem>>, vector<10x1x128xbf16>,
    %cst_8 = arith.constant 0.000000e+00 : bf16
    %6 = vector.broadcast %cst_8 : bf16 to vector<1x18x128xbf16>
    %c0_9 = arith.constant 0 : index
    %c0_10 = arith.constant 0 : index
    %c0_11 = arith.constant 0 : index
    %7 = vector.load %arg8[%c0_9, %c0_10, %c0_11] : memref<10x18x128xbf16, #tpu.memory_space<vmem>>, vector<1x18x128xbf16>
    tpu.vector_store %arg8[%c0_9, %c0_10, %c0_11], %6 {strides = array<i32>} : memref<10x18x128xbf16, #tpu.memory_space<vmem>>, vector<1x18x128xbf16>,
    %c9 = arith.constant 9 : index
    %c0_12 = arith.constant 0 : index
    %c0_13 = arith.constant 0 : index
    %8 = vector.load %arg8[%c9, %c0_12, %c0_13] : memref<10x18x128xbf16, #tpu.memory_space<vmem>>, vector<1x18x128xbf16>
    tpu.vector_store %arg8[%c9, %c0_12, %c0_13], %6 {strides = array<i32>} : memref<10x18x128xbf16, #tpu.memory_space<vmem>>, vector<1x18x128xbf16>,
    %c0_14 = arith.constant 0 : index
    %9 = arith.index_cast %0 : i32 to index
    %c0_15 = arith.constant 0 : index
    %c0_16 = arith.constant 0 : index
    %10 = vector.load %arg2[%c0_14, %9, %c0_15, %c0_16] : memref<1x16x16x128xbf16, #tpu.memory_space<vmem>>, vector<1x8x16x128xbf16>
    %11 = vector.shape_cast %10 : vector<1x8x16x128xbf16> to vector<8x16x128xbf16>
    %12 = arith.extf %11 : vector<8x16x128xbf16> to vector<8x16x128xf32>
    %13 = vector.shape_cast %1 : vector<1x128xf32> to vector<1x1x128xf32>
    %14 = vector.broadcast %13 : vector<1x1x128xf32> to vector<8x16x128xf32>
    %15 = arith.mulf %12, %14 : vector<8x16x128xf32>
    %16 = vector.shape_cast %2 : vector<1x128xf32> to vector<1x1x128xf32>
    %17 = vector.broadcast %16 : vector<1x1x128xf32> to vector<8x16x128xf32>
    %18 = arith.addf %15, %17 : vector<8x16x128xf32>
    %cst_17 = arith.constant 0.000000e+00 : f32
    %19 = vector.broadcast %cst_17 : f32 to vector<8x16x128xf32>
    %20 = arith.maximumf %18, %19 : vector<8x16x128xf32>
    %21 = arith.truncf %20 : vector<8x16x128xf32> to vector<8x16x128xbf16>
    %c1 = arith.constant 1 : index
    %c1_18 = arith.constant 1 : index
    %c0_19 = arith.constant 0 : index
    %22 = vector.load %arg8[%c1, %c1_18, %c0_19] : memref<10x18x128xbf16, #tpu.memory_space<vmem>>, vector<8x16x128xbf16>
    tpu.vector_store %arg8[%c1, %c1_18, %c0_19], %21 {strides = array<i32>} : memref<10x18x128xbf16, #tpu.memory_space<vmem>>, vector<8x16x128xbf16>,
    %c0_i32 = arith.constant 0 : i32
    %23 = arith.cmpi sgt, %arg1, %c0_i32 : i32
    %24 = arith.extui %23 : i1 to i32
    %c0_i32_20 = arith.constant 0 : i32
    %25 = arith.cmpi ne, %24, %c0_i32_20 : i32
    scf.if %25 {
      %c1_i32_70 = arith.constant 1 : i32
      %81 = arith.subi %0, %c1_i32_70 : i32
      %c0_71 = arith.constant 0 : index
      %82 = arith.index_cast %81 : i32 to index
      %c0_72 = arith.constant 0 : index
      %c0_73 = arith.constant 0 : index
      %83 = vector.load %arg2[%c0_71, %82, %c0_72, %c0_73] : memref<1x16x16x128xbf16, #tpu.memory_space<vmem>>, vector<1x1x16x128xbf16>
      %84 = vector.shape_cast %83 : vector<1x1x16x128xbf16> to vector<1x16x128xbf16>
      %85 = arith.extf %84 : vector<1x16x128xbf16> to vector<1x16x128xf32>
      %86 = vector.shape_cast %1 : vector<1x128xf32> to vector<1x1x128xf32>
      %87 = vector.broadcast %86 : vector<1x1x128xf32> to vector<1x16x128xf32>
      %88 = arith.mulf %85, %87 : vector<1x16x128xf32>
      %89 = vector.shape_cast %2 : vector<1x128xf32> to vector<1x1x128xf32>
      %90 = vector.broadcast %89 : vector<1x1x128xf32> to vector<1x16x128xf32>
      %91 = arith.addf %88, %90 : vector<1x16x128xf32>
      %cst_74 = arith.constant 0.000000e+00 : f32
      %92 = vector.broadcast %cst_74 : f32 to vector<1x16x128xf32>
      %93 = arith.maximumf %91, %92 : vector<1x16x128xf32>
      %94 = arith.truncf %93 : vector<1x16x128xf32> to vector<1x16x128xbf16>
      %c0_75 = arith.constant 0 : index
      %c1_76 = arith.constant 1 : index
      %c0_77 = arith.constant 0 : index
      %95 = vector.load %arg8[%c0_75, %c1_76, %c0_77] : memref<10x18x128xbf16, #tpu.memory_space<vmem>>, vector<1x16x128xbf16>
      tpu.vector_store %arg8[%c0_75, %c1_76, %c0_77], %94 {strides = array<i32>} : memref<10x18x128xbf16, #tpu.memory_space<vmem>>, vector<1x16x128xbf16>,
    } else {
    }
    %c1_i32 = arith.constant 1 : i32
    %26 = arith.cmpi slt, %arg1, %c1_i32 : i32
    %27 = arith.extui %26 : i1 to i32
    %c0_i32_21 = arith.constant 0 : i32
    %28 = arith.cmpi ne, %27, %c0_i32_21 : i32
    scf.if %28 {
      %c8_i32_70 = arith.constant 8 : i32
      %81 = arith.addi %0, %c8_i32_70 : i32
      %c0_71 = arith.constant 0 : index
      %82 = arith.index_cast %81 : i32 to index
      %c0_72 = arith.constant 0 : index
      %c0_73 = arith.constant 0 : index
      %83 = vector.load %arg2[%c0_71, %82, %c0_72, %c0_73] : memref<1x16x16x128xbf16, #tpu.memory_space<vmem>>, vector<1x1x16x128xbf16>
      %84 = vector.shape_cast %83 : vector<1x1x16x128xbf16> to vector<1x16x128xbf16>
      %85 = arith.extf %84 : vector<1x16x128xbf16> to vector<1x16x128xf32>
      %86 = vector.shape_cast %1 : vector<1x128xf32> to vector<1x1x128xf32>
      %87 = vector.broadcast %86 : vector<1x1x128xf32> to vector<1x16x128xf32>
      %88 = arith.mulf %85, %87 : vector<1x16x128xf32>
      %89 = vector.shape_cast %2 : vector<1x128xf32> to vector<1x1x128xf32>
      %90 = vector.broadcast %89 : vector<1x1x128xf32> to vector<1x16x128xf32>
      %91 = arith.addf %88, %90 : vector<1x16x128xf32>
      %cst_74 = arith.constant 0.000000e+00 : f32
      %92 = vector.broadcast %cst_74 : f32 to vector<1x16x128xf32>
      %93 = arith.maximumf %91, %92 : vector<1x16x128xf32>
      %94 = arith.truncf %93 : vector<1x16x128xf32> to vector<1x16x128xbf16>
      %c9_75 = arith.constant 9 : index
      %c1_76 = arith.constant 1 : index
      %c0_77 = arith.constant 0 : index
      %95 = vector.load %arg8[%c9_75, %c1_76, %c0_77] : memref<10x18x128xbf16, #tpu.memory_space<vmem>>, vector<1x16x128xbf16>
      tpu.vector_store %arg8[%c9_75, %c1_76, %c0_77], %94 {strides = array<i32>} : memref<10x18x128xbf16, #tpu.memory_space<vmem>>, vector<1x16x128xbf16>,
    } else {
    }
    %cst_22 = arith.constant 0.000000e+00 : f32
    %29 = vector.broadcast %cst_22 : f32 to vector<128x128xf32>
    %c0_23 = arith.constant 0 : index
    %c0_24 = arith.constant 0 : index
    %c0_25 = arith.constant 0 : index
    %30 = vector.load %arg8[%c0_23, %c0_24, %c0_25] : memref<10x18x128xbf16, #tpu.memory_space<vmem>>, vector<8x16x128xbf16>
    %31 = vector.shape_cast %30 : vector<8x16x128xbf16> to vector<128x128xbf16>
    %c0_26 = arith.constant 0 : index
    %c1_27 = arith.constant 1 : index
    %c0_28 = arith.constant 0 : index
    %32 = vector.load %arg8[%c0_26, %c1_27, %c0_28] : memref<10x18x128xbf16, #tpu.memory_space<vmem>>, vector<8x16x128xbf16>
    %33 = vector.shape_cast %32 : vector<8x16x128xbf16> to vector<128x128xbf16>
    %34 = tpu.concatenate %31, %33 in 1 : vector<128x128xbf16>, vector<128x128xbf16> -> vector<128x256xbf16>
    %c0_29 = arith.constant 0 : index
    %c0_30 = arith.constant 0 : index
    %35 = vector.load %arg5[%c0_29, %c0_30] : memref<1152x128xbf16, #tpu.memory_space<vmem>>, vector<256x128xbf16>
    %cst_31 = arith.constant dense<0.000000e+00> : vector<128x128xf32>
    %36 = tpu.matmul %34, %35, %cst_31 {dimension_numbers = #tpu.dot_dimension_numbers<[1], [0], [0], [1], [0, 0, 1, 1], [], []>} : vector<128x256xbf16>, vector<256x128xbf16>, vector<128x128xf32> -> vector<128x128xf32>
    %37 = arith.addf %29, %36 : vector<128x128xf32>
    %c0_32 = arith.constant 0 : index
    %c2 = arith.constant 2 : index
    %c0_33 = arith.constant 0 : index
    %38 = vector.load %arg8[%c0_32, %c2, %c0_33] : memref<10x18x128xbf16, #tpu.memory_space<vmem>>, vector<8x16x128xbf16>
    %39 = vector.shape_cast %38 : vector<8x16x128xbf16> to vector<128x128xbf16>
    %c1_34 = arith.constant 1 : index
    %c0_35 = arith.constant 0 : index
    %c0_36 = arith.constant 0 : index
    %40 = vector.load %arg8[%c1_34, %c0_35, %c0_36] : memref<10x18x128xbf16, #tpu.memory_space<vmem>>, vector<8x16x128xbf16>
    %41 = vector.shape_cast %40 : vector<8x16x128xbf16> to vector<128x128xbf16>
    %42 = tpu.concatenate %39, %41 in 1 : vector<128x128xbf16>, vector<128x128xbf16> -> vector<128x256xbf16>
    %c256 = arith.constant 256 : index
    %c0_37 = arith.constant 0 : index
    %43 = vector.load %arg5[%c256, %c0_37] : memref<1152x128xbf16, #tpu.memory_space<vmem>>, vector<256x128xbf16>
    %cst_38 = arith.constant dense<0.000000e+00> : vector<128x128xf32>
    %44 = tpu.matmul %42, %43, %cst_38 {dimension_numbers = #tpu.dot_dimension_numbers<[1], [0], [0], [1], [0, 0, 1, 1], [], []>} : vector<128x256xbf16>, vector<256x128xbf16>, vector<128x128xf32> -> vector<128x128xf32>
    %45 = arith.addf %37, %44 : vector<128x128xf32>
    %c1_39 = arith.constant 1 : index
    %c1_40 = arith.constant 1 : index
    %c0_41 = arith.constant 0 : index
    %46 = vector.load %arg8[%c1_39, %c1_40, %c0_41] : memref<10x18x128xbf16, #tpu.memory_space<vmem>>, vector<8x16x128xbf16>
    %47 = vector.shape_cast %46 : vector<8x16x128xbf16> to vector<128x128xbf16>
    %c1_42 = arith.constant 1 : index
    %c2_43 = arith.constant 2 : index
    %c0_44 = arith.constant 0 : index
    %48 = vector.load %arg8[%c1_42, %c2_43, %c0_44] : memref<10x18x128xbf16, #tpu.memory_space<vmem>>, vector<8x16x128xbf16>
    %49 = vector.shape_cast %48 : vector<8x16x128xbf16> to vector<128x128xbf16>
    %50 = tpu.concatenate %47, %49 in 1 : vector<128x128xbf16>, vector<128x128xbf16> -> vector<128x256xbf16>
    %c512 = arith.constant 512 : index
    %c0_45 = arith.constant 0 : index
    %51 = vector.load %arg5[%c512, %c0_45] : memref<1152x128xbf16, #tpu.memory_space<vmem>>, vector<256x128xbf16>
    %cst_46 = arith.constant dense<0.000000e+00> : vector<128x128xf32>
    %52 = tpu.matmul %50, %51, %cst_46 {dimension_numbers = #tpu.dot_dimension_numbers<[1], [0], [0], [1], [0, 0, 1, 1], [], []>} : vector<128x256xbf16>, vector<256x128xbf16>, vector<128x128xf32> -> vector<128x128xf32>
    %53 = arith.addf %45, %52 : vector<128x128xf32>
    %c2_47 = arith.constant 2 : index
    %c0_48 = arith.constant 0 : index
    %c0_49 = arith.constant 0 : index
    %54 = vector.load %arg8[%c2_47, %c0_48, %c0_49] : memref<10x18x128xbf16, #tpu.memory_space<vmem>>, vector<8x16x128xbf16>
    %55 = vector.shape_cast %54 : vector<8x16x128xbf16> to vector<128x128xbf16>
    %c2_50 = arith.constant 2 : index
    %c1_51 = arith.constant 1 : index
    %c0_52 = arith.constant 0 : index
    %56 = vector.load %arg8[%c2_50, %c1_51, %c0_52] : memref<10x18x128xbf16, #tpu.memory_space<vmem>>, vector<8x16x128xbf16>
    %57 = vector.shape_cast %56 : vector<8x16x128xbf16> to vector<128x128xbf16>
    %58 = tpu.concatenate %55, %57 in 1 : vector<128x128xbf16>, vector<128x128xbf16> -> vector<128x256xbf16>
    %c768 = arith.constant 768 : index
    %c0_53 = arith.constant 0 : index
    %59 = vector.load %arg5[%c768, %c0_53] : memref<1152x128xbf16, #tpu.memory_space<vmem>>, vector<256x128xbf16>
    %cst_54 = arith.constant dense<0.000000e+00> : vector<128x128xf32>
    %60 = tpu.matmul %58, %59, %cst_54 {dimension_numbers = #tpu.dot_dimension_numbers<[1], [0], [0], [1], [0, 0, 1, 1], [], []>} : vector<128x256xbf16>, vector<256x128xbf16>, vector<128x128xf32> -> vector<128x128xf32>
    %61 = arith.addf %53, %60 : vector<128x128xf32>
    %c2_55 = arith.constant 2 : index
    %c2_56 = arith.constant 2 : index
    %c0_57 = arith.constant 0 : index
    %62 = vector.load %arg8[%c2_55, %c2_56, %c0_57] : memref<10x18x128xbf16, #tpu.memory_space<vmem>>, vector<8x16x128xbf16>
    %63 = vector.shape_cast %62 : vector<8x16x128xbf16> to vector<128x128xbf16>
    %c1024 = arith.constant 1024 : index
    %c0_58 = arith.constant 0 : index
    %64 = vector.load %arg5[%c1024, %c0_58] : memref<1152x128xbf16, #tpu.memory_space<vmem>>, vector<128x128xbf16>
    %cst_59 = arith.constant dense<0.000000e+00> : vector<128x128xf32>
    %65 = tpu.matmul %63, %64, %cst_59 {dimension_numbers = #tpu.dot_dimension_numbers<[1], [0], [0], [1], [0, 0, 1, 1], [], []>} : vector<128x128xbf16>, vector<128x128xbf16>, vector<128x128xf32> -> vector<128x128xf32>
    %66 = arith.addf %61, %65 : vector<128x128xf32>
    %67 = vector.shape_cast %66 : vector<128x128xf32> to vector<8x16x128xf32>
    %68 = arith.truncf %67 : vector<8x16x128xf32> to vector<8x16x128xbf16>
    %c0_60 = arith.constant 0 : index
    %c0_61 = arith.constant 0 : index
    %c0_62 = arith.constant 0 : index
    %c0_63 = arith.constant 0 : index
    %69 = vector.load %arg6[%c0_60, %c0_61, %c0_62, %c0_63] : memref<1x8x16x128xbf16, #tpu.memory_space<vmem>>, vector<1x8x16x128xbf16>
    %70 = vector.shape_cast %69 : vector<1x8x16x128xbf16> to vector<8x16x128xbf16>
    %71 = vector.shape_cast %68 : vector<8x16x128xbf16> to vector<1x8x16x128xbf16>
    tpu.vector_store %arg6[%c0_60, %c0_61, %c0_62, %c0_63], %71 {strides = array<i32>} : memref<1x8x16x128xbf16, #tpu.memory_space<vmem>>, vector<1x8x16x128xbf16>,
    %cst_64 = arith.constant dense<0.000000e+00> : vector<128xf32>
    %72 = vector.multi_reduction <add>, %66, %cst_64 [0] : vector<128x128xf32> to vector<128xf32>
    %73 = vector.shape_cast %72 : vector<128xf32> to vector<1x128xf32>
    %74 = arith.mulf %66, %66 : vector<128x128xf32>
    %cst_65 = arith.constant dense<0.000000e+00> : vector<128xf32>
    %75 = vector.multi_reduction <add>, %74, %cst_65 [0] : vector<128x128xf32> to vector<128xf32>
    %76 = vector.shape_cast %75 : vector<128xf32> to vector<1x128xf32>
    %77 = tpu.concatenate %73, %76 in 0 : vector<1x128xf32>, vector<1x128xf32> -> vector<2x128xf32>
    %c0_66 = arith.constant 0 : index
    %c0_67 = arith.constant 0 : index
    %c0_68 = arith.constant 0 : index
    %c0_69 = arith.constant 0 : index
    %78 = vector.load %arg7[%c0_66, %c0_67, %c0_68, %c0_69] : memref<1x1x2x128xf32, #tpu.memory_space<vmem>>, vector<1x1x2x128xf32>
    %79 = vector.shape_cast %78 : vector<1x1x2x128xf32> to vector<2x128xf32>
    %80 = vector.shape_cast %77 : vector<2x128xf32> to vector<1x1x2x128xf32>
    tpu.vector_store %arg7[%c0_66, %c0_67, %c0_68, %c0_69], %80 {strides = array<i32>} : memref<1x1x2x128xf32, #tpu.memory_space<vmem>>, vector<1x1x2x128xf32>,
    return
  }
  func.func @transform_0(%arg0: i32, %arg1: i32) -> (i32, i32, i32, i32) {
    %c0_i32 = arith.constant 0 : i32
    %c0_i32_0 = arith.constant 0 : i32
    %c0_i32_1 = arith.constant 0 : i32
    %c0_i32_2 = arith.constant 0 : i32
    return %arg0, %c0_i32, %c0_i32_0, %c0_i32_1 : i32, i32, i32, i32
  }
  func.func @transform_1(%arg0: i32, %arg1: i32) -> (i32, i32) {
    %c0_i32 = arith.constant 0 : i32
    %c0_i32_0 = arith.constant 0 : i32
    %c0_i32_1 = arith.constant 0 : i32
    return %c0_i32, %c0_i32_0 : i32, i32
  }
  func.func @transform_2(%arg0: i32, %arg1: i32) -> (i32, i32) {
    %c0_i32 = arith.constant 0 : i32
    %c0_i32_0 = arith.constant 0 : i32
    %c0_i32_1 = arith.constant 0 : i32
    return %c0_i32, %c0_i32_0 : i32, i32
  }
  func.func @transform_3(%arg0: i32, %arg1: i32) -> (i32, i32) {
    %c0_i32 = arith.constant 0 : i32
    %c0_i32_0 = arith.constant 0 : i32
    %c0_i32_1 = arith.constant 0 : i32
    return %c0_i32, %c0_i32_0 : i32, i32
  }
  func.func @transform_4(%arg0: i32, %arg1: i32) -> (i32, i32, i32, i32) {
    %c0_i32 = arith.constant 0 : i32
    %c0_i32_0 = arith.constant 0 : i32
    %c0_i32_1 = arith.constant 0 : i32
    return %arg0, %arg1, %c0_i32, %c0_i32_0 : i32, i32, i32, i32
  }
  func.func @transform_5(%arg0: i32, %arg1: i32) -> (i32, i32, i32, i32) {
    %c0_i32 = arith.constant 0 : i32
    %c0_i32_0 = arith.constant 0 : i32
    %c0_i32_1 = arith.constant 0 : i32
    return %arg0, %arg1, %c0_i32, %c0_i32_0 : i32, i32, i32, i32
  }
}

module attributes {stable_mosaic.version = 11 : i64} {
  func.func @_bn_add_relu_kernel(%arg0: i32, %arg1: memref<96x128xbf16, #tpu.memory_space<vmem>>, %arg2: memref<96x128xf32, #tpu.memory_space<vmem>>, %arg3: memref<1x128xf32, #tpu.memory_space<vmem>>, %arg4: memref<1x128xf32, #tpu.memory_space<vmem>>, %arg5: memref<96x128xf32, #tpu.memory_space<vmem>>) attributes {dimension_semantics = [#tpu.dimension_semantics<parallel>], iteration_bounds = array<i64: 6>, scalar_prefetch = 0 : i64, scratch_operands = 0 : i64, tpu.core_type = #tpu.core_type<tc>, window_params = [{transform_indices = @transform_0, window_bounds = array<i64: 96, 128>}, {transform_indices = @transform_1, window_bounds = array<i64: 96, 128>}, {pipeline_mode = #tpu.pipeline_mode<synchronous>, transform_indices = @transform_2, window_bounds = array<i64: 1, 128>}, {pipeline_mode = #tpu.pipeline_mode<synchronous>, transform_indices = @transform_3, window_bounds = array<i64: 1, 128>}, {transform_indices = @transform_4, window_bounds = array<i64: 96, 128>}]} {
    %c0 = arith.constant 0 : index
    %c0_0 = arith.constant 0 : index
    %0 = vector.load %arg1[%c0, %c0_0] : memref<96x128xbf16, #tpu.memory_space<vmem>>, vector<96x128xbf16>
    %1 = arith.extf %0 : vector<96x128xbf16> to vector<96x128xf32>
    %c0_1 = arith.constant 0 : index
    %c0_2 = arith.constant 0 : index
    %2 = vector.load %arg3[%c0_1, %c0_2] : memref<1x128xf32, #tpu.memory_space<vmem>>, vector<1x128xf32>
    %3 = vector.broadcast %2 : vector<1x128xf32> to vector<96x128xf32>
    %4 = arith.mulf %1, %3 : vector<96x128xf32>
    %c0_3 = arith.constant 0 : index
    %c0_4 = arith.constant 0 : index
    %5 = vector.load %arg4[%c0_3, %c0_4] : memref<1x128xf32, #tpu.memory_space<vmem>>, vector<1x128xf32>
    %6 = vector.broadcast %5 : vector<1x128xf32> to vector<96x128xf32>
    %7 = arith.addf %4, %6 : vector<96x128xf32>
    %c0_5 = arith.constant 0 : index
    %c0_6 = arith.constant 0 : index
    %8 = vector.load %arg2[%c0_5, %c0_6] : memref<96x128xf32, #tpu.memory_space<vmem>>, vector<96x128xf32>
    %9 = arith.addf %7, %8 : vector<96x128xf32>
    %cst = arith.constant 0.000000e+00 : f32
    %10 = vector.broadcast %cst : f32 to vector<96x128xf32>
    %11 = arith.maximumf %9, %10 : vector<96x128xf32>
    %c0_7 = arith.constant 0 : index
    %c0_8 = arith.constant 0 : index
    %12 = vector.load %arg5[%c0_7, %c0_8] : memref<96x128xf32, #tpu.memory_space<vmem>>, vector<96x128xf32>
    tpu.vector_store %arg5[%c0_7, %c0_8], %11 {strides = array<i32>} : memref<96x128xf32, #tpu.memory_space<vmem>>, vector<96x128xf32>,
    return
  }
  func.func @transform_0(%arg0: i32) -> (i32, i32) {
    %c0_i32 = arith.constant 0 : i32
    %c0_i32_0 = arith.constant 0 : i32
    return %arg0, %c0_i32 : i32, i32
  }
  func.func @transform_1(%arg0: i32) -> (i32, i32) {
    %c0_i32 = arith.constant 0 : i32
    %c0_i32_0 = arith.constant 0 : i32
    return %arg0, %c0_i32 : i32, i32
  }
  func.func @transform_2(%arg0: i32) -> (i32, i32) {
    %c0_i32 = arith.constant 0 : i32
    %c0_i32_0 = arith.constant 0 : i32
    %c0_i32_1 = arith.constant 0 : i32
    return %c0_i32, %c0_i32_0 : i32, i32
  }
  func.func @transform_3(%arg0: i32) -> (i32, i32) {
    %c0_i32 = arith.constant 0 : i32
    %c0_i32_0 = arith.constant 0 : i32
    %c0_i32_1 = arith.constant 0 : i32
    return %c0_i32, %c0_i32_0 : i32, i32
  }
  func.func @transform_4(%arg0: i32) -> (i32, i32) {
    %c0_i32 = arith.constant 0 : i32
    %c0_i32_0 = arith.constant 0 : i32
    return %arg0, %c0_i32 : i32, i32
  }
}

module attributes {stable_mosaic.version = 11 : i64} {
  func.func @_act_matmul_stats_kernel(%arg0: i32, %arg1: memref<96x128xbf16, #tpu.memory_space<vmem>>, %arg2: memref<1x128xf32, #tpu.memory_space<vmem>>, %arg3: memref<1x128xf32, #tpu.memory_space<vmem>>, %arg4: memref<128x128xbf16, #tpu.memory_space<vmem>>, %arg5: memref<96x128xbf16, #tpu.memory_space<vmem>>, %arg6: memref<1x2x128xf32, #tpu.memory_space<vmem>>) attributes {dimension_semantics = [#tpu.dimension_semantics<parallel>], iteration_bounds = array<i64: 6>, scalar_prefetch = 0 : i64, scratch_operands = 0 : i64, tpu.core_type = #tpu.core_type<tc>, window_params = [{transform_indices = @transform_0, window_bounds = array<i64: 96, 128>}, {pipeline_mode = #tpu.pipeline_mode<synchronous>, transform_indices = @transform_1, window_bounds = array<i64: 1, 128>}, {pipeline_mode = #tpu.pipeline_mode<synchronous>, transform_indices = @transform_2, window_bounds = array<i64: 1, 128>}, {pipeline_mode = #tpu.pipeline_mode<synchronous>, transform_indices = @transform_3, window_bounds = array<i64: 128, 128>}, {transform_indices = @transform_4, window_bounds = array<i64: 96, 128>}, {transform_indices = @transform_5, window_bounds = array<i64: 1, 2, 128>}]} {
    %c0 = arith.constant 0 : index
    %c0_0 = arith.constant 0 : index
    %0 = vector.load %arg1[%c0, %c0_0] : memref<96x128xbf16, #tpu.memory_space<vmem>>, vector<96x128xbf16>
    %1 = arith.extf %0 : vector<96x128xbf16> to vector<96x128xf32>
    %c0_1 = arith.constant 0 : index
    %c0_2 = arith.constant 0 : index
    %2 = vector.load %arg2[%c0_1, %c0_2] : memref<1x128xf32, #tpu.memory_space<vmem>>, vector<1x128xf32>
    %3 = vector.broadcast %2 : vector<1x128xf32> to vector<96x128xf32>
    %4 = arith.mulf %1, %3 : vector<96x128xf32>
    %c0_3 = arith.constant 0 : index
    %c0_4 = arith.constant 0 : index
    %5 = vector.load %arg3[%c0_3, %c0_4] : memref<1x128xf32, #tpu.memory_space<vmem>>, vector<1x128xf32>
    %6 = vector.broadcast %5 : vector<1x128xf32> to vector<96x128xf32>
    %7 = arith.addf %4, %6 : vector<96x128xf32>
    %cst = arith.constant 0.000000e+00 : f32
    %8 = vector.broadcast %cst : f32 to vector<96x128xf32>
    %9 = arith.maximumf %7, %8 : vector<96x128xf32>
    %c96_i32 = arith.constant 96 : i32
    %10 = arith.muli %arg0, %c96_i32 : i32
    %11 = tpu.iota {dimensions = array<i32: 0>} : vector<96x1xi32>
    %12 = vector.broadcast %10 : i32 to vector<96x1xi32>
    %13 = arith.addi %12, %11 : vector<96x1xi32>
    %c512_i32 = arith.constant 512 : i32
    %14 = vector.broadcast %c512_i32 : i32 to vector<96x1xi32>
    %15 = arith.cmpi slt, %13, %14 : vector<96x1xi32>
    %cst_5 = arith.constant 0.000000e+00 : f32
    %16 = vector.shape_cast %15 : vector<96x1xi1> to vector<96x1xi1>
    %17 = vector.broadcast %16 : vector<96x1xi1> to vector<96x128xi1>
    %18 = vector.broadcast %cst_5 : f32 to vector<96x128xf32>
    %19 = arith.select %17, %9, %18 : vector<96x128xi1>, vector<96x128xf32>
    %20 = arith.truncf %19 : vector<96x128xf32> to vector<96x128xbf16>
    %c0_6 = arith.constant 0 : index
    %c0_7 = arith.constant 0 : index
    %21 = vector.load %arg4[%c0_6, %c0_7] : memref<128x128xbf16, #tpu.memory_space<vmem>>, vector<128x128xbf16>
    %cst_8 = arith.constant dense<0.000000e+00> : vector<96x128xf32>
    %22 = tpu.matmul %20, %21, %cst_8 {dimension_numbers = #tpu.dot_dimension_numbers<[1], [0], [0], [1], [0, 0, 1, 1], [], []>} : vector<96x128xbf16>, vector<128x128xbf16>, vector<96x128xf32> -> vector<96x128xf32>
    %23 = arith.truncf %22 : vector<96x128xf32> to vector<96x128xbf16>
    %c0_9 = arith.constant 0 : index
    %c0_10 = arith.constant 0 : index
    %24 = vector.load %arg5[%c0_9, %c0_10] : memref<96x128xbf16, #tpu.memory_space<vmem>>, vector<96x128xbf16>
    tpu.vector_store %arg5[%c0_9, %c0_10], %23 {strides = array<i32>} : memref<96x128xbf16, #tpu.memory_space<vmem>>, vector<96x128xbf16>,
    %cst_11 = arith.constant dense<0.000000e+00> : vector<128xf32>
    %25 = vector.multi_reduction <add>, %22, %cst_11 [0] : vector<96x128xf32> to vector<128xf32>
    %26 = vector.shape_cast %25 : vector<128xf32> to vector<1x128xf32>
    %27 = arith.mulf %22, %22 : vector<96x128xf32>
    %cst_12 = arith.constant dense<0.000000e+00> : vector<128xf32>
    %28 = vector.multi_reduction <add>, %27, %cst_12 [0] : vector<96x128xf32> to vector<128xf32>
    %29 = vector.shape_cast %28 : vector<128xf32> to vector<1x128xf32>
    %30 = tpu.concatenate %26, %29 in 0 : vector<1x128xf32>, vector<1x128xf32> -> vector<2x128xf32>
    %c0_13 = arith.constant 0 : index
    %c0_14 = arith.constant 0 : index
    %c0_15 = arith.constant 0 : index
    %31 = vector.load %arg6[%c0_13, %c0_14, %c0_15] : memref<1x2x128xf32, #tpu.memory_space<vmem>>, vector<1x2x128xf32>
    %32 = vector.shape_cast %31 : vector<1x2x128xf32> to vector<2x128xf32>
    %33 = vector.shape_cast %30 : vector<2x128xf32> to vector<1x2x128xf32>
    tpu.vector_store %arg6[%c0_13, %c0_14, %c0_15], %33 {strides = array<i32>} : memref<1x2x128xf32, #tpu.memory_space<vmem>>, vector<1x2x128xf32>,
    return
  }
  func.func @transform_0(%arg0: i32) -> (i32, i32) {
    %c0_i32 = arith.constant 0 : i32
    %c0_i32_0 = arith.constant 0 : i32
    return %arg0, %c0_i32 : i32, i32
  }
  func.func @transform_1(%arg0: i32) -> (i32, i32) {
    %c0_i32 = arith.constant 0 : i32
    %c0_i32_0 = arith.constant 0 : i32
    %c0_i32_1 = arith.constant 0 : i32
    return %c0_i32, %c0_i32_0 : i32, i32
  }
  func.func @transform_2(%arg0: i32) -> (i32, i32) {
    %c0_i32 = arith.constant 0 : i32
    %c0_i32_0 = arith.constant 0 : i32
    %c0_i32_1 = arith.constant 0 : i32
    return %c0_i32, %c0_i32_0 : i32, i32
  }
  func.func @transform_3(%arg0: i32) -> (i32, i32) {
    %c0_i32 = arith.constant 0 : i32
    %c0_i32_0 = arith.constant 0 : i32
    %c0_i32_1 = arith.constant 0 : i32
    return %c0_i32, %c0_i32_0 : i32, i32
  }
  func.func @transform_4(%arg0: i32) -> (i32, i32) {
    %c0_i32 = arith.constant 0 : i32
    %c0_i32_0 = arith.constant 0 : i32
    return %arg0, %c0_i32 : i32, i32
  }
  func.func @transform_5(%arg0: i32) -> (i32, i32, i32) {
    %c0_i32 = arith.constant 0 : i32
    %c0_i32_0 = arith.constant 0 : i32
    %c0_i32_1 = arith.constant 0 : i32
    return %arg0, %c0_i32, %c0_i32_0 : i32, i32, i32
  }
}

</mosaic_0001>

<llo_original>
// kernel: bottleneck_forward.7
$region0: #{bottleneck_forward.7}
  #allocation0 [shape = 'u32[]', space=smem, size = 0x4, offset = 0x4, fixed_abs, tag = 'smem constant byte address 0x4 - core index']
  #allocation1 [shape = 'u32[72,128]{1,0:T(1,128)}', space=vmem, size = 0x9000, scoped, tag = 'internal scratch']
  %s0 = inlined_call_operand.vmem [shape: bf16[576,128], index: 0, kind: input, shape index: {}]
  %s1 = inlined_call_operand.vmem [shape: f32[576,128], index: 1, kind: input, shape index: {}]
  %s2 = inlined_call_operand.vmem [shape: f32[1,128], index: 2, kind: input, shape index: {}]
  %s3 = inlined_call_operand.vmem [shape: f32[1,128], index: 3, kind: input, shape index: {}]
  %s4 = inlined_call_operand.vmem [shape: f32[576,128], index: 4, kind: output, shape index: {}]
  %s5 = sld [smem:[#allocation0]]
  $region49: #{bottleneck_forward.7} parent=0
    _
  %s7 = ssub.s32 1, %s5
  %s8 = scalar_select 0, %s7, %s5
  loop: start=0, step=1, limit=8
  $region2: #{bottleneck_forward.7} parent=0 // loop_pre_header
    _
  $region3: #{bottleneck_forward.7} parent=0 // loop_header
    %s10 = sphi 0, %s14
    %p11 = scmp.ge.s32.totalorder %s10, 8
    %s20 = sphi 0, %s22
    %s23 = sphi 0, %s20
    %s24 = sphi 0, %s23
    %s40 = sphi 0, %s24
    %s46 = sphi 0, %s48
    %s49 = sphi 0, %s46
    %s50 = sphi 0, %s49
    %s66 = sphi 0, %s50
    %s70 = sphi 0, %s70
    %s72 = sphi 0, %s70
    %s73 = sphi 0, %s72
    %s87 = sphi 0, %s73
    %s91 = sphi 0, %s91
    %s93 = sphi 0, %s91
    %s94 = sphi 0, %s93
    %s108 = sphi 0, %s94
    %s114 = sphi 0, %s116
    %s117 = sphi 0, %s114
    %s118 = sphi 0, %s117
    %s134 = sphi 0, %s118
  $region4: #{bottleneck_forward.7} parent=0 // loop_header_branch
    %13 = sbr.rel (%p11) target = $region8
  $region5: #{bottleneck_forward.7} parent=0 // loop_body
    %s15 = ssub.s32 %s10, 1
    %s16 = ssub.s32 %s10, 2
    %s17 = sadd.s32 %s10, 1
    %s18 = ssub.s32 %s10, %s17
    %p19 = scmp.eq.s32.totalorder %s18, 0
    %s21 = sadd.s32 %s20, 1
    %s22 = scalar_select %p19, %s20, %s21
    %p25 = pneg %p19
    %p26 = scmp.eq.s32.totalorder %s10, 5
    %p27 = por %p25, %p26
    %p28 = scmp.ne.s32.totalorder %s20, %s23
    %p29 = scmp.eq.s32.totalorder %s10, 0
    %p30 = por %p28, %p29
    %p31 = scmp.ne.s32.totalorder %s20, %s23
    %p32 = scmp.eq.s32.totalorder %s15, 5
    %p33 = por %p31, %p32
    %p34 = scmp.ne.s32.totalorder %s23, %s24
    %p35 = scmp.eq.s32.totalorder %s15, 0
    %p36 = por %p34, %p35
    %p37 = scmp.ne.s32.totalorder %s23, %s24
    %p38 = scmp.eq.s32.totalorder %s16, 5
    %p39 = por %p37, %p38
    %p41 = scmp.ne.s32.totalorder %s24, %s40
    %p42 = scmp.eq.s32.totalorder %s16, 0
    %p43 = por %p41, %p42
    %s44 = ssub.s32 %s10, %s17
    %p45 = scmp.eq.s32.totalorder %s44, 0
    %s47 = sadd.s32 %s46, 1
    %s48 = scalar_select %p45, %s46, %s47
    %p51 = pneg %p45
    %p52 = scmp.eq.s32.totalorder %s10, 5
    %p53 = por %p51, %p52
    %p54 = scmp.ne.s32.totalorder %s46, %s49
    %p55 = scmp.eq.s32.totalorder %s10, 0
    %p56 = por %p54, %p55
    %p57 = scmp.ne.s32.totalorder %s46, %s49
    %p58 = scmp.eq.s32.totalorder %s15, 5
    %p59 = por %p57, %p58
    %p60 = scmp.ne.s32.totalorder %s49, %s50
    %p61 = scmp.eq.s32.totalorder %s15, 0
    %p62 = por %p60, %p61
    %p63 = scmp.ne.s32.totalorder %s49, %s50
    %p64 = scmp.eq.s32.totalorder %s16, 5
    %p65 = por %p63, %p64
    %p67 = scmp.ne.s32.totalorder %s50, %s66
    %p68 = scmp.eq.s32.totalorder %s16, 0
    %p69 = por %p67, %p68
    %s71 = sadd.s32 %s70, 1
    %p74 = scmp.eq.s32.totalorder %s10, 5
    %p75 = scmp.ne.s32.totalorder %s70, %s72
    %p76 = scmp.eq.s32.totalorder %s10, 0
    %p77 = por %p75, %p76
    %p78 = scmp.ne.s32.totalorder %s70, %s72
    %p79 = scmp.eq.s32.totalorder %s15, 5
    %p80 = por %p78, %p79
    %p81 = scmp.ne.s32.totalorder %s72, %s73
    %p82 = scmp.eq.s32.totalorder %s15, 0
    %p83 = por %p81, %p82
    %p84 = scmp.ne.s32.totalorder %s72, %s73
    %p85 = scmp.eq.s32.totalorder %s16, 5
    %p86 = por %p84, %p85
    %p88 = scmp.ne.s32.totalorder %s73, %s87
    %p89 = scmp.eq.s32.totalorder %s16, 0
    %p90 = por %p88, %p89
    %s92 = sadd.s32 %s91, 1
    %p95 = scmp.eq.s32.totalorder %s10, 5
    %p96 = scmp.ne.s32.totalorder %s91, %s93
    %p97 = scmp.eq.s32.totalorder %s10, 0
    %p98 = por %p96, %p97
    %p99 = scmp.ne.s32.totalorder %s91, %s93
    %p100 = scmp.eq.s32.totalorder %s15, 5
    %p101 = por %p99, %p100
    %p102 = scmp.ne.s32.totalorder %s93, %s94
    %p103 = scmp.eq.s32.totalorder %s15, 0
    %p104 = por %p102, %p103
    %p105 = scmp.ne.s32.totalorder %s93, %s94
    %p106 = scmp.eq.s32.totalorder %s16, 5
    %p107 = por %p105, %p106
    %p109 = scmp.ne.s32.totalorder %s94, %s108
    %p110 = scmp.eq.s32.totalorder %s16, 0
    %p111 = por %p109, %p110
    %s112 = ssub.s32 %s10, %s17
    %p113 = scmp.eq.s32.totalorder %s112, 0
    %s115 = sadd.s32 %s114, 1
    %s116 = scalar_select %p113, %s114, %s115
    %p119 = pneg %p113
    %p120 = scmp.eq.s32.totalorder %s10, 5
    %p121 = por %p119, %p120
    %p122 = scmp.ne.s32.totalorder %s114, %s117
    %p123 = scmp.eq.s32.totalorder %s10, 0
    %p124 = por %p122, %p123
    %p125 = scmp.ne.s32.totalorder %s114, %s117
    %p126 = scmp.eq.s32.totalorder %s15, 5
    %p127 = por %p125, %p126
    %p128 = scmp.ne.s32.totalorder %s117, %s118
    %p129 = scmp.eq.s32.totalorder %s15, 0
    %p130 = por %p128, %p129
    %p131 = scmp.ne.s32.totalorder %s117, %s118
    %p132 = scmp.eq.s32.totalorder %s16, 5
    %p133 = por %p131, %p132
    %p135 = scmp.ne.s32.totalorder %s118, %s134
    %p136 = scmp.eq.s32.totalorder %s16, 0
    %p137 = por %p135, %p136
    %p138 = scmp.le.s32.totalorder 1, %s10
    %p139 = scmp.lt.s32.totalorder %s10, 7
    %p140 = pnand %p138, %p139
    %p141 = pneg %p140
    // Predicated region
    $region9: #{bottleneck_forward.7} parent=5 // pred_check
      _
    $region10: #{bottleneck_forward.7} parent=5 // pred_check_branch
      %143 = sbr.rel (%p140) target = $region12
    $region11: #{bottleneck_forward.7} parent=5 // pred_region
      %s144 = ssub.s32 %s10, 1
      // Predicated region
      $region13: #{bottleneck_forward.7} parent=11 // pred_check
        %p145 = pneg %p83
      $region14: #{bottleneck_forward.7} parent=11 // pred_check_branch
        %147 = sbr.rel (%p145) target = $region16
      $region15: #{bottleneck_forward.7} parent=11 // pred_region
        _
      $region16: #{bottleneck_forward.7} parent=11 // pred_fallthru
        _
      // Predicated region
      $region17: #{bottleneck_forward.7} parent=11 // pred_check
        %p148 = pneg %p104
      $region18: #{bottleneck_forward.7} parent=11 // pred_check_branch
        %150 = sbr.rel (%p148) target = $region20
      $region19: #{bottleneck_forward.7} parent=11 // pred_region
        _
      $region20: #{bottleneck_forward.7} parent=11 // pred_fallthru
        _
    $region12: #{bottleneck_forward.7} parent=5 // pred_fallthru
      _
    %p151 = scmp.lt.s32.totalorder %s10, 6
    // Predicated region
    $region21: #{bottleneck_forward.7} parent=5 // pred_check
      %p152 = pneg %p151
    $region22: #{bottleneck_forward.7} parent=5 // pred_check_branch
      %154 = sbr.rel (%p152) target = $region24
    $region23: #{bottleneck_forward.7} parent=5 // pred_region
      // Predicated region
      $region25: #{bottleneck_forward.7} parent=23 // pred_check
        %p155 = pneg %p30
      $region26: #{bottleneck_forward.7} parent=23 // pred_check_branch
        %157 = sbr.rel (%p155) target = $region28
      $region27: #{bottleneck_forward.7} parent=23 // pred_region
        %s158 = smul.u32 12, %s10
        %p159 = scmp.lt.s32.totalorder %s158, 71
        %s160 = scalar_select %p159, %s158, 71
        %s161 = smul.addr %s160, 4
        %s162 = scalar_lea.vmem %s0, %s161
        %s163 = smul.u32 12, %s10
      $region28: #{bottleneck_forward.7} parent=23 // pred_fallthru
        _
      // Predicated region
      $region29: #{bottleneck_forward.7} parent=23 // pred_check
        %p164 = pneg %p56
      $region30: #{bottleneck_forward.7} parent=23 // pred_check_branch
        %166 = sbr.rel (%p164) target = $region32
      $region31: #{bottleneck_forward.7} parent=23 // pred_region
        %s167 = smul.u32 12, %s10
        %p168 = scmp.lt.s32.totalorder %s167, 71
        %s169 = scalar_select %p168, %s167, 71
        %s170 = smul.addr %s169, 8
        %s171 = scalar_lea.vmem %s1, %s170
        %s172 = smul.u32 12, %s10
      $region32: #{bottleneck_forward.7} parent=23 // pred_fallthru
        _
    $region24: #{bottleneck_forward.7} parent=5 // pred_fallthru
      _
    %p173 = scmp.le.s32.totalorder 1, %s10
    %p174 = scmp.lt.s32.totalorder %s10, 7
    %p175 = pnand %p173, %p174
    %p176 = pneg %p175
    // Predicated region
    $region33: #{bottleneck_forward.7} parent=5 // pred_check
      _
    $region34: #{bottleneck_forward.7} parent=5 // pred_check_branch
      %178 = sbr.rel (%p175) target = $region36
    $region35: #{bottleneck_forward.7} parent=5 // pred_region
      %s179 = ssub.s32 %s10, 1
      %s180 = smul.u32 12, %s15
      %p181 = scmp.lt.s32.totalorder %s180, 71
      %s182 = scalar_select %p181, %s180, 71
      %s183 = smul.addr %s182, 4
      %s184 = scalar_lea.vmem %s0, %s183
      %p185 = pneg %p36
      %p186 = pneg %p33
      %s187 = smul.u32 12, %s15
      %p188 = scmp.lt.s32.totalorder %s187, 71
      %s189 = scalar_select %p188, %s187, 71
      %s190 = smul.addr %s189, 8
      %s191 = scalar_lea.vmem %s1, %s190
      %p192 = pneg %p62
      %p193 = pneg %p59
      %p194 = pneg %p83
      %p195 = pneg %p80
      %p196 = pneg %p104
      %p197 = pneg %p101
      %p198 = pneg %p130
      %p199 = pneg %p127
      %s200 = smul.u32 12, %s15
      %p201 = scmp.lt.s32.totalorder %s200, 71
      %s202 = scalar_select %p201, %s200, 71
      %s203 = smul.addr %s202, 8
      %s204 = scalar_lea.vmem %s4, %s203
      %s205 = smul.u32 12, %s15
      %p206 = scmp.lt.s32.totalorder %s205, 71
      %s207 = scalar_select %p206, %s205, 71
      %s208 = smul.addr %s207, 4
      %s209 = scalar_lea.vmem %s0, %s208
      %s210 = smul.u32 12, %s15
      %s211 = smul.u32 12, %s15
      %p212 = scmp.lt.s32.totalorder %s211, 71
      %s213 = scalar_select %p212, %s211, 71
      %s214 = smul.addr %s213, 8
      %s215 = scalar_lea.vmem %s1, %s214
      %s216 = smul.u32 12, %s15
      %s217 = smul.u32 12, %s15
      %p218 = scmp.lt.s32.totalorder %s217, 71
      %s219 = scalar_select %p218, %s217, 71
      %s220 = smul.addr %s219, 8
      %s221 = scalar_lea.vmem %s4, %s220
      %s222 = smul.u32 12, %s15
      %v223 = vld [vmem:[%s209] sm:$0xf]
      %v224 = vld [vmem:[%s209 + $0x4] sm:$0xf]
      %v225 = vld [vmem:[%s209 + $0x8] sm:$0xf]
      %v226 = vld [vmem:[%s209 + $0xc] sm:$0xf]
      %v227 = vld [vmem:[%s209 + $0x10] sm:$0xf]
      %v228 = vld [vmem:[%s209 + $0x14] sm:$0xf]
      %v229 = vld [vmem:[%s209 + $0x18] sm:$0xf]
      %v230 = vld [vmem:[%s209 + $0x1c] sm:$0xf]
      %v231 = vld [vmem:[%s209 + $0x20] sm:$0xf]
      %v232 = vld [vmem:[%s209 + $0x24] sm:$0xf]
      %v233 = vld [vmem:[%s209 + $0x28] sm:$0xf]
      %v234 = vld [vmem:[%s209 + $0x2c] sm:$0xf]
      %v235 = vunpack.c.l.bf16 %v223
      %v236 = vunpack.c.l.bf16 %v224
      %v237 = vunpack.c.l.bf16 %v225
      %v238 = vunpack.c.l.bf16 %v226
      %v239 = vunpack.c.l.bf16 %v227
      %v240 = vunpack.c.l.bf16 %v228
      %v241 = vunpack.c.l.bf16 %v229
      %v242 = vunpack.c.l.bf16 %v230
      %v243 = vunpack.c.l.bf16 %v231
      %v244 = vunpack.c.l.bf16 %v232
      %v245 = vunpack.c.l.bf16 %v233
      %v246 = vunpack.c.l.bf16 %v234
      %v247 = vld [vmem:[%s2] sm:$0x1]
      %v249 = vperm.slane %v247, 0
      %v251 = vmul.f32 %v235, %v249
      %v252 = vmul.f32 %v236, %v249
      %v253 = vmul.f32 %v237, %v249
      %v254 = vmul.f32 %v238, %v249
      %v255 = vmul.f32 %v239, %v249
      %v256 = vmul.f32 %v240, %v249
      %v257 = vmul.f32 %v241, %v249
      %v258 = vmul.f32 %v242, %v249
      %v259 = vmul.f32 %v243, %v249
      %v260 = vmul.f32 %v244, %v249
      %v261 = vmul.f32 %v245, %v249
      %v262 = vmul.f32 %v246, %v249
      %v263 = vld [vmem:[%s3] sm:$0x1]
      %v265 = vperm.slane %v263, 0
      %v267 = vadd.f32 %v251, %v265
      %v268 = vadd.f32 %v252, %v265
      %v269 = vadd.f32 %v253, %v265
      %v270 = vadd.f32 %v254, %v265
      %v271 = vadd.f32 %v255, %v265
      %v272 = vadd.f32 %v256, %v265
      %v273 = vadd.f32 %v257, %v265
      %v274 = vadd.f32 %v258, %v265
      %v275 = vadd.f32 %v259, %v265
      %v276 = vadd.f32 %v260, %v265
      %v277 = vadd.f32 %v261, %v265
      %v278 = vadd.f32 %v262, %v265
      %v279 = vld [vmem:[%s215] sm:$0xff]
      %v280 = vld [vmem:[%s215 + $0x8] sm:$0xff]
      %v281 = vld [vmem:[%s215 + $0x10] sm:$0xff]
      %v282 = vld [vmem:[%s215 + $0x18] sm:$0xff]
      %v283 = vld [vmem:[%s215 + $0x20] sm:$0xff]
      %v284 = vld [vmem:[%s215 + $0x28] sm:$0xff]
      %v285 = vld [vmem:[%s215 + $0x30] sm:$0xff]
      %v286 = vld [vmem:[%s215 + $0x38] sm:$0xff]
      %v287 = vld [vmem:[%s215 + $0x40] sm:$0xff]
      %v288 = vld [vmem:[%s215 + $0x48] sm:$0xff]
      %v289 = vld [vmem:[%s215 + $0x50] sm:$0xff]
      %v290 = vld [vmem:[%s215 + $0x58] sm:$0xff]
      %v291 = vadd.f32 %v267, %v279
      %v292 = vadd.f32 %v268, %v280
      %v293 = vadd.f32 %v269, %v281
      %v294 = vadd.f32 %v270, %v282
      %v295 = vadd.f32 %v271, %v283
      %v296 = vadd.f32 %v272, %v284
      %v297 = vadd.f32 %v273, %v285
      %v298 = vadd.f32 %v274, %v286
      %v299 = vadd.f32 %v275, %v287
      %v300 = vadd.f32 %v276, %v288
      %v301 = vadd.f32 %v277, %v289
      %v302 = vadd.f32 %v278, %v290
      %v303 = vmax.f32 %v291, 0.0
      %v304 = vmax.f32 %v292, 0.0
      %v305 = vmax.f32 %v293, 0.0
      %v306 = vmax.f32 %v294, 0.0
      %v307 = vmax.f32 %v295, 0.0
      %v308 = vmax.f32 %v296, 0.0
      %v309 = vmax.f32 %v297, 0.0
      %v310 = vmax.f32 %v298, 0.0
      %v311 = vmax.f32 %v299, 0.0
      %v312 = vmax.f32 %v300, 0.0
      %v313 = vmax.f32 %v301, 0.0
      %v314 = vmax.f32 %v302, 0.0
      %315 = vst [vmem:[%s221] sm:$0xff] %v303
      %316 = vst [vmem:[%s221 + $0x8] sm:$0xff] %v304
      %317 = vst [vmem:[%s221 + $0x10] sm:$0xff] %v305
      %318 = vst [vmem:[%s221 + $0x18] sm:$0xff] %v306
      %319 = vst [vmem:[%s221 + $0x20] sm:$0xff] %v307
      %320 = vst [vmem:[%s221 + $0x28] sm:$0xff] %v308
      %321 = vst [vmem:[%s221 + $0x30] sm:$0xff] %v309
      %322 = vst [vmem:[%s221 + $0x38] sm:$0xff] %v310
      %323 = vst [vmem:[%s221 + $0x40] sm:$0xff] %v311
      %324 = vst [vmem:[%s221 + $0x48] sm:$0xff] %v312
      %325 = vst [vmem:[%s221 + $0x50] sm:$0xff] %v313
      %326 = vst [vmem:[%s221 + $0x58] sm:$0xff] %v314
      %s327 = smul.u32 12, %s15
      %p328 = scmp.lt.s32.totalorder %s327, 71
      %s329 = scalar_select %p328, %s327, 71
      %s330 = smul.addr %s329, 8
      %s331 = scalar_lea.vmem %s4, %s330
      // Predicated region
      $region37: #{bottleneck_forward.7} parent=35 // pred_check
        %p332 = pneg %p127
      $region38: #{bottleneck_forward.7} parent=35 // pred_check_branch
        %334 = sbr.rel (%p332) target = $region40
      $region39: #{bottleneck_forward.7} parent=35 // pred_region
        %s335 = smul.u32 12, %s15
      $region40: #{bottleneck_forward.7} parent=35 // pred_fallthru
        _
    $region36: #{bottleneck_forward.7} parent=5 // pred_fallthru
      _
    %p336 = scmp.le.s32.totalorder 2, %s10
    // Predicated region
    $region41: #{bottleneck_forward.7} parent=5 // pred_check
      %p337 = pneg %p336
    $region42: #{bottleneck_forward.7} parent=5 // pred_check_branch
      %339 = sbr.rel (%p337) target = $region44
    $region43: #{bottleneck_forward.7} parent=5 // pred_region
      %s340 = ssub.s32 %s10, 2
      // Predicated region
      $region45: #{bottleneck_forward.7} parent=43 // pred_check
        %p341 = pneg %p133
      $region46: #{bottleneck_forward.7} parent=43 // pred_check_branch
        %343 = sbr.rel (%p341) target = $region48
      $region47: #{bottleneck_forward.7} parent=43 // pred_region
        %s344 = smul.u32 12, %s16
        %p345 = scmp.lt.s32.totalorder %s344, 71
        %s346 = scalar_select %p345, %s344, 71
        %s347 = smul.addr %s346, 8
        %s348 = scalar_lea.vmem %s4, %s347
      $region48: #{bottleneck_forward.7} parent=43 // pred_fallthru
        _
    $region44: #{bottleneck_forward.7} parent=5 // pred_fallthru
      _
  $region6: #{bottleneck_forward.7} parent=0 // loop_footer
    %s14 = sadd.s32 1, %s10
  $region7: #{bottleneck_forward.7} parent=0 // loop_footer_branch
    %9 = sbr.rel target = $region3
  $region8: #{bottleneck_forward.7} parent=0 // loop_exit
    _

// kernel: bottleneck_forward.4
$region0: #{bottleneck_forward.4}
  #allocation0 [shape = 'u32[]', space=smem, size = 0x4, offset = 0x4, fixed_abs, tag = 'smem constant byte address 0x4 - core index']
  #allocation1 [shape = 'u32[72,128]{1,0:T(1,128)}', space=vmem, size = 0x9000, scoped, tag = 'internal scratch']
  %s0 = inlined_call_operand.vmem [shape: bf16[576,128], index: 0, kind: input, shape index: {}]
  %s1 = inlined_call_operand.vmem [shape: bf16[128,128], index: 1, kind: input, shape index: {}]
  %s2 = inlined_call_operand.vmem [shape: bf16[576,128], index: 2, kind: output, shape index: {0}]
  %s3 = inlined_call_operand.vmem [shape: f32[6,2,128], index: 3, kind: output, shape index: {1}]
  %4 = xla_tuple %s2, %s3
  %s5 = sld [smem:[#allocation0]]
  $region49: #{bottleneck_forward.4} parent=0
    _
  %s7 = ssub.s32 1, %s5
  %s8 = scalar_select 0, %s7, %s5
  loop: start=0, step=1, limit=8
  $region2: #{bottleneck_forward.4} parent=0 // loop_pre_header
    _
  $region3: #{bottleneck_forward.4} parent=0 // loop_header
    %s10 = sphi 0, %s14
    %p11 = scmp.ge.s32.totalorder %s10, 8
    %s20 = sphi 0, %s22
    %s23 = sphi 0, %s20
    %s24 = sphi 0, %s23
    %s40 = sphi 0, %s24
    %s44 = sphi 0, %s44
    %s46 = sphi 0, %s44
    %s47 = sphi 0, %s46
    %s61 = sphi 0, %s47
    %s67 = sphi 0, %s69
    %s70 = sphi 0, %s67
    %s71 = sphi 0, %s70
    %s87 = sphi 0, %s71
    %s93 = sphi 0, %s95
    %s96 = sphi 0, %s93
    %s97 = sphi 0, %s96
    %s113 = sphi 0, %s97
  $region4: #{bottleneck_forward.4} parent=0 // loop_header_branch
    %13 = sbr.rel (%p11) target = $region8
  $region5: #{bottleneck_forward.4} parent=0 // loop_body
    %s15 = ssub.s32 %s10, 1
    %s16 = ssub.s32 %s10, 2
    %s17 = sadd.s32 %s10, 1
    %s18 = ssub.s32 %s10, %s17
    %p19 = scmp.eq.s32.totalorder %s18, 0
    %s21 = sadd.s32 %s20, 1
    %s22 = scalar_select %p19, %s20, %s21
    %p25 = pneg %p19
    %p26 = scmp.eq.s32.totalorder %s10, 5
    %p27 = por %p25, %p26
    %p28 = scmp.ne.s32.totalorder %s20, %s23
    %p29 = scmp.eq.s32.totalorder %s10, 0
    %p30 = por %p28, %p29
    %p31 = scmp.ne.s32.totalorder %s20, %s23
    %p32 = scmp.eq.s32.totalorder %s15, 5
    %p33 = por %p31, %p32
    %p34 = scmp.ne.s32.totalorder %s23, %s24
    %p35 = scmp.eq.s32.totalorder %s15, 0
    %p36 = por %p34, %p35
    %p37 = scmp.ne.s32.totalorder %s23, %s24
    %p38 = scmp.eq.s32.totalorder %s16, 5
    %p39 = por %p37, %p38
    %p41 = scmp.ne.s32.totalorder %s24, %s40
    %p42 = scmp.eq.s32.totalorder %s16, 0
    %p43 = por %p41, %p42
    %s45 = sadd.s32 %s44, 1
    %p48 = scmp.eq.s32.totalorder %s10, 5
    %p49 = scmp.ne.s32.totalorder %s44, %s46
    %p50 = scmp.eq.s32.totalorder %s10, 0
    %p51 = por %p49, %p50
    %p52 = scmp.ne.s32.totalorder %s44, %s46
    %p53 = scmp.eq.s32.totalorder %s15, 5
    %p54 = por %p52, %p53
    %p55 = scmp.ne.s32.totalorder %s46, %s47
    %p56 = scmp.eq.s32.totalorder %s15, 0
    %p57 = por %p55, %p56
    %p58 = scmp.ne.s32.totalorder %s46, %s47
    %p59 = scmp.eq.s32.totalorder %s16, 5
    %p60 = por %p58, %p59
    %p62 = scmp.ne.s32.totalorder %s47, %s61
    %p63 = scmp.eq.s32.totalorder %s16, 0
    %p64 = por %p62, %p63
    %s65 = ssub.s32 %s10, %s17
    %p66 = scmp.eq.s32.totalorder %s65, 0
    %s68 = sadd.s32 %s67, 1
    %s69 = scalar_select %p66, %s67, %s68
    %p72 = pneg %p66
    %p73 = scmp.eq.s32.totalorder %s10, 5
    %p74 = por %p72, %p73
    %p75 = scmp.ne.s32.totalorder %s67, %s70
    %p76 = scmp.eq.s32.totalorder %s10, 0
    %p77 = por %p75, %p76
    %p78 = scmp.ne.s32.totalorder %s67, %s70
    %p79 = scmp.eq.s32.totalorder %s15, 5
    %p80 = por %p78, %p79
    %p81 = scmp.ne.s32.totalorder %s70, %s71
    %p82 = scmp.eq.s32.totalorder %s15, 0
    %p83 = por %p81, %p82
    %p84 = scmp.ne.s32.totalorder %s70, %s71
    %p85 = scmp.eq.s32.totalorder %s16, 5
    %p86 = por %p84, %p85
    %p88 = scmp.ne.s32.totalorder %s71, %s87
    %p89 = scmp.eq.s32.totalorder %s16, 0
    %p90 = por %p88, %p89
    %s91 = ssub.s32 %s10, %s17
    %p92 = scmp.eq.s32.totalorder %s91, 0
    %s94 = sadd.s32 %s93, 1
    %s95 = scalar_select %p92, %s93, %s94
    %p98 = pneg %p92
    %p99 = scmp.eq.s32.totalorder %s10, 5
    %p100 = por %p98, %p99
    %p101 = scmp.ne.s32.totalorder %s93, %s96
    %p102 = scmp.eq.s32.totalorder %s10, 0
    %p103 = por %p101, %p102
    %p104 = scmp.ne.s32.totalorder %s93, %s96
    %p105 = scmp.eq.s32.totalorder %s15, 5
    %p106 = por %p104, %p105
    %p107 = scmp.ne.s32.totalorder %s96, %s97
    %p108 = scmp.eq.s32.totalorder %s15, 0
    %p109 = por %p107, %p108
    %p110 = scmp.ne.s32.totalorder %s96, %s97
    %p111 = scmp.eq.s32.totalorder %s16, 5
    %p112 = por %p110, %p111
    %p114 = scmp.ne.s32.totalorder %s97, %s113
    %p115 = scmp.eq.s32.totalorder %s16, 0
    %p116 = por %p114, %p115
    %p117 = scmp.le.s32.totalorder 1, %s10
    %p118 = scmp.lt.s32.totalorder %s10, 7
    %p119 = pnand %p117, %p118
    %p120 = pneg %p119
    // Predicated region
    $region9: #{bottleneck_forward.4} parent=5 // pred_check
      _
    $region10: #{bottleneck_forward.4} parent=5 // pred_check_branch
      %122 = sbr.rel (%p119) target = $region12
    $region11: #{bottleneck_forward.4} parent=5 // pred_region
      %s123 = ssub.s32 %s10, 1
      // Predicated region
      $region13: #{bottleneck_forward.4} parent=11 // pred_check
        %p124 = pneg %p57
      $region14: #{bottleneck_forward.4} parent=11 // pred_check_branch
        %126 = sbr.rel (%p124) target = $region16
      $region15: #{bottleneck_forward.4} parent=11 // pred_region
        _
      $region16: #{bottleneck_forward.4} parent=11 // pred_fallthru
        _
    $region12: #{bottleneck_forward.4} parent=5 // pred_fallthru
      _
    %p127 = scmp.lt.s32.totalorder %s10, 6
    // Predicated region
    $region17: #{bottleneck_forward.4} parent=5 // pred_check
      %p128 = pneg %p127
    $region18: #{bottleneck_forward.4} parent=5 // pred_check_branch
      %130 = sbr.rel (%p128) target = $region20
    $region19: #{bottleneck_forward.4} parent=5 // pred_region
      // Predicated region
      $region21: #{bottleneck_forward.4} parent=19 // pred_check
        %p131 = pneg %p30
      $region22: #{bottleneck_forward.4} parent=19 // pred_check_branch
        %133 = sbr.rel (%p131) target = $region24
      $region23: #{bottleneck_forward.4} parent=19 // pred_region
        %s134 = smul.u32 12, %s10
        %p135 = scmp.lt.s32.totalorder %s134, 71
        %s136 = scalar_select %p135, %s134, 71
        %s137 = smul.addr %s136, 4
        %s138 = scalar_lea.vmem %s0, %s137
        %s139 = smul.u32 12, %s10
      $region24: #{bottleneck_forward.4} parent=19 // pred_fallthru
        _
    $region20: #{bottleneck_forward.4} parent=5 // pred_fallthru
      _
    %p140 = scmp.le.s32.totalorder 1, %s10
    %p141 = scmp.lt.s32.totalorder %s10, 7
    %p142 = pnand %p140, %p141
    %p143 = pneg %p142
    // Predicated region
    $region25: #{bottleneck_forward.4} parent=5 // pred_check
      _
    $region26: #{bottleneck_forward.4} parent=5 // pred_check_branch
      %145 = sbr.rel (%p142) target = $region28
    $region27: #{bottleneck_forward.4} parent=5 // pred_region
      %s146 = ssub.s32 %s10, 1
      %s147 = smul.u32 12, %s15
      %p148 = scmp.lt.s32.totalorder %s147, 71
      %s149 = scalar_select %p148, %s147, 71
      %s150 = smul.addr %s149, 4
      %s151 = scalar_lea.vmem %s0, %s150
      %p152 = pneg %p36
      %p153 = pneg %p33
      %p154 = pneg %p57
      %p155 = pneg %p54
      %p156 = pneg %p83
      %p157 = pneg %p80
      %s158 = smul.u32 12, %s15
      %p159 = scmp.lt.s32.totalorder %s158, 71
      %s160 = scalar_select %p159, %s158, 71
      %s161 = smul.addr %s160, 4
      %s162 = scalar_lea.vmem %s2, %s161
      %p163 = pneg %p109
      %p164 = pneg %p106
      %p165 = scmp.lt.s32.totalorder %s15, 5
      %s166 = scalar_select %p165, %s15, 5
      %s167 = smul.addr %s166, 2
      %s168 = scalar_lea.vmem %s3, %s167
      %s169 = smul.u32 12, %s15
      %p170 = scmp.lt.s32.totalorder %s169, 71
      %s171 = scalar_select %p170, %s169, 71
      %s172 = smul.addr %s171, 4
      %s173 = scalar_lea.vmem %s0, %s172
      %s174 = smul.u32 12, %s15
      %s175 = smul.u32 12, %s15
      %p176 = scmp.lt.s32.totalorder %s175, 71
      %s177 = scalar_select %p176, %s175, 71
      %s178 = smul.addr %s177, 4
      %s179 = scalar_lea.vmem %s2, %s178
      %s180 = smul.u32 12, %s15
      %p181 = scmp.lt.s32.totalorder %s15, 5
      %s182 = scalar_select %p181, %s15, 5
      %s183 = smul.addr %s182, 2
      %s184 = scalar_lea.vmem %s3, %s183
      %v185 = vld [vmem:[%s173] sm:$0xf]
      %v186 = vld [vmem:[%s173 + $0x4] sm:$0xf]
      %v187 = vld [vmem:[%s173 + $0x8] sm:$0xf]
      %v188 = vld [vmem:[%s173 + $0xc] sm:$0xf]
      %v189 = vld [vmem:[%s173 + $0x10] sm:$0xf]
      %v190 = vld [vmem:[%s173 + $0x14] sm:$0xf]
      %v191 = vld [vmem:[%s173 + $0x18] sm:$0xf]
      %v192 = vld [vmem:[%s173 + $0x1c] sm:$0xf]
      %v193 = vld [vmem:[%s173 + $0x20] sm:$0xf]
      %v194 = vld [vmem:[%s173 + $0x24] sm:$0xf]
      %v195 = vld [vmem:[%s173 + $0x28] sm:$0xf]
      %v196 = vld [vmem:[%s173 + $0x2c] sm:$0xf]
      %v197 = vld [vmem:[%s1] sm:$0xf]
      %v198 = vld [vmem:[%s1 + $0x4] sm:$0xf]
      %v199 = vld [vmem:[%s1 + $0x8] sm:$0xf]
      %v200 = vld [vmem:[%s1 + $0xc] sm:$0xf]
      %v201 = vld [vmem:[%s1 + $0x10] sm:$0xf]
      %v202 = vld [vmem:[%s1 + $0x14] sm:$0xf]
      %v203 = vld [vmem:[%s1 + $0x18] sm:$0xf]
      %v204 = vld [vmem:[%s1 + $0x1c] sm:$0xf]
      %v205 = vld [vmem:[%s1 + $0x20] sm:$0xf]
      %v206 = vld [vmem:[%s1 + $0x24] sm:$0xf]
      %v207 = vld [vmem:[%s1 + $0x28] sm:$0xf]
      %v208 = vld [vmem:[%s1 + $0x2c] sm:$0xf]
      %v209 = vld [vmem:[%s1 + $0x30] sm:$0xf]
      %v210 = vld [vmem:[%s1 + $0x34] sm:$0xf]
      %v211 = vld [vmem:[%s1 + $0x38] sm:$0xf]
      %v212 = vld [vmem:[%s1 + $0x3c] sm:$0xf]
      %v225 = vunpack.c.l.b16 %v185
      %v226 = vunpack.c.l.b16 %v186
      %v227 = vunpack.c.l.b16 %v187
      %v228 = vunpack.c.l.b16 %v188
      %v229 = vunpack.c.l.b16 %v189
      %v230 = vunpack.c.l.b16 %v190
      %v231 = vunpack.c.l.b16 %v191
      %v232 = vunpack.c.l.b16 %v192
      %v233 = vunpack.c.l.b16 %v193
      %v234 = vunpack.c.l.b16 %v194
      %v235 = vunpack.c.l.b16 %v195
      %v236 = vunpack.c.l.b16 %v196
      %v237 = vpack.c.b16 %v226, %v225
      %v238 = vpack.c.b16 %v228, %v227
      %v239 = vpack.c.b16 %v230, %v229
      %v240 = vpack.c.b16 %v232, %v231
      %v241 = vpack.c.b16 %v234, %v233
      %v242 = vpack.c.b16 %v236, %v235
      %v265 = vunpack.c.l.b16 %v197
      %v266 = vunpack.c.l.b16 %v198
      %v267 = vunpack.c.l.b16 %v199
      %v268 = vunpack.c.l.b16 %v200
      %v269 = vunpack.c.l.b16 %v201
      %v270 = vunpack.c.l.b16 %v202
      %v271 = vunpack.c.l.b16 %v203
      %v272 = vunpack.c.l.b16 %v204
      %v273 = vunpack.c.l.b16 %v205
      %v274 = vunpack.c.l.b16 %v206
      %v275 = vunpack.c.l.b16 %v207
      %v276 = vunpack.c.l.b16 %v208
      %v277 = vunpack.c.l.b16 %v209
      %v278 = vunpack.c.l.b16 %v210
      %v279 = vunpack.c.l.b16 %v211
      %v280 = vunpack.c.l.b16 %v212
      %v281 = vpack.c.b16 %v266, %v265
      %v282 = vpack.c.b16 %v268, %v267
      %v283 = vpack.c.b16 %v270, %v269
      %v284 = vpack.c.b16 %v272, %v271
      %v285 = vpack.c.b16 %v274, %v273
      %v286 = vpack.c.b16 %v276, %v275
      %v287 = vpack.c.b16 %v278, %v277
      %v288 = vpack.c.b16 %v280, %v279
      %297 = vmatpush.bf16.msra.mxu0 %v288
      %298 = vmatpush.bf16.msra.mxu0 %v287
      %299 = vmatpush.bf16.msra.mxu0 %v286
      %300 = vmatpush.bf16.msra.mxu0 %v285
      %301 = vmatpush.bf16.msra.mxu0 %v284
      %302 = vmatpush.bf16.msra.mxu0 %v283
      %303 = vmatpush.bf16.msra.mxu0 %v282
      %304 = vmatpush.bf16.msra.mxu0 %v281
      %305 = vmatmul.bf16.gmra.mxu0 %v237
      %v306 = vpop.f32.mrf.mxu0
      %v307 = vadd.f32 0.0, %v306
      %v308 = vpop.f32.mrf.mxu0
      %v309 = vadd.f32 0.0, %v308
      %310 = vmatmul.bf16.gmra.mxu0 %v238
      %v311 = vpop.f32.mrf.mxu0
      %v312 = vadd.f32 0.0, %v311
      %v313 = vpop.f32.mrf.mxu0
      %v314 = vadd.f32 0.0, %v313
      %315 = vmatmul.bf16.gmra.mxu0 %v239
      %v316 = vpop.f32.mrf.mxu0
      %v317 = vadd.f32 0.0, %v316
      %v318 = vpop.f32.mrf.mxu0
      %v319 = vadd.f32 0.0, %v318
      %320 = vmatmul.bf16.gmra.mxu0 %v240
      %v321 = vpop.f32.mrf.mxu0
      %v322 = vadd.f32 0.0, %v321
      %v323 = vpop.f32.mrf.mxu0
      %v324 = vadd.f32 0.0, %v323
      %325 = vmatmul.bf16.gmra.mxu0 %v241
      %v326 = vpop.f32.mrf.mxu0
      %v327 = vadd.f32 0.0, %v326
      %v328 = vpop.f32.mrf.mxu0
      %v329 = vadd.f32 0.0, %v328
      %330 = vmatmul.bf16.gmra.mxu0 %v242
      %v331 = vpop.f32.mrf.mxu0
      %v332 = vadd.f32 0.0, %v331
      %v333 = vpop.f32.mrf.mxu0
      %v334 = vadd.f32 0.0, %v333
      %335 = vdwg.mxu0
      %v336 = vpack.c.bf16 %v307, %v307
      %v337 = vpack.c.bf16 %v309, %v309
      %v338 = vpack.c.bf16 %v312, %v312
      %v339 = vpack.c.bf16 %v314, %v314
      %v340 = vpack.c.bf16 %v317, %v317
      %v341 = vpack.c.bf16 %v319, %v319
      %v342 = vpack.c.bf16 %v322, %v322
      %v343 = vpack.c.bf16 %v324, %v324
      %v344 = vpack.c.bf16 %v327, %v327
      %v345 = vpack.c.bf16 %v329, %v329
      %v346 = vpack.c.bf16 %v332, %v332
      %v347 = vpack.c.bf16 %v334, %v334
      %348 = vst [vmem:[%s179] sm:$0xf] %v336
      %349 = vst [vmem:[%s179 + $0x4] sm:$0xf] %v337
      %350 = vst [vmem:[%s179 + $0x8] sm:$0xf] %v338
      %351 = vst [vmem:[%s179 + $0xc] sm:$0xf] %v339
      %352 = vst [vmem:[%s179 + $0x10] sm:$0xf] %v340
      %353 = vst [vmem:[%s179 + $0x14] sm:$0xf] %v341
      %354 = vst [vmem:[%s179 + $0x18] sm:$0xf] %v342
      %355 = vst [vmem:[%s179 + $0x1c] sm:$0xf] %v343
      %356 = vst [vmem:[%s179 + $0x20] sm:$0xf] %v344
      %357 = vst [vmem:[%s179 + $0x24] sm:$0xf] %v345
      %358 = vst [vmem:[%s179 + $0x28] sm:$0xf] %v346
      %359 = vst [vmem:[%s179 + $0x2c] sm:$0xf] %v347
      %v360 = vadd.f32 %v307, %v309
      %v361 = vadd.f32 %v360, %v312
      %v362 = vadd.f32 %v361, %v314
      %v363 = vadd.f32 %v362, %v317
      %v364 = vadd.f32 %v363, %v319
      %v365 = vadd.f32 %v364, %v322
      %v366 = vadd.f32 %v365, %v324
      %v367 = vadd.f32 %v366, %v327
      %v368 = vadd.f32 %v367, %v329
      %v369 = vadd.f32 %v368, %v332
      %v370 = vadd.f32 %v369, %v334
      %v371 = vrot.slane %v370, 4
      %v372 = vadd.f32 %v370, %v371
      %v373 = vrot.slane %v372, 2
      %v374 = vadd.f32 %v372, %v373
      %v375 = vrot.slane %v374, 1
      %v376 = vadd.f32 %v374, %v375
      %v377 = vmul.f32 %v307, %v307
      %v378 = vmul.f32 %v309, %v309
      %v379 = vmul.f32 %v312, %v312
      %v380 = vmul.f32 %v314, %v314
      %v381 = vmul.f32 %v317, %v317
      %v382 = vmul.f32 %v319, %v319
      %v383 = vmul.f32 %v322, %v322
      %v384 = vmul.f32 %v324, %v324
      %v385 = vmul.f32 %v327, %v327
      %v386 = vmul.f32 %v329, %v329
      %v387 = vmul.f32 %v332, %v332
      %v388 = vmul.f32 %v334, %v334
      %v389 = vadd.f32 %v377, %v378
      %v390 = vadd.f32 %v389, %v379
      %v391 = vadd.f32 %v390, %v380
      %v392 = vadd.f32 %v391, %v381
      %v393 = vadd.f32 %v392, %v382
      %v394 = vadd.f32 %v393, %v383
      %v395 = vadd.f32 %v394, %v384
      %v396 = vadd.f32 %v395, %v385
      %v397 = vadd.f32 %v396, %v386
      %v398 = vadd.f32 %v397, %v387
      %v399 = vadd.f32 %v398, %v388
      %v400 = vrot.slane %v399, 4
      %v401 = vadd.f32 %v399, %v400
      %v402 = vrot.slane %v401, 2
      %v403 = vadd.f32 %v401, %v402
      %v404 = vrot.slane %v403, 1
      %v405 = vadd.f32 %v403, %v404
      %vm406 = vcmask 1040384
      %v407 = vsel %vm406, %v376, %v405
      %408 = vst [vmem:[%s184] sm:$0x3] %v407
      %s409 = smul.u32 12, %s15
      %p410 = scmp.lt.s32.totalorder %s409, 71
      %s411 = scalar_select %p410, %s409, 71
      %s412 = smul.addr %s411, 4
      %s413 = scalar_lea.vmem %s2, %s412
      %p414 = scmp.lt.s32.totalorder %s15, 5
      %s415 = scalar_select %p414, %s15, 5
      %s416 = smul.addr %s415, 2
      %s417 = scalar_lea.vmem %s3, %s416
      // Predicated region
      $region29: #{bottleneck_forward.4} parent=27 // pred_check
        %p418 = pneg %p80
      $region30: #{bottleneck_forward.4} parent=27 // pred_check_branch
        %420 = sbr.rel (%p418) target = $region32
      $region31: #{bottleneck_forward.4} parent=27 // pred_region
        %s421 = smul.u32 12, %s15
      $region32: #{bottleneck_forward.4} parent=27 // pred_fallthru
        _
      // Predicated region
      $region33: #{bottleneck_forward.4} parent=27 // pred_check
        %p422 = pneg %p106
      $region34: #{bottleneck_forward.4} parent=27 // pred_check_branch
        %424 = sbr.rel (%p422) target = $region36
      $region35: #{bottleneck_forward.4} parent=27 // pred_region
        _
      $region36: #{bottleneck_forward.4} parent=27 // pred_fallthru
        _
    $region28: #{bottleneck_forward.4} parent=5 // pred_fallthru
      _
    %p425 = scmp.le.s32.totalorder 2, %s10
    // Predicated region
    $region37: #{bottleneck_forward.4} parent=5 // pred_check
      %p426 = pneg %p425
    $region38: #{bottleneck_forward.4} parent=5 // pred_check_branch
      %428 = sbr.rel (%p426) target = $region40
    $region39: #{bottleneck_forward.4} parent=5 // pred_region
      %s429 = ssub.s32 %s10, 2
      // Predicated region
      $region41: #{bottleneck_forward.4} parent=39 // pred_check
        %p430 = pneg %p86
      $region42: #{bottleneck_forward.4} parent=39 // pred_check_branch
        %432 = sbr.rel (%p430) target = $region44
      $region43: #{bottleneck_forward.4} parent=39 // pred_region
        %s433 = smul.u32 12, %s16
        %p434 = scmp.lt.s32.totalorder %s433, 71
        %s435 = scalar_select %p434, %s433, 71
        %s436 = smul.addr %s435, 4
        %s437 = scalar_lea.vmem %s2, %s436
      $region44: #{bottleneck_forward.4} parent=39 // pred_fallthru
        _
      // Predicated region
      $region45: #{bottleneck_forward.4} parent=39 // pred_check
        %p438 = pneg %p112
      $region46: #{bottleneck_forward.4} parent=39 // pred_check_branch
        %440 = sbr.rel (%p438) target = $region48
      $region47: #{bottleneck_forward.4} parent=39 // pred_region
        %p441 = scmp.lt.s32.totalorder %s16, 5
        %s442 = scalar_select %p441, %s16, 5
        %s443 = smul.addr %s442, 2
        %s444 = scalar_lea.vmem %s3, %s443
      $region48: #{bottleneck_forward.4} parent=39 // pred_fallthru
        _
    $region40: #{bottleneck_forward.4} parent=5 // pred_fallthru
      _
  $region6: #{bottleneck_forward.4} parent=0 // loop_footer
    %s14 = sadd.s32 1, %s10
  $region7: #{bottleneck_forward.4} parent=0 // loop_footer_branch
    %9 = sbr.rel target = $region3
  $region8: #{bottleneck_forward.4} parent=0 // loop_exit
    _

// kernel: bottleneck_forward.6
$region0: #{bottleneck_forward.6}
  #allocation0 [shape = 'u32[]', space=smem, size = 0x4, offset = 0x4, fixed_abs, tag = 'smem constant byte address 0x4 - core index']
  #allocation1 [shape = 'u32[72,128]{1,0:T(1,128)}', space=vmem, size = 0x9000, scoped, tag = 'internal scratch']
  %s0 = inlined_call_operand.vmem [shape: bf16[576,128], index: 0, kind: input, shape index: {}]
  %s1 = inlined_call_operand.vmem [shape: f32[1,128], index: 1, kind: input, shape index: {}]
  %s2 = inlined_call_operand.vmem [shape: f32[1,128], index: 2, kind: input, shape index: {}]
  %s3 = inlined_call_operand.vmem [shape: bf16[128,128], index: 3, kind: input, shape index: {}]
  %s4 = inlined_call_operand.vmem [shape: bf16[576,128], index: 4, kind: output, shape index: {0}]
  %s5 = inlined_call_operand.vmem [shape: f32[6,2,128], index: 5, kind: output, shape index: {1}]
  %6 = xla_tuple %s4, %s5
  %s7 = sld [smem:[#allocation0]]
  $region57: #{bottleneck_forward.6} parent=0
    _
  %s9 = ssub.s32 1, %s7
  %s10 = scalar_select 0, %s9, %s7
  loop: start=0, step=1, limit=8
  $region2: #{bottleneck_forward.6} parent=0 // loop_pre_header
    _
  $region3: #{bottleneck_forward.6} parent=0 // loop_header
    %s12 = sphi 0, %s16
    %p13 = scmp.ge.s32.totalorder %s12, 8
    %s22 = sphi 0, %s24
    %s25 = sphi 0, %s22
    %s26 = sphi 0, %s25
    %s42 = sphi 0, %s26
    %s46 = sphi 0, %s46
    %s48 = sphi 0, %s46
    %s49 = sphi 0, %s48
    %s63 = sphi 0, %s49
    %s67 = sphi 0, %s67
    %s69 = sphi 0, %s67
    %s70 = sphi 0, %s69
    %s84 = sphi 0, %s70
    %s88 = sphi 0, %s88
    %s90 = sphi 0, %s88
    %s91 = sphi 0, %s90
    %s105 = sphi 0, %s91
    %s111 = sphi 0, %s113
    %s114 = sphi 0, %s111
    %s115 = sphi 0, %s114
    %s131 = sphi 0, %s115
    %s137 = sphi 0, %s139
    %s140 = sphi 0, %s137
    %s141 = sphi 0, %s140
    %s157 = sphi 0, %s141
  $region4: #{bottleneck_forward.6} parent=0 // loop_header_branch
    %15 = sbr.rel (%p13) target = $region8
  $region5: #{bottleneck_forward.6} parent=0 // loop_body
    %s17 = ssub.s32 %s12, 1
    %s18 = ssub.s32 %s12, 2
    %s19 = sadd.s32 %s12, 1
    %s20 = ssub.s32 %s12, %s19
    %p21 = scmp.eq.s32.totalorder %s20, 0
    %s23 = sadd.s32 %s22, 1
    %s24 = scalar_select %p21, %s22, %s23
    %p27 = pneg %p21
    %p28 = scmp.eq.s32.totalorder %s12, 5
    %p29 = por %p27, %p28
    %p30 = scmp.ne.s32.totalorder %s22, %s25
    %p31 = scmp.eq.s32.totalorder %s12, 0
    %p32 = por %p30, %p31
    %p33 = scmp.ne.s32.totalorder %s22, %s25
    %p34 = scmp.eq.s32.totalorder %s17, 5
    %p35 = por %p33, %p34
    %p36 = scmp.ne.s32.totalorder %s25, %s26
    %p37 = scmp.eq.s32.totalorder %s17, 0
    %p38 = por %p36, %p37
    %p39 = scmp.ne.s32.totalorder %s25, %s26
    %p40 = scmp.eq.s32.totalorder %s18, 5
    %p41 = por %p39, %p40
    %p43 = scmp.ne.s32.totalorder %s26, %s42
    %p44 = scmp.eq.s32.totalorder %s18, 0
    %p45 = por %p43, %p44
    %s47 = sadd.s32 %s46, 1
    %p50 = scmp.eq.s32.totalorder %s12, 5
    %p51 = scmp.ne.s32.totalorder %s46, %s48
    %p52 = scmp.eq.s32.totalorder %s12, 0
    %p53 = por %p51, %p52
    %p54 = scmp.ne.s32.totalorder %s46, %s48
    %p55 = scmp.eq.s32.totalorder %s17, 5
    %p56 = por %p54, %p55
    %p57 = scmp.ne.s32.totalorder %s48, %s49
    %p58 = scmp.eq.s32.totalorder %s17, 0
    %p59 = por %p57, %p58
    %p60 = scmp.ne.s32.totalorder %s48, %s49
    %p61 = scmp.eq.s32.totalorder %s18, 5
    %p62 = por %p60, %p61
    %p64 = scmp.ne.s32.totalorder %s49, %s63
    %p65 = scmp.eq.s32.totalorder %s18, 0
    %p66 = por %p64, %p65
    %s68 = sadd.s32 %s67, 1
    %p71 = scmp.eq.s32.totalorder %s12, 5
    %p72 = scmp.ne.s32.totalorder %s67, %s69
    %p73 = scmp.eq.s32.totalorder %s12, 0
    %p74 = por %p72, %p73
    %p75 = scmp.ne.s32.totalorder %s67, %s69
    %p76 = scmp.eq.s32.totalorder %s17, 5
    %p77 = por %p75, %p76
    %p78 = scmp.ne.s32.totalorder %s69, %s70
    %p79 = scmp.eq.s32.totalorder %s17, 0
    %p80 = por %p78, %p79
    %p81 = scmp.ne.s32.totalorder %s69, %s70
    %p82 = scmp.eq.s32.totalorder %s18, 5
    %p83 = por %p81, %p82
    %p85 = scmp.ne.s32.totalorder %s70, %s84
    %p86 = scmp.eq.s32.totalorder %s18, 0
    %p87 = por %p85, %p86
    %s89 = sadd.s32 %s88, 1
    %p92 = scmp.eq.s32.totalorder %s12, 5
    %p93 = scmp.ne.s32.totalorder %s88, %s90
    %p94 = scmp.eq.s32.totalorder %s12, 0
    %p95 = por %p93, %p94
    %p96 = scmp.ne.s32.totalorder %s88, %s90
    %p97 = scmp.eq.s32.totalorder %s17, 5
    %p98 = por %p96, %p97
    %p99 = scmp.ne.s32.totalorder %s90, %s91
    %p100 = scmp.eq.s32.totalorder %s17, 0
    %p101 = por %p99, %p100
    %p102 = scmp.ne.s32.totalorder %s90, %s91
    %p103 = scmp.eq.s32.totalorder %s18, 5
    %p104 = por %p102, %p103
    %p106 = scmp.ne.s32.totalorder %s91, %s105
    %p107 = scmp.eq.s32.totalorder %s18, 0
    %p108 = por %p106, %p107
    %s109 = ssub.s32 %s12, %s19
    %p110 = scmp.eq.s32.totalorder %s109, 0
    %s112 = sadd.s32 %s111, 1
    %s113 = scalar_select %p110, %s111, %s112
    %p116 = pneg %p110
    %p117 = scmp.eq.s32.totalorder %s12, 5
    %p118 = por %p116, %p117
    %p119 = scmp.ne.s32.totalorder %s111, %s114
    %p120 = scmp.eq.s32.totalorder %s12, 0
    %p121 = por %p119, %p120
    %p122 = scmp.ne.s32.totalorder %s111, %s114
    %p123 = scmp.eq.s32.totalorder %s17, 5
    %p124 = por %p122, %p123
    %p125 = scmp.ne.s32.totalorder %s114, %s115
    %p126 = scmp.eq.s32.totalorder %s17, 0
    %p127 = por %p125, %p126
    %p128 = scmp.ne.s32.totalorder %s114, %s115
    %p129 = scmp.eq.s32.totalorder %s18, 5
    %p130 = por %p128, %p129
    %p132 = scmp.ne.s32.totalorder %s115, %s131
    %p133 = scmp.eq.s32.totalorder %s18, 0
    %p134 = por %p132, %p133
    %s135 = ssub.s32 %s12, %s19
    %p136 = scmp.eq.s32.totalorder %s135, 0
    %s138 = sadd.s32 %s137, 1
    %s139 = scalar_select %p136, %s137, %s138
    %p142 = pneg %p136
    %p143 = scmp.eq.s32.totalorder %s12, 5
    %p144 = por %p142, %p143
    %p145 = scmp.ne.s32.totalorder %s137, %s140
    %p146 = scmp.eq.s32.totalorder %s12, 0
    %p147 = por %p145, %p146
    %p148 = scmp.ne.s32.totalorder %s137, %s140
    %p149 = scmp.eq.s32.totalorder %s17, 5
    %p150 = por %p148, %p149
    %p151 = scmp.ne.s32.totalorder %s140, %s141
    %p152 = scmp.eq.s32.totalorder %s17, 0
    %p153 = por %p151, %p152
    %p154 = scmp.ne.s32.totalorder %s140, %s141
    %p155 = scmp.eq.s32.totalorder %s18, 5
    %p156 = por %p154, %p155
    %p158 = scmp.ne.s32.totalorder %s141, %s157
    %p159 = scmp.eq.s32.totalorder %s18, 0
    %p160 = por %p158, %p159
    %p161 = scmp.le.s32.totalorder 1, %s12
    %p162 = scmp.lt.s32.totalorder %s12, 7
    %p163 = pnand %p161, %p162
    %p164 = pneg %p163
    // Predicated region
    $region9: #{bottleneck_forward.6} parent=5 // pred_check
      _
    $region10: #{bottleneck_forward.6} parent=5 // pred_check_branch
      %166 = sbr.rel (%p163) target = $region12
    $region11: #{bottleneck_forward.6} parent=5 // pred_region
      %s167 = ssub.s32 %s12, 1
      // Predicated region
      $region13: #{bottleneck_forward.6} parent=11 // pred_check
        %p168 = pneg %p59
      $region14: #{bottleneck_forward.6} parent=11 // pred_check_branch
        %170 = sbr.rel (%p168) target = $region16
      $region15: #{bottleneck_forward.6} parent=11 // pred_region
        _
      $region16: #{bottleneck_forward.6} parent=11 // pred_fallthru
        _
      // Predicated region
      $region17: #{bottleneck_forward.6} parent=11 // pred_check
        %p171 = pneg %p80
      $region18: #{bottleneck_forward.6} parent=11 // pred_check_branch
        %173 = sbr.rel (%p171) target = $region20
      $region19: #{bottleneck_forward.6} parent=11 // pred_region
        _
      $region20: #{bottleneck_forward.6} parent=11 // pred_fallthru
        _
      // Predicated region
      $region21: #{bottleneck_forward.6} parent=11 // pred_check
        %p174 = pneg %p101
      $region22: #{bottleneck_forward.6} parent=11 // pred_check_branch
        %176 = sbr.rel (%p174) target = $region24
      $region23: #{bottleneck_forward.6} parent=11 // pred_region
        _
      $region24: #{bottleneck_forward.6} parent=11 // pred_fallthru
        _
    $region12: #{bottleneck_forward.6} parent=5 // pred_fallthru
      _
    %p177 = scmp.lt.s32.totalorder %s12, 6
    // Predicated region
    $region25: #{bottleneck_forward.6} parent=5 // pred_check
      %p178 = pneg %p177
    $region26: #{bottleneck_forward.6} parent=5 // pred_check_branch
      %180 = sbr.rel (%p178) target = $region28
    $region27: #{bottleneck_forward.6} parent=5 // pred_region
      // Predicated region
      $region29: #{bottleneck_forward.6} parent=27 // pred_check
        %p181 = pneg %p32
      $region30: #{bottleneck_forward.6} parent=27 // pred_check_branch
        %183 = sbr.rel (%p181) target = $region32
      $region31: #{bottleneck_forward.6} parent=27 // pred_region
        %s184 = smul.u32 12, %s12
        %p185 = scmp.lt.s32.totalorder %s184, 71
        %s186 = scalar_select %p185, %s184, 71
        %s187 = smul.addr %s186, 4
        %s188 = scalar_lea.vmem %s0, %s187
        %s189 = smul.u32 12, %s12
      $region32: #{bottleneck_forward.6} parent=27 // pred_fallthru
        _
    $region28: #{bottleneck_forward.6} parent=5 // pred_fallthru
      _
    %p190 = scmp.le.s32.totalorder 1, %s12
    %p191 = scmp.lt.s32.totalorder %s12, 7
    %p192 = pnand %p190, %p191
    %p193 = pneg %p192
    // Predicated region
    $region33: #{bottleneck_forward.6} parent=5 // pred_check
      _
    $region34: #{bottleneck_forward.6} parent=5 // pred_check_branch
      %195 = sbr.rel (%p192) target = $region36
    $region35: #{bottleneck_forward.6} parent=5 // pred_region
      %s196 = ssub.s32 %s12, 1
      %s197 = smul.u32 12, %s17
      %p198 = scmp.lt.s32.totalorder %s197, 71
      %s199 = scalar_select %p198, %s197, 71
      %s200 = smul.addr %s199, 4
      %s201 = scalar_lea.vmem %s0, %s200
      %p202 = pneg %p38
      %p203 = pneg %p35
      %p204 = pneg %p59
      %p205 = pneg %p56
      %p206 = pneg %p80
      %p207 = pneg %p77
      %p208 = pneg %p101
      %p209 = pneg %p98
      %p210 = pneg %p127
      %p211 = pneg %p124
      %s212 = smul.u32 12, %s17
      %p213 = scmp.lt.s32.totalorder %s212, 71
      %s214 = scalar_select %p213, %s212, 71
      %s215 = smul.addr %s214, 4
      %s216 = scalar_lea.vmem %s4, %s215
      %p217 = pneg %p153
      %p218 = pneg %p150
      %p219 = scmp.lt.s32.totalorder %s17, 5
      %s220 = scalar_select %p219, %s17, 5
      %s221 = smul.addr %s220, 2
      %s222 = scalar_lea.vmem %s5, %s221
      %s223 = smul.u32 12, %s17
      %p224 = scmp.lt.s32.totalorder %s223, 71
      %s225 = scalar_select %p224, %s223, 71
      %s226 = smul.addr %s225, 4
      %s227 = scalar_lea.vmem %s0, %s226
      %s228 = smul.u32 12, %s17
      %s229 = smul.u32 12, %s17
      %p230 = scmp.lt.s32.totalorder %s229, 71
      %s231 = scalar_select %p230, %s229, 71
      %s232 = smul.addr %s231, 4
      %s233 = scalar_lea.vmem %s4, %s232
      %s234 = smul.u32 12, %s17
      %p235 = scmp.lt.s32.totalorder %s17, 5
      %s236 = scalar_select %p235, %s17, 5
      %s237 = smul.addr %s236, 2
      %s238 = scalar_lea.vmem %s5, %s237
      %v239 = vld [vmem:[%s227] sm:$0xf]
      %v240 = vld [vmem:[%s227 + $0x4] sm:$0xf]
      %v241 = vld [vmem:[%s227 + $0x8] sm:$0xf]
      %v242 = vld [vmem:[%s227 + $0xc] sm:$0xf]
      %v243 = vld [vmem:[%s227 + $0x10] sm:$0xf]
      %v244 = vld [vmem:[%s227 + $0x14] sm:$0xf]
      %v245 = vld [vmem:[%s227 + $0x18] sm:$0xf]
      %v246 = vld [vmem:[%s227 + $0x1c] sm:$0xf]
      %v247 = vld [vmem:[%s227 + $0x20] sm:$0xf]
      %v248 = vld [vmem:[%s227 + $0x24] sm:$0xf]
      %v249 = vld [vmem:[%s227 + $0x28] sm:$0xf]
      %v250 = vld [vmem:[%s227 + $0x2c] sm:$0xf]
      %v251 = vunpack.c.l.bf16 %v239
      %v252 = vunpack.c.l.bf16 %v240
      %v253 = vunpack.c.l.bf16 %v241
      %v254 = vunpack.c.l.bf16 %v242
      %v255 = vunpack.c.l.bf16 %v243
      %v256 = vunpack.c.l.bf16 %v244
      %v257 = vunpack.c.l.bf16 %v245
      %v258 = vunpack.c.l.bf16 %v246
      %v259 = vunpack.c.l.bf16 %v247
      %v260 = vunpack.c.l.bf16 %v248
      %v261 = vunpack.c.l.bf16 %v249
      %v262 = vunpack.c.l.bf16 %v250
      %v263 = vld [vmem:[%s1] sm:$0x1]
      %v265 = vperm.slane %v263, 0
      %v267 = vmul.f32 %v251, %v265
      %v268 = vmul.f32 %v252, %v265
      %v269 = vmul.f32 %v253, %v265
      %v270 = vmul.f32 %v254, %v265
      %v271 = vmul.f32 %v255, %v265
      %v272 = vmul.f32 %v256, %v265
      %v273 = vmul.f32 %v257, %v265
      %v274 = vmul.f32 %v258, %v265
      %v275 = vmul.f32 %v259, %v265
      %v276 = vmul.f32 %v260, %v265
      %v277 = vmul.f32 %v261, %v265
      %v278 = vmul.f32 %v262, %v265
      %v279 = vld [vmem:[%s2] sm:$0x1]
      %v281 = vperm.slane %v279, 0
      %v283 = vadd.f32 %v267, %v281
      %v284 = vadd.f32 %v268, %v281
      %v285 = vadd.f32 %v269, %v281
      %v286 = vadd.f32 %v270, %v281
      %v287 = vadd.f32 %v271, %v281
      %v288 = vadd.f32 %v272, %v281
      %v289 = vadd.f32 %v273, %v281
      %v290 = vadd.f32 %v274, %v281
      %v291 = vadd.f32 %v275, %v281
      %v292 = vadd.f32 %v276, %v281
      %v293 = vadd.f32 %v277, %v281
      %v294 = vadd.f32 %v278, %v281
      %v295 = vmax.f32 %v283, 0.0
      %v296 = vmax.f32 %v284, 0.0
      %v297 = vmax.f32 %v285, 0.0
      %v298 = vmax.f32 %v286, 0.0
      %v299 = vmax.f32 %v287, 0.0
      %v300 = vmax.f32 %v288, 0.0
      %v301 = vmax.f32 %v289, 0.0
      %v302 = vmax.f32 %v290, 0.0
      %v303 = vmax.f32 %v291, 0.0
      %v304 = vmax.f32 %v292, 0.0
      %v305 = vmax.f32 %v293, 0.0
      %v306 = vmax.f32 %v294, 0.0
      %s307 = smul.u32 %s17, 96
      %v308 = vlaneseq
      %v309 = vshrl.u32 %v308, 7
      %v310 = vadd.s32 %v309, 8
      %v311 = vadd.s32 %v309, 16
      %v312 = vadd.s32 %v309, 24
      %v313 = vadd.s32 %v309, 32
      %v314 = vadd.s32 %v309, 40
      %v315 = vadd.s32 %v309, 48
      %v316 = vadd.s32 %v309, 56
      %v317 = vadd.s32 %v309, 64
      %v318 = vadd.s32 %v309, 72
      %v319 = vadd.s32 %v309, 80
      %v320 = vadd.s32 %v309, 88
      %v321 = vstv %s307
      %v322 = vadd.s32 %v321, %v309
      %v323 = vadd.s32 %v321, %v310
      %v324 = vadd.s32 %v321, %v311
      %v325 = vadd.s32 %v321, %v312
      %v326 = vadd.s32 %v321, %v313
      %v327 = vadd.s32 %v321, %v314
      %v328 = vadd.s32 %v321, %v315
      %v329 = vadd.s32 %v321, %v316
      %v330 = vadd.s32 %v321, %v317
      %v331 = vadd.s32 %v321, %v318
      %v332 = vadd.s32 %v321, %v319
      %v333 = vadd.s32 %v321, %v320
      %vm334 = vcmp.lt.s32.totalorder %v322, 512
      %vm335 = vcmp.lt.s32.totalorder %v323, 512
      %vm336 = vcmp.lt.s32.totalorder %v324, 512
      %vm337 = vcmp.lt.s32.totalorder %v325, 512
      %vm338 = vcmp.lt.s32.totalorder %v326, 512
      %vm339 = vcmp.lt.s32.totalorder %v327, 512
      %vm340 = vcmp.lt.s32.totalorder %v328, 512
      %vm341 = vcmp.lt.s32.totalorder %v329, 512
      %vm342 = vcmp.lt.s32.totalorder %v330, 512
      %vm343 = vcmp.lt.s32.totalorder %v331, 512
      %vm344 = vcmp.lt.s32.totalorder %v332, 512
      %vm345 = vcmp.lt.s32.totalorder %v333, 512
      %v346 = vsel %vm334, 1, 0
      %v347 = vsel %vm335, 1, 0
      %v348 = vsel %vm336, 1, 0
      %v349 = vsel %vm337, 1, 0
      %v350 = vsel %vm338, 1, 0
      %v351 = vsel %vm339, 1, 0
      %v352 = vsel %vm340, 1, 0
      %v353 = vsel %vm341, 1, 0
      %v354 = vsel %vm342, 1, 0
      %v355 = vsel %vm343, 1, 0
      %v356 = vsel %vm344, 1, 0
      %v357 = vsel %vm345, 1, 0
      %vm358 = vcmp.eq.s32.totalorder %v346, 1
      %vm359 = vcmp.eq.s32.totalorder %v347, 1
      %vm360 = vcmp.eq.s32.totalorder %v348, 1
      %vm361 = vcmp.eq.s32.totalorder %v349, 1
      %vm362 = vcmp.eq.s32.totalorder %v350, 1
      %vm363 = vcmp.eq.s32.totalorder %v351, 1
      %vm364 = vcmp.eq.s32.totalorder %v352, 1
      %vm365 = vcmp.eq.s32.totalorder %v353, 1
      %vm366 = vcmp.eq.s32.totalorder %v354, 1
      %vm367 = vcmp.eq.s32.totalorder %v355, 1
      %vm368 = vcmp.eq.s32.totalorder %v356, 1
      %vm369 = vcmp.eq.s32.totalorder %v357, 1
      %v370 = vsel %vm358, %v295, 0.0
      %v371 = vsel %vm359, %v296, 0.0
      %v372 = vsel %vm360, %v297, 0.0
      %v373 = vsel %vm361, %v298, 0.0
      %v374 = vsel %vm362, %v299, 0.0
      %v375 = vsel %vm363, %v300, 0.0
      %v376 = vsel %vm364, %v301, 0.0
      %v377 = vsel %vm365, %v302, 0.0
      %v378 = vsel %vm366, %v303, 0.0
      %v379 = vsel %vm367, %v304, 0.0
      %v380 = vsel %vm368, %v305, 0.0
      %v381 = vsel %vm369, %v306, 0.0
      %v382 = vpack.c.bf16 %v371, %v370
      %v383 = vpack.c.bf16 %v373, %v372
      %v384 = vpack.c.bf16 %v375, %v374
      %v385 = vpack.c.bf16 %v377, %v376
      %v386 = vpack.c.bf16 %v379, %v378
      %v387 = vpack.c.bf16 %v381, %v380
      %v388 = vld [vmem:[%s3] sm:$0xf]
      %v389 = vld [vmem:[%s3 + $0x4] sm:$0xf]
      %v390 = vld [vmem:[%s3 + $0x8] sm:$0xf]
      %v391 = vld [vmem:[%s3 + $0xc] sm:$0xf]
      %v392 = vld [vmem:[%s3 + $0x10] sm:$0xf]
      %v393 = vld [vmem:[%s3 + $0x14] sm:$0xf]
      %v394 = vld [vmem:[%s3 + $0x18] sm:$0xf]
      %v395 = vld [vmem:[%s3 + $0x1c] sm:$0xf]
      %v396 = vld [vmem:[%s3 + $0x20] sm:$0xf]
      %v397 = vld [vmem:[%s3 + $0x24] sm:$0xf]
      %v398 = vld [vmem:[%s3 + $0x28] sm:$0xf]
      %v399 = vld [vmem:[%s3 + $0x2c] sm:$0xf]
      %v400 = vld [vmem:[%s3 + $0x30] sm:$0xf]
      %v401 = vld [vmem:[%s3 + $0x34] sm:$0xf]
      %v402 = vld [vmem:[%s3 + $0x38] sm:$0xf]
      %v403 = vld [vmem:[%s3 + $0x3c] sm:$0xf]
      %v420 = vunpack.c.l.b16 %v388
      %v421 = vunpack.c.l.b16 %v389
      %v422 = vunpack.c.l.b16 %v390
      %v423 = vunpack.c.l.b16 %v391
      %v424 = vunpack.c.l.b16 %v392
      %v425 = vunpack.c.l.b16 %v393
      %v426 = vunpack.c.l.b16 %v394
      %v427 = vunpack.c.l.b16 %v395
      %v428 = vunpack.c.l.b16 %v396
      %v429 = vunpack.c.l.b16 %v397
      %v430 = vunpack.c.l.b16 %v398
      %v431 = vunpack.c.l.b16 %v399
      %v432 = vunpack.c.l.b16 %v400
      %v433 = vunpack.c.l.b16 %v401
      %v434 = vunpack.c.l.b16 %v402
      %v435 = vunpack.c.l.b16 %v403
      %v436 = vpack.c.b16 %v421, %v420
      %v437 = vpack.c.b16 %v423, %v422
      %v438 = vpack.c.b16 %v425, %v424
      %v439 = vpack.c.b16 %v427, %v426
      %v440 = vpack.c.b16 %v429, %v428
      %v441 = vpack.c.b16 %v431, %v430
      %v442 = vpack.c.b16 %v433, %v432
      %v443 = vpack.c.b16 %v435, %v434
      %452 = vmatpush.bf16.msra.mxu0 %v443
      %453 = vmatpush.bf16.msra.mxu0 %v442
      %454 = vmatpush.bf16.msra.mxu0 %v441
      %455 = vmatpush.bf16.msra.mxu0 %v440
      %456 = vmatpush.bf16.msra.mxu0 %v439
      %457 = vmatpush.bf16.msra.mxu0 %v438
      %458 = vmatpush.bf16.msra.mxu0 %v437
      %459 = vmatpush.bf16.msra.mxu0 %v436
      %460 = vmatmul.bf16.gmra.mxu0 %v382
      %v461 = vpop.f32.mrf.mxu0
      %v462 = vadd.f32 0.0, %v461
      %v463 = vpop.f32.mrf.mxu0
      %v464 = vadd.f32 0.0, %v463
      %465 = vmatmul.bf16.gmra.mxu0 %v383
      %v466 = vpop.f32.mrf.mxu0
      %v467 = vadd.f32 0.0, %v466
      %v468 = vpop.f32.mrf.mxu0
      %v469 = vadd.f32 0.0, %v468
      %470 = vmatmul.bf16.gmra.mxu0 %v384
      %v471 = vpop.f32.mrf.mxu0
      %v472 = vadd.f32 0.0, %v471
      %v473 = vpop.f32.mrf.mxu0
      %v474 = vadd.f32 0.0, %v473
      %475 = vmatmul.bf16.gmra.mxu0 %v385
      %v476 = vpop.f32.mrf.mxu0
      %v477 = vadd.f32 0.0, %v476
      %v478 = vpop.f32.mrf.mxu0
      %v479 = vadd.f32 0.0, %v478
      %480 = vmatmul.bf16.gmra.mxu0 %v386
      %v481 = vpop.f32.mrf.mxu0
      %v482 = vadd.f32 0.0, %v481
      %v483 = vpop.f32.mrf.mxu0
      %v484 = vadd.f32 0.0, %v483
      %485 = vmatmul.bf16.gmra.mxu0 %v387
      %v486 = vpop.f32.mrf.mxu0
      %v487 = vadd.f32 0.0, %v486
      %v488 = vpop.f32.mrf.mxu0
      %v489 = vadd.f32 0.0, %v488
      %490 = vdwg.mxu0
      %v491 = vpack.c.bf16 %v462, %v462
      %v492 = vpack.c.bf16 %v464, %v464
      %v493 = vpack.c.bf16 %v467, %v467
      %v494 = vpack.c.bf16 %v469, %v469
      %v495 = vpack.c.bf16 %v472, %v472
      %v496 = vpack.c.bf16 %v474, %v474
      %v497 = vpack.c.bf16 %v477, %v477
      %v498 = vpack.c.bf16 %v479, %v479
      %v499 = vpack.c.bf16 %v482, %v482
      %v500 = vpack.c.bf16 %v484, %v484
      %v501 = vpack.c.bf16 %v487, %v487
      %v502 = vpack.c.bf16 %v489, %v489
      %503 = vst [vmem:[%s233] sm:$0xf] %v491
      %504 = vst [vmem:[%s233 + $0x4] sm:$0xf] %v492
      %505 = vst [vmem:[%s233 + $0x8] sm:$0xf] %v493
      %506 = vst [vmem:[%s233 + $0xc] sm:$0xf] %v494
      %507 = vst [vmem:[%s233 + $0x10] sm:$0xf] %v495
      %508 = vst [vmem:[%s233 + $0x14] sm:$0xf] %v496
      %509 = vst [vmem:[%s233 + $0x18] sm:$0xf] %v497
      %510 = vst [vmem:[%s233 + $0x1c] sm:$0xf] %v498
      %511 = vst [vmem:[%s233 + $0x20] sm:$0xf] %v499
      %512 = vst [vmem:[%s233 + $0x24] sm:$0xf] %v500
      %513 = vst [vmem:[%s233 + $0x28] sm:$0xf] %v501
      %514 = vst [vmem:[%s233 + $0x2c] sm:$0xf] %v502
      %v515 = vadd.f32 %v462, %v464
      %v516 = vadd.f32 %v515, %v467
      %v517 = vadd.f32 %v516, %v469
      %v518 = vadd.f32 %v517, %v472
      %v519 = vadd.f32 %v518, %v474
      %v520 = vadd.f32 %v519, %v477
      %v521 = vadd.f32 %v520, %v479
      %v522 = vadd.f32 %v521, %v482
      %v523 = vadd.f32 %v522, %v484
      %v524 = vadd.f32 %v523, %v487
      %v525 = vadd.f32 %v524, %v489
      %v526 = vrot.slane %v525, 4
      %v527 = vadd.f32 %v525, %v526
      %v528 = vrot.slane %v527, 2
      %v529 = vadd.f32 %v527, %v528
      %v530 = vrot.slane %v529, 1
      %v531 = vadd.f32 %v529, %v530
      %v532 = vmul.f32 %v462, %v462
      %v533 = vmul.f32 %v464, %v464
      %v534 = vmul.f32 %v467, %v467
      %v535 = vmul.f32 %v469, %v469
      %v536 = vmul.f32 %v472, %v472
      %v537 = vmul.f32 %v474, %v474
      %v538 = vmul.f32 %v477, %v477
      %v539 = vmul.f32 %v479, %v479
      %v540 = vmul.f32 %v482, %v482
      %v541 = vmul.f32 %v484, %v484
      %v542 = vmul.f32 %v487, %v487
      %v543 = vmul.f32 %v489, %v489
      %v544 = vadd.f32 %v532, %v533
      %v545 = vadd.f32 %v544, %v534
      %v546 = vadd.f32 %v545, %v535
      %v547 = vadd.f32 %v546, %v536
      %v548 = vadd.f32 %v547, %v537
      %v549 = vadd.f32 %v548, %v538
      %v550 = vadd.f32 %v549, %v539
      %v551 = vadd.f32 %v550, %v540
      %v552 = vadd.f32 %v551, %v541
      %v553 = vadd.f32 %v552, %v542
      %v554 = vadd.f32 %v553, %v543
      %v555 = vrot.slane %v554, 4
      %v556 = vadd.f32 %v554, %v555
      %v557 = vrot.slane %v556, 2
      %v558 = vadd.f32 %v556, %v557
      %v559 = vrot.slane %v558, 1
      %v560 = vadd.f32 %v558, %v559
      %vm561 = vcmask 1040384
      %v562 = vsel %vm561, %v531, %v560
      %563 = vst [vmem:[%s238] sm:$0x3] %v562
      %s564 = smul.u32 12, %s17
      %p565 = scmp.lt.s32.totalorder %s564, 71
      %s566 = scalar_select %p565, %s564, 71
      %s567 = smul.addr %s566, 4
      %s568 = scalar_lea.vmem %s4, %s567
      %p569 = scmp.lt.s32.totalorder %s17, 5
      %s570 = scalar_select %p569, %s17, 5
      %s571 = smul.addr %s570, 2
      %s572 = scalar_lea.vmem %s5, %s571
      // Predicated region
      $region37: #{bottleneck_forward.6} parent=35 // pred_check
        %p573 = pneg %p124
      $region38: #{bottleneck_forward.6} parent=35 // pred_check_branch
        %575 = sbr.rel (%p573) target = $region40
      $region39: #{bottleneck_forward.6} parent=35 // pred_region
        %s576 = smul.u32 12, %s17
      $region40: #{bottleneck_forward.6} parent=35 // pred_fallthru
        _
      // Predicated region
      $region41: #{bottleneck_forward.6} parent=35 // pred_check
        %p577 = pneg %p150
      $region42: #{bottleneck_forward.6} parent=35 // pred_check_branch
        %579 = sbr.rel (%p577) target = $region44
      $region43: #{bottleneck_forward.6} parent=35 // pred_region
        _
      $region44: #{bottleneck_forward.6} parent=35 // pred_fallthru
        _
    $region36: #{bottleneck_forward.6} parent=5 // pred_fallthru
      _
    %p580 = scmp.le.s32.totalorder 2, %s12
    // Predicated region
    $region45: #{bottleneck_forward.6} parent=5 // pred_check
      %p581 = pneg %p580
    $region46: #{bottleneck_forward.6} parent=5 // pred_check_branch
      %583 = sbr.rel (%p581) target = $region48
    $region47: #{bottleneck_forward.6} parent=5 // pred_region
      %s584 = ssub.s32 %s12, 2
      // Predicated region
      $region49: #{bottleneck_forward.6} parent=47 // pred_check
        %p585 = pneg %p130
      $region50: #{bottleneck_forward.6} parent=47 // pred_check_branch
        %587 = sbr.rel (%p585) target = $region52
      $region51: #{bottleneck_forward.6} parent=47 // pred_region
        %s588 = smul.u32 12, %s18
        %p589 = scmp.lt.s32.totalorder %s588, 71
        %s590 = scalar_select %p589, %s588, 71
        %s591 = smul.addr %s590, 4
        %s592 = scalar_lea.vmem %s4, %s591
      $region52: #{bottleneck_forward.6} parent=47 // pred_fallthru
        _
      // Predicated region
      $region53: #{bottleneck_forward.6} parent=47 // pred_check
        %p593 = pneg %p156
      $region54: #{bottleneck_forward.6} parent=47 // pred_check_branch
        %595 = sbr.rel (%p593) target = $region56
      $region55: #{bottleneck_forward.6} parent=47 // pred_region
        %p596 = scmp.lt.s32.totalorder %s18, 5
        %s597 = scalar_select %p596, %s18, 5
        %s598 = smul.addr %s597, 2
        %s599 = scalar_lea.vmem %s5, %s598
      $region56: #{bottleneck_forward.6} parent=47 // pred_fallthru
        _
    $region48: #{bottleneck_forward.6} parent=5 // pred_fallthru
      _
  $region6: #{bottleneck_forward.6} parent=0 // loop_footer
    %s16 = sadd.s32 1, %s12
  $region7: #{bottleneck_forward.6} parent=0 // loop_footer_branch
    %11 = sbr.rel target = $region3
  $region8: #{bottleneck_forward.6} parent=0 // loop_exit
    _

// kernel: bottleneck_forward.5
$region0: #{bottleneck_forward.5}
  #allocation0 [shape = 'u32[]', space=smem, size = 0x4, offset = 0x4, fixed_abs, tag = 'smem constant byte address 0x4 - core index']
  #allocation1 [shape = 'u32[72,128]{1,0:T(1,128)}', space=vmem, size = 0x9000, scoped, tag = 'internal scratch']
  #allocation2 [shape = 'bf16[10,18,128]{2,1,0:T(8,128)(2,1)}', space=vmem, size = 0xf000, scoped, tag = 'scratch operand']
  %s0 = inlined_call_operand.vmem [shape: bf16[2,16,16,128], index: 0, kind: input, shape index: {}]
  %s1 = inlined_call_operand.vmem [shape: f32[1,128], index: 1, kind: input, shape index: {}]
  %s2 = inlined_call_operand.vmem [shape: f32[1,128], index: 2, kind: input, shape index: {}]
  %s3 = inlined_call_operand.vmem [shape: bf16[1152,128], index: 3, kind: input, shape index: {}]
  %s4 = inlined_call_operand.vmem [shape: bf16[2,16,16,128], index: 4, kind: output, shape index: {0}]
  %s5 = inlined_call_operand.vmem [shape: f32[2,2,2,128], index: 5, kind: output, shape index: {1}]
  %6 = xla_tuple %s4, %s5
  %s7 = sld [smem:[#allocation0]]
  $region65: #{bottleneck_forward.5} parent=0
    _
  %s9 = ssub.s32 1, %s7
  %s10 = scalar_select 0, %s9, %s7
  loop: start=0, step=1, limit=6
  $region2: #{bottleneck_forward.5} parent=0 // loop_pre_header
    _
  $region3: #{bottleneck_forward.5} parent=0 // loop_header
    %s12 = sphi 0, %s16
    %p13 = scmp.ge.s32.totalorder %s12, 6
    %s19 = sphi 0, %s31
    %s20 = sphi 0, %s27
    %s21 = sphi 0, %s19
    %s22 = sphi 0, %s20
    %s23 = sphi 0, %s21
    %s24 = sphi 0, %s22
    %s34 = sphi 0, %s36
    %s37 = sphi 0, %s34
    %s38 = sphi 0, %s37
    %s54 = sphi 0, %s38
    %s58 = sphi 0, %s58
    %s60 = sphi 0, %s58
    %s61 = sphi 0, %s60
    %s75 = sphi 0, %s61
    %s79 = sphi 0, %s79
    %s81 = sphi 0, %s79
    %s82 = sphi 0, %s81
    %s96 = sphi 0, %s82
    %s100 = sphi 0, %s100
    %s102 = sphi 0, %s100
    %s103 = sphi 0, %s102
    %s117 = sphi 0, %s103
    %s125 = sphi 0, %s127
    %s128 = sphi 0, %s125
    %s129 = sphi 0, %s128
    %s145 = sphi 0, %s129
    %s153 = sphi 0, %s155
    %s156 = sphi 0, %s153
    %s157 = sphi 0, %s156
    %s173 = sphi 0, %s157
  $region4: #{bottleneck_forward.5} parent=0 // loop_header_branch
    %15 = sbr.rel (%p13) target = $region8
  $region5: #{bottleneck_forward.5} parent=0 // loop_body
    %s17 = ssub.s32 %s12, 1
    %s18 = ssub.s32 %s12, 2
    %s25 = sadd.s32 1, %s20
    %p26 = scmp.ge.s32.totalorder %s25, 2
    %s27 = scalar_select %p26, 0, %s25
    %s28 = sadd.s32 1, %s19
    %s29 = scalar_select %p26, %s28, %s19
    %p30 = scmp.ge.s32.totalorder %s29, 2
    %s31 = scalar_select %p30, 0, %s29
    %s32 = ssub.s32 %s19, %s31
    %p33 = scmp.eq.s32.totalorder %s32, 0
    %s35 = sadd.s32 %s34, 1
    %s36 = scalar_select %p33, %s34, %s35
    %p39 = pneg %p33
    %p40 = scmp.eq.s32.totalorder %s12, 3
    %p41 = por %p39, %p40
    %p42 = scmp.ne.s32.totalorder %s34, %s37
    %p43 = scmp.eq.s32.totalorder %s12, 0
    %p44 = por %p42, %p43
    %p45 = scmp.ne.s32.totalorder %s34, %s37
    %p46 = scmp.eq.s32.totalorder %s17, 3
    %p47 = por %p45, %p46
    %p48 = scmp.ne.s32.totalorder %s37, %s38
    %p49 = scmp.eq.s32.totalorder %s17, 0
    %p50 = por %p48, %p49
    %p51 = scmp.ne.s32.totalorder %s37, %s38
    %p52 = scmp.eq.s32.totalorder %s18, 3
    %p53 = por %p51, %p52
    %p55 = scmp.ne.s32.totalorder %s38, %s54
    %p56 = scmp.eq.s32.totalorder %s18, 0
    %p57 = por %p55, %p56
    %s59 = sadd.s32 %s58, 1
    %p62 = scmp.eq.s32.totalorder %s12, 3
    %p63 = scmp.ne.s32.totalorder %s58, %s60
    %p64 = scmp.eq.s32.totalorder %s12, 0
    %p65 = por %p63, %p64
    %p66 = scmp.ne.s32.totalorder %s58, %s60
    %p67 = scmp.eq.s32.totalorder %s17, 3
    %p68 = por %p66, %p67
    %p69 = scmp.ne.s32.totalorder %s60, %s61
    %p70 = scmp.eq.s32.totalorder %s17, 0
    %p71 = por %p69, %p70
    %p72 = scmp.ne.s32.totalorder %s60, %s61
    %p73 = scmp.eq.s32.totalorder %s18, 3
    %p74 = por %p72, %p73
    %p76 = scmp.ne.s32.totalorder %s61, %s75
    %p77 = scmp.eq.s32.totalorder %s18, 0
    %p78 = por %p76, %p77
    %s80 = sadd.s32 %s79, 1
    %p83 = scmp.eq.s32.totalorder %s12, 3
    %p84 = scmp.ne.s32.totalorder %s79, %s81
    %p85 = scmp.eq.s32.totalorder %s12, 0
    %p86 = por %p84, %p85
    %p87 = scmp.ne.s32.totalorder %s79, %s81
    %p88 = scmp.eq.s32.totalorder %s17, 3
    %p89 = por %p87, %p88
    %p90 = scmp.ne.s32.totalorder %s81, %s82
    %p91 = scmp.eq.s32.totalorder %s17, 0
    %p92 = por %p90, %p91
    %p93 = scmp.ne.s32.totalorder %s81, %s82
    %p94 = scmp.eq.s32.totalorder %s18, 3
    %p95 = por %p93, %p94
    %p97 = scmp.ne.s32.totalorder %s82, %s96
    %p98 = scmp.eq.s32.totalorder %s18, 0
    %p99 = por %p97, %p98
    %s101 = sadd.s32 %s100, 1
    %p104 = scmp.eq.s32.totalorder %s12, 3
    %p105 = scmp.ne.s32.totalorder %s100, %s102
    %p106 = scmp.eq.s32.totalorder %s12, 0
    %p107 = por %p105, %p106
    %p108 = scmp.ne.s32.totalorder %s100, %s102
    %p109 = scmp.eq.s32.totalorder %s17, 3
    %p110 = por %p108, %p109
    %p111 = scmp.ne.s32.totalorder %s102, %s103
    %p112 = scmp.eq.s32.totalorder %s17, 0
    %p113 = por %p111, %p112
    %p114 = scmp.ne.s32.totalorder %s102, %s103
    %p115 = scmp.eq.s32.totalorder %s18, 3
    %p116 = por %p114, %p115
    %p118 = scmp.ne.s32.totalorder %s103, %s117
    %p119 = scmp.eq.s32.totalorder %s18, 0
    %p120 = por %p118, %p119
    %s121 = ssub.s32 %s19, %s31
    %s122 = ssub.s32 %s20, %s27
    %s123 = sor.u32 %s121, %s122
    %p124 = scmp.eq.s32.totalorder %s123, 0
    %s126 = sadd.s32 %s125, 1
    %s127 = scalar_select %p124, %s125, %s126
    %p130 = pneg %p124
    %p131 = scmp.eq.s32.totalorder %s12, 3
    %p132 = por %p130, %p131
    %p133 = scmp.ne.s32.totalorder %s125, %s128
    %p134 = scmp.eq.s32.totalorder %s12, 0
    %p135 = por %p133, %p134
    %p136 = scmp.ne.s32.totalorder %s125, %s128
    %p137 = scmp.eq.s32.totalorder %s17, 3
    %p138 = por %p136, %p137
    %p139 = scmp.ne.s32.totalorder %s128, %s129
    %p140 = scmp.eq.s32.totalorder %s17, 0
    %p141 = por %p139, %p140
    %p142 = scmp.ne.s32.totalorder %s128, %s129
    %p143 = scmp.eq.s32.totalorder %s18, 3
    %p144 = por %p142, %p143
    %p146 = scmp.ne.s32.totalorder %s129, %s145
    %p147 = scmp.eq.s32.totalorder %s18, 0
    %p148 = por %p146, %p147
    %s149 = ssub.s32 %s19, %s31
    %s150 = ssub.s32 %s20, %s27
    %s151 = sor.u32 %s149, %s150
    %p152 = scmp.eq.s32.totalorder %s151, 0
    %s154 = sadd.s32 %s153, 1
    %s155 = scalar_select %p152, %s153, %s154
    %p158 = pneg %p152
    %p159 = scmp.eq.s32.totalorder %s12, 3
    %p160 = por %p158, %p159
    %p161 = scmp.ne.s32.totalorder %s153, %s156
    %p162 = scmp.eq.s32.totalorder %s12, 0
    %p163 = por %p161, %p162
    %p164 = scmp.ne.s32.totalorder %s153, %s156
    %p165 = scmp.eq.s32.totalorder %s17, 3
    %p166 = por %p164, %p165
    %p167 = scmp.ne.s32.totalorder %s156, %s157
    %p168 = scmp.eq.s32.totalorder %s17, 0
    %p169 = por %p167, %p168
    %p170 = scmp.ne.s32.totalorder %s156, %s157
    %p171 = scmp.eq.s32.totalorder %s18, 3
    %p172 = por %p170, %p171
    %p174 = scmp.ne.s32.totalorder %s157, %s173
    %p175 = scmp.eq.s32.totalorder %s18, 0
    %p176 = por %p174, %p175
    %p177 = scmp.le.s32.totalorder 1, %s12
    %p178 = scmp.lt.s32.totalorder %s12, 5
    %p179 = pnand %p177, %p178
    %p180 = pneg %p179
    // Predicated region
    $region9: #{bottleneck_forward.5} parent=5 // pred_check
      _
    $region10: #{bottleneck_forward.5} parent=5 // pred_check_branch
      %182 = sbr.rel (%p179) target = $region12
    $region11: #{bottleneck_forward.5} parent=5 // pred_region
      %s183 = ssub.s32 %s12, 1
      // Predicated region
      $region13: #{bottleneck_forward.5} parent=11 // pred_check
        %p184 = pneg %p71
      $region14: #{bottleneck_forward.5} parent=11 // pred_check_branch
        %186 = sbr.rel (%p184) target = $region16
      $region15: #{bottleneck_forward.5} parent=11 // pred_region
        _
      $region16: #{bottleneck_forward.5} parent=11 // pred_fallthru
        _
      // Predicated region
      $region17: #{bottleneck_forward.5} parent=11 // pred_check
        %p187 = pneg %p92
      $region18: #{bottleneck_forward.5} parent=11 // pred_check_branch
        %189 = sbr.rel (%p187) target = $region20
      $region19: #{bottleneck_forward.5} parent=11 // pred_region
        _
      $region20: #{bottleneck_forward.5} parent=11 // pred_fallthru
        _
      // Predicated region
      $region21: #{bottleneck_forward.5} parent=11 // pred_check
        %p190 = pneg %p113
      $region22: #{bottleneck_forward.5} parent=11 // pred_check_branch
        %192 = sbr.rel (%p190) target = $region24
      $region23: #{bottleneck_forward.5} parent=11 // pred_region
        _
      $region24: #{bottleneck_forward.5} parent=11 // pred_fallthru
        _
    $region12: #{bottleneck_forward.5} parent=5 // pred_fallthru
      _
    %p193 = scmp.lt.s32.totalorder %s12, 4
    // Predicated region
    $region25: #{bottleneck_forward.5} parent=5 // pred_check
      %p194 = pneg %p193
    $region26: #{bottleneck_forward.5} parent=5 // pred_check_branch
      %196 = sbr.rel (%p194) target = $region28
    $region27: #{bottleneck_forward.5} parent=5 // pred_region
      // Predicated region
      $region29: #{bottleneck_forward.5} parent=27 // pred_check
        %p197 = pneg %p44
      $region30: #{bottleneck_forward.5} parent=27 // pred_check_branch
        %199 = sbr.rel (%p197) target = $region32
      $region31: #{bottleneck_forward.5} parent=27 // pred_region
        %p200 = scmp.lt.s32.totalorder %s19, 1
        %s201 = scalar_select %p200, %s19, 1
        %s202 = smul.addr %s201, 32
        %s203 = smul.addr %s202, 4
        %s204 = scalar_lea.vmem %s0, %s203
      $region32: #{bottleneck_forward.5} parent=27 // pred_fallthru
        _
    $region28: #{bottleneck_forward.5} parent=5 // pred_fallthru
      _
    %p205 = scmp.le.s32.totalorder 1, %s12
    %p206 = scmp.lt.s32.totalorder %s12, 5
    %p207 = pnand %p205, %p206
    %p208 = pneg %p207
    // Predicated region
    $region33: #{bottleneck_forward.5} parent=5 // pred_check
      _
    $region34: #{bottleneck_forward.5} parent=5 // pred_check_branch
      %210 = sbr.rel (%p207) target = $region36
    $region35: #{bottleneck_forward.5} parent=5 // pred_region
      %s211 = ssub.s32 %s12, 1
      %p212 = scmp.lt.s32.totalorder %s21, 1
      %s213 = scalar_select %p212, %s21, 1
      %s214 = smul.addr %s213, 32
      %s215 = smul.addr %s214, 4
      %s216 = scalar_lea.vmem %s0, %s215
      %p217 = pneg %p50
      %p218 = pneg %p47
      %p219 = pneg %p71
      %p220 = pneg %p68
      %p221 = pneg %p92
      %p222 = pneg %p89
      %p223 = pneg %p113
      %p224 = pneg %p110
      %p225 = pneg %p141
      %p226 = pneg %p138
      %s227 = smul.u32 8, %s22
      %p228 = scmp.lt.s32.totalorder %s21, 1
      %s229 = scalar_select %p228, %s21, 1
      %p230 = scmp.lt.s32.totalorder %s227, 15
      %s231 = scalar_select %p230, %s227, 15
      %s232 = smul.addr %s231, 2
      %s233 = smul.addr %s229, 32
      %s234 = sadd.s32 %s232, %s233
      %s235 = smul.addr %s234, 4
      %s236 = scalar_lea.vmem %s4, %s235
      %p237 = pneg %p169
      %p238 = pneg %p166
      %p239 = scmp.lt.s32.totalorder %s21, 1
      %s240 = scalar_select %p239, %s21, 1
      %p241 = scmp.lt.s32.totalorder %s22, 1
      %s242 = scalar_select %p241, %s22, 1
      %s243 = smul.addr %s240, 2
      %s244 = sadd.s32 %s242, %s243
      %s245 = smul.addr %s244, 2
      %s246 = scalar_lea.vmem %s5, %s245
      %p247 = scmp.lt.s32.totalorder %s21, 1
      %s248 = scalar_select %p247, %s21, 1
      %s249 = smul.addr %s248, 32
      %s250 = smul.addr %s249, 4
      %s251 = scalar_lea.vmem %s0, %s250
      %s252 = smul.u32 8, %s22
      %p253 = scmp.lt.s32.totalorder %s21, 1
      %s254 = scalar_select %p253, %s21, 1
      %p255 = scmp.lt.s32.totalorder %s252, 15
      %s256 = scalar_select %p255, %s252, 15
      %s257 = smul.addr %s256, 2
      %s258 = smul.addr %s254, 32
      %s259 = sadd.s32 %s257, %s258
      %s260 = smul.addr %s259, 4
      %s261 = scalar_lea.vmem %s4, %s260
      %s262 = smul.u32 8, %s22
      %p263 = scmp.lt.s32.totalorder %s21, 1
      %s264 = scalar_select %p263, %s21, 1
      %p265 = scmp.lt.s32.totalorder %s22, 1
      %s266 = scalar_select %p265, %s22, 1
      %s267 = smul.addr %s264, 2
      %s268 = sadd.s32 %s266, %s267
      %s269 = smul.addr %s268, 2
      %s270 = scalar_lea.vmem %s5, %s269
      %s272 = smul.u32 %s22, 8
      %v273 = vld [vmem:[%s1] sm:$0x1]
      %v274 = vld [vmem:[%s2] sm:$0x1]
      %vm275 = vcmask 1040384
      %vm276 = vsmask.f32 256
      %vm277 = vmand %vm275, %vm276
      %v278 = vld [vmem:[#allocation2] sm:$0x1]
      %v279 = vsel %vm277, 0, %v278
      %280 = vst [vmem:[#allocation2] sm:$0x1] %v279
      %v281 = vld [vmem:[#allocation2 + $0xc] sm:$0x1]
      %v282 = vsel %vm277, 0, %v281
      %283 = vst [vmem:[#allocation2 + $0xc] sm:$0x1] %v282
      %v284 = vld [vmem:[#allocation2 + $0x18] sm:$0x1]
      %v285 = vsel %vm277, 0, %v284
      %286 = vst [vmem:[#allocation2 + $0x18] sm:$0x1] %v285
      %v287 = vld [vmem:[#allocation2 + $0x24] sm:$0x1]
      %v288 = vsel %vm277, 0, %v287
      %289 = vst [vmem:[#allocation2 + $0x24] sm:$0x1] %v288
      %v290 = vld [vmem:[#allocation2 + $0x30] sm:$0x1]
      %v291 = vsel %vm277, 0, %v290
      %292 = vst [vmem:[#allocation2 + $0x30] sm:$0x1] %v291
      %v293 = vld [vmem:[#allocation2 + $0x3c] sm:$0x1]
      %v294 = vsel %vm277, 0, %v293
      %295 = vst [vmem:[#allocation2 + $0x3c] sm:$0x1] %v294
      %v296 = vld [vmem:[#allocation2 + $0x48] sm:$0x1]
      %v297 = vsel %vm277, 0, %v296
      %298 = vst [vmem:[#allocation2 + $0x48] sm:$0x1] %v297
      %v299 = vld [vmem:[#allocation2 + $0x54] sm:$0x1]
      %v300 = vsel %vm277, 0, %v299
      %301 = vst [vmem:[#allocation2 + $0x54] sm:$0x1] %v300
      %v302 = vld [vmem:[#allocation2 + $0x60] sm:$0x1]
      %v303 = vsel %vm277, 0, %v302
      %304 = vst [vmem:[#allocation2 + $0x60] sm:$0x1] %v303
      %v305 = vld [vmem:[#allocation2 + $0x6c] sm:$0x1]
      %v306 = vsel %vm277, 0, %v305
      %307 = vst [vmem:[#allocation2 + $0x6c] sm:$0x1] %v306
      %vm308 = vsmask.f32 7938
      %vm309 = vmand %vm275, %vm308
      %v310 = vld [vmem:[#allocation2 + $0x8] sm:$0x1]
      %v311 = vsel %vm309, 0, %v310
      %312 = vst [vmem:[#allocation2 + $0x8] sm:$0x1] %v311
      %v313 = vld [vmem:[#allocation2 + $0x14] sm:$0x1]
      %v314 = vsel %vm309, 0, %v313
      %315 = vst [vmem:[#allocation2 + $0x14] sm:$0x1] %v314
      %v316 = vld [vmem:[#allocation2 + $0x20] sm:$0x1]
      %v317 = vsel %vm309, 0, %v316
      %318 = vst [vmem:[#allocation2 + $0x20] sm:$0x1] %v317
      %v319 = vld [vmem:[#allocation2 + $0x2c] sm:$0x1]
      %v320 = vsel %vm309, 0, %v319
      %321 = vst [vmem:[#allocation2 + $0x2c] sm:$0x1] %v320
      %v322 = vld [vmem:[#allocation2 + $0x38] sm:$0x1]
      %v323 = vsel %vm309, 0, %v322
      %324 = vst [vmem:[#allocation2 + $0x38] sm:$0x1] %v323
      %v325 = vld [vmem:[#allocation2 + $0x44] sm:$0x1]
      %v326 = vsel %vm309, 0, %v325
      %327 = vst [vmem:[#allocation2 + $0x44] sm:$0x1] %v326
      %v328 = vld [vmem:[#allocation2 + $0x50] sm:$0x1]
      %v329 = vsel %vm309, 0, %v328
      %330 = vst [vmem:[#allocation2 + $0x50] sm:$0x1] %v329
      %v331 = vld [vmem:[#allocation2 + $0x5c] sm:$0x1]
      %v332 = vsel %vm309, 0, %v331
      %333 = vst [vmem:[#allocation2 + $0x5c] sm:$0x1] %v332
      %v334 = vld [vmem:[#allocation2 + $0x68] sm:$0x1]
      %v335 = vsel %vm309, 0, %v334
      %336 = vst [vmem:[#allocation2 + $0x68] sm:$0x1] %v335
      %v337 = vld [vmem:[#allocation2 + $0x74] sm:$0x1]
      %v338 = vsel %vm309, 0, %v337
      %339 = vst [vmem:[#allocation2 + $0x74] sm:$0x1] %v338
      %340 = vst [vmem:[#allocation2] sm:$0xf] 0
      %341 = vst [vmem:[#allocation2 + $0x4] sm:$0xf] 0
      %342 = vst [vmem:[#allocation2 + $0x8] sm:$0x1] 0
      %s343 = scalar_lea.vmem [#allocation2], 108
      %344 = vst [vmem:[%s343] sm:$0xf] 0
      %345 = vst [vmem:[%s343 + $0x4] sm:$0xf] 0
      %346 = vst [vmem:[%s343 + $0x8] sm:$0x1] 0
      %s347 = smul.u32 %s272, 2
      %s348 = smul.addr %s347, 4
      %s349 = scalar_lea.vmem %s251, %s348
      %v350 = vld [vmem:[%s349] sm:$0xf]
      %v351 = vld [vmem:[%s349 + $0x4] sm:$0xf]
      %v352 = vld [vmem:[%s349 + $0x8] sm:$0xf]
      %v353 = vld [vmem:[%s349 + $0xc] sm:$0xf]
      %v354 = vld [vmem:[%s349 + $0x10] sm:$0xf]
      %v355 = vld [vmem:[%s349 + $0x14] sm:$0xf]
      %v356 = vld [vmem:[%s349 + $0x18] sm:$0xf]
      %v357 = vld [vmem:[%s349 + $0x1c] sm:$0xf]
      %v358 = vld [vmem:[%s349 + $0x20] sm:$0xf]
      %v359 = vld [vmem:[%s349 + $0x24] sm:$0xf]
      %v360 = vld [vmem:[%s349 + $0x28] sm:$0xf]
      %v361 = vld [vmem:[%s349 + $0x2c] sm:$0xf]
      %v362 = vld [vmem:[%s349 + $0x30] sm:$0xf]
      %v363 = vld [vmem:[%s349 + $0x34] sm:$0xf]
      %v364 = vld [vmem:[%s349 + $0x38] sm:$0xf]
      %v365 = vld [vmem:[%s349 + $0x3c] sm:$0xf]
      %v366 = vunpack.c.l.bf16 %v350
      %v367 = vunpack.c.l.bf16 %v351
      %v368 = vunpack.c.l.bf16 %v352
      %v369 = vunpack.c.l.bf16 %v353
      %v370 = vunpack.c.l.bf16 %v354
      %v371 = vunpack.c.l.bf16 %v355
      %v372 = vunpack.c.l.bf16 %v356
      %v373 = vunpack.c.l.bf16 %v357
      %v374 = vunpack.c.l.bf16 %v358
      %v375 = vunpack.c.l.bf16 %v359
      %v376 = vunpack.c.l.bf16 %v360
      %v377 = vunpack.c.l.bf16 %v361
      %v378 = vunpack.c.l.bf16 %v362
      %v379 = vunpack.c.l.bf16 %v363
      %v380 = vunpack.c.l.bf16 %v364
      %v381 = vunpack.c.l.bf16 %v365
      %v383 = vperm.slane %v273, 0
      %v385 = vmul.f32 %v366, %v383
      %v386 = vmul.f32 %v367, %v383
      %v387 = vmul.f32 %v368, %v383
      %v388 = vmul.f32 %v369, %v383
      %v389 = vmul.f32 %v370, %v383
      %v390 = vmul.f32 %v371, %v383
      %v391 = vmul.f32 %v372, %v383
      %v392 = vmul.f32 %v373, %v383
      %v393 = vmul.f32 %v374, %v383
      %v394 = vmul.f32 %v375, %v383
      %v395 = vmul.f32 %v376, %v383
      %v396 = vmul.f32 %v377, %v383
      %v397 = vmul.f32 %v378, %v383
      %v398 = vmul.f32 %v379, %v383
      %v399 = vmul.f32 %v380, %v383
      %v400 = vmul.f32 %v381, %v383
      %v402 = vperm.slane %v274, 0
      %v404 = vadd.f32 %v385, %v402
      %v405 = vadd.f32 %v386, %v402
      %v406 = vadd.f32 %v387, %v402
      %v407 = vadd.f32 %v388, %v402
      %v408 = vadd.f32 %v389, %v402
      %v409 = vadd.f32 %v390, %v402
      %v410 = vadd.f32 %v391, %v402
      %v411 = vadd.f32 %v392, %v402
      %v412 = vadd.f32 %v393, %v402
      %v413 = vadd.f32 %v394, %v402
      %v414 = vadd.f32 %v395, %v402
      %v415 = vadd.f32 %v396, %v402
      %v416 = vadd.f32 %v397, %v402
      %v417 = vadd.f32 %v398, %v402
      %v418 = vadd.f32 %v399, %v402
      %v419 = vadd.f32 %v400, %v402
      %v420 = vmax.f32 %v404, 0.0
      %v421 = vmax.f32 %v405, 0.0
      %v422 = vmax.f32 %v406, 0.0
      %v423 = vmax.f32 %v407, 0.0
      %v424 = vmax.f32 %v408, 0.0
      %v425 = vmax.f32 %v409, 0.0
      %v426 = vmax.f32 %v410, 0.0
      %v427 = vmax.f32 %v411, 0.0
      %v428 = vmax.f32 %v412, 0.0
      %v429 = vmax.f32 %v413, 0.0
      %v430 = vmax.f32 %v414, 0.0
      %v431 = vmax.f32 %v415, 0.0
      %v432 = vmax.f32 %v416, 0.0
      %v433 = vmax.f32 %v417, 0.0
      %v434 = vmax.f32 %v418, 0.0
      %v435 = vmax.f32 %v419, 0.0
      %v436 = vpack.c.bf16 %v420, %v420
      %v437 = vpack.c.bf16 %v421, %v421
      %v438 = vpack.c.bf16 %v422, %v422
      %v439 = vpack.c.bf16 %v423, %v423
      %v440 = vpack.c.bf16 %v424, %v424
      %v441 = vpack.c.bf16 %v425, %v425
      %v442 = vpack.c.bf16 %v426, %v426
      %v443 = vpack.c.bf16 %v427, %v427
      %v444 = vpack.c.bf16 %v428, %v428
      %v445 = vpack.c.bf16 %v429, %v429
      %v446 = vpack.c.bf16 %v430, %v430
      %v447 = vpack.c.bf16 %v431, %v431
      %v448 = vpack.c.bf16 %v432, %v432
      %v449 = vpack.c.bf16 %v433, %v433
      %v450 = vpack.c.bf16 %v434, %v434
      %v451 = vpack.c.bf16 %v435, %v435
      %vm452 = vsmask.f32 4368
      %vm453 = vmor %vm276, %vm452
      %v455 = vshrl.u32 %v436, 16
      %v457 = vrot.slane %v455, 7
      %v458 = vshll.u32 %v436, 16
      %v460 = vor.u32 %v457, %v458
      %v461 = vrot.slane %v457, 4
      %v463 = vshrl.u32 %v437, 16
      %v465 = vrot.slane %v463, 7
      %v466 = vshll.u32 %v437, 16
      %v468 = vor.u32 %v465, %v466
      %v469 = vsel %vm453, %v461, %v468
      %v470 = vrot.slane %v465, 4
      %v472 = vshrl.u32 %v438, 16
      %v474 = vrot.slane %v472, 7
      %v475 = vshll.u32 %v438, 16
      %v477 = vor.u32 %v474, %v475
      %v478 = vrot.slane %v474, 4
      %v480 = vshrl.u32 %v439, 16
      %v482 = vrot.slane %v480, 7
      %v483 = vshll.u32 %v439, 16
      %v485 = vor.u32 %v482, %v483
      %v486 = vsel %vm453, %v478, %v485
      %v487 = vrot.slane %v482, 4
      %v489 = vshrl.u32 %v440, 16
      %v491 = vrot.slane %v489, 7
      %v492 = vshll.u32 %v440, 16
      %v494 = vor.u32 %v491, %v492
      %v495 = vrot.slane %v491, 4
      %v497 = vshrl.u32 %v441, 16
      %v499 = vrot.slane %v497, 7
      %v500 = vshll.u32 %v441, 16
      %v502 = vor.u32 %v499, %v500
      %v503 = vsel %vm453, %v495, %v502
      %v504 = vrot.slane %v499, 4
      %v506 = vshrl.u32 %v442, 16
      %v508 = vrot.slane %v506, 7
      %v509 = vshll.u32 %v442, 16
      %v511 = vor.u32 %v508, %v509
      %v512 = vrot.slane %v508, 4
      %v514 = vshrl.u32 %v443, 16
      %v516 = vrot.slane %v514, 7
      %v517 = vshll.u32 %v443, 16
      %v519 = vor.u32 %v516, %v517
      %v520 = vsel %vm453, %v512, %v519
      %v521 = vrot.slane %v516, 4
      %v523 = vshrl.u32 %v444, 16
      %v525 = vrot.slane %v523, 7
      %v526 = vshll.u32 %v444, 16
      %v528 = vor.u32 %v525, %v526
      %v529 = vrot.slane %v525, 4
      %v531 = vshrl.u32 %v445, 16
      %v533 = vrot.slane %v531, 7
      %v534 = vshll.u32 %v445, 16
      %v536 = vor.u32 %v533, %v534
      %v537 = vsel %vm453, %v529, %v536
      %v538 = vrot.slane %v533, 4
      %v540 = vshrl.u32 %v446, 16
      %v542 = vrot.slane %v540, 7
      %v543 = vshll.u32 %v446, 16
      %v545 = vor.u32 %v542, %v543
      %v546 = vrot.slane %v542, 4
      %v548 = vshrl.u32 %v447, 16
      %v550 = vrot.slane %v548, 7
      %v551 = vshll.u32 %v447, 16
      %v553 = vor.u32 %v550, %v551
      %v554 = vsel %vm453, %v546, %v553
      %v555 = vrot.slane %v550, 4
      %v557 = vshrl.u32 %v448, 16
      %v559 = vrot.slane %v557, 7
      %v560 = vshll.u32 %v448, 16
      %v562 = vor.u32 %v559, %v560
      %v563 = vrot.slane %v559, 4
      %v565 = vshrl.u32 %v449, 16
      %v567 = vrot.slane %v565, 7
      %v568 = vshll.u32 %v449, 16
      %v570 = vor.u32 %v567, %v568
      %v571 = vsel %vm453, %v563, %v570
      %v572 = vrot.slane %v567, 4
      %v574 = vshrl.u32 %v450, 16
      %v576 = vrot.slane %v574, 7
      %v577 = vshll.u32 %v450, 16
      %v579 = vor.u32 %v576, %v577
      %v580 = vrot.slane %v576, 4
      %v582 = vshrl.u32 %v451, 16
      %v584 = vrot.slane %v582, 7
      %v585 = vshll.u32 %v451, 16
      %v587 = vor.u32 %v584, %v585
      %v588 = vsel %vm453, %v580, %v587
      %v589 = vrot.slane %v584, 4
      %s614 = scalar_lea.vmem [#allocation2], 12
      %vm615 = vcmask 1043456
      %vm616 = vmand %vm615, %vm308
      %v617 = vld [vmem:[%s614] sm:$0xf]
      %v618 = vsel %vm616, %v460, %v617
      %619 = vst [vmem:[%s614] sm:$0xf] %v618
      %620 = vst [vmem:[%s614 + $0x4] sm:$0xf] %v469
      %v621 = vld [vmem:[%s614 + $0x8] sm:$0x1]
      %v622 = vsel %vm277, %v470, %v621
      %623 = vst [vmem:[%s614 + $0x8] sm:$0x1] %v622
      %v624 = vld [vmem:[%s614 + $0xc] sm:$0xf]
      %v625 = vsel %vm616, %v477, %v624
      %626 = vst [vmem:[%s614 + $0xc] sm:$0xf] %v625
      %627 = vst [vmem:[%s614 + $0x10] sm:$0xf] %v486
      %v628 = vld [vmem:[%s614 + $0x14] sm:$0x1]
      %v629 = vsel %vm277, %v487, %v628
      %630 = vst [vmem:[%s614 + $0x14] sm:$0x1] %v629
      %v631 = vld [vmem:[%s614 + $0x18] sm:$0xf]
      %v632 = vsel %vm616, %v494, %v631
      %633 = vst [vmem:[%s614 + $0x18] sm:$0xf] %v632
      %634 = vst [vmem:[%s614 + $0x1c] sm:$0xf] %v503
      %v635 = vld [vmem:[%s614 + $0x20] sm:$0x1]
      %v636 = vsel %vm277, %v504, %v635
      %637 = vst [vmem:[%s614 + $0x20] sm:$0x1] %v636
      %v638 = vld [vmem:[%s614 + $0x24] sm:$0xf]
      %v639 = vsel %vm616, %v511, %v638
      %640 = vst [vmem:[%s614 + $0x24] sm:$0xf] %v639
      %641 = vst [vmem:[%s614 + $0x28] sm:$0xf] %v520
      %v642 = vld [vmem:[%s614 + $0x2c] sm:$0x1]
      %v643 = vsel %vm277, %v521, %v642
      %644 = vst [vmem:[%s614 + $0x2c] sm:$0x1] %v643
      %v645 = vld [vmem:[%s614 + $0x30] sm:$0xf]
      %v646 = vsel %vm616, %v528, %v645
      %647 = vst [vmem:[%s614 + $0x30] sm:$0xf] %v646
      %648 = vst [vmem:[%s614 + $0x34] sm:$0xf] %v537
      %v649 = vld [vmem:[%s614 + $0x38] sm:$0x1]
      %v650 = vsel %vm277, %v538, %v649
      %651 = vst [vmem:[%s614 + $0x38] sm:$0x1] %v650
      %v652 = vld [vmem:[%s614 + $0x3c] sm:$0xf]
      %v653 = vsel %vm616, %v545, %v652
      %654 = vst [vmem:[%s614 + $0x3c] sm:$0xf] %v653
      %655 = vst [vmem:[%s614 + $0x40] sm:$0xf] %v554
      %v656 = vld [vmem:[%s614 + $0x44] sm:$0x1]
      %v657 = vsel %vm277, %v555, %v656
      %658 = vst [vmem:[%s614 + $0x44] sm:$0x1] %v657
      %v659 = vld [vmem:[%s614 + $0x48] sm:$0xf]
      %v660 = vsel %vm616, %v562, %v659
      %661 = vst [vmem:[%s614 + $0x48] sm:$0xf] %v660
      %662 = vst [vmem:[%s614 + $0x4c] sm:$0xf] %v571
      %v663 = vld [vmem:[%s614 + $0x50] sm:$0x1]
      %v664 = vsel %vm277, %v572, %v663
      %665 = vst [vmem:[%s614 + $0x50] sm:$0x1] %v664
      %v666 = vld [vmem:[%s614 + $0x54] sm:$0xf]
      %v667 = vsel %vm616, %v579, %v666
      %668 = vst [vmem:[%s614 + $0x54] sm:$0xf] %v667
      %669 = vst [vmem:[%s614 + $0x58] sm:$0xf] %v588
      %v670 = vld [vmem:[%s614 + $0x5c] sm:$0x1]
      %v671 = vsel %vm277, %v589, %v670
      %672 = vst [vmem:[%s614 + $0x5c] sm:$0x1] %v671
      %p673 = scmp.gt.s32.totalorder %s22, 0
      // Predicated region
      $region37: #{bottleneck_forward.5} parent=35 // pred_check
        %p674 = pneg %p673
      $region38: #{bottleneck_forward.5} parent=35 // pred_check_branch
        %676 = sbr.rel (%p674) target = $region40
      $region39: #{bottleneck_forward.5} parent=35 // pred_region
        %s677 = ssub.s32 %s272, 1
        %s678 = smul.u32 %s677, 2
        %s679 = smul.addr %s678, 4
        %s680 = scalar_lea.vmem %s251, %s679
        %v681 = vld [vmem:[%s680] sm:$0xf]
        %v682 = vld [vmem:[%s680 + $0x4] sm:$0xf]
        %v683 = vunpack.c.l.bf16 %v681
        %v684 = vunpack.c.l.bf16 %v682
        %v685 = vmul.f32 %v683, %v383
        %v686 = vmul.f32 %v684, %v383
        %v687 = vadd.f32 %v685, %v402
        %v688 = vadd.f32 %v686, %v402
        %v689 = vmax.f32 %v687, 0.0
        %v690 = vmax.f32 %v688, 0.0
        %v691 = vpack.c.bf16 %v689, %v689
        %v692 = vpack.c.bf16 %v690, %v690
        %v694 = vshrl.u32 %v691, 16
        %v696 = vrot.slane %v694, 7
        %v697 = vshll.u32 %v691, 16
        %v699 = vor.u32 %v696, %v697
        %v700 = vrot.slane %v696, 4
        %v702 = vshrl.u32 %v692, 16
        %v704 = vrot.slane %v702, 7
        %v705 = vshll.u32 %v692, 16
        %v707 = vor.u32 %v704, %v705
        %v708 = vsel %vm453, %v700, %v707
        %v709 = vrot.slane %v704, 4
        %v713 = vld [vmem:[#allocation2] sm:$0xf]
        %v714 = vsel %vm616, %v699, %v713
        %715 = vst [vmem:[#allocation2] sm:$0xf] %v714
        %716 = vst [vmem:[#allocation2 + $0x4] sm:$0xf] %v708
        %v717 = vld [vmem:[#allocation2 + $0x8] sm:$0x1]
        %v718 = vsel %vm277, %v709, %v717
        %719 = vst [vmem:[#allocation2 + $0x8] sm:$0x1] %v718
      $region40: #{bottleneck_forward.5} parent=35 // pred_fallthru
        _
      %p720 = scmp.lt.s32.totalorder %s22, 1
      // Predicated region
      $region41: #{bottleneck_forward.5} parent=35 // pred_check
        %p721 = pneg %p720
      $region42: #{bottleneck_forward.5} parent=35 // pred_check_branch
        %723 = sbr.rel (%p721) target = $region44
      $region43: #{bottleneck_forward.5} parent=35 // pred_region
        %s724 = sadd.s32 %s272, 8
        %s725 = smul.u32 %s724, 2
        %s726 = smul.addr %s725, 4
        %s727 = scalar_lea.vmem %s251, %s726
        %v728 = vld [vmem:[%s727] sm:$0xf]
        %v729 = vld [vmem:[%s727 + $0x4] sm:$0xf]
        %v730 = vunpack.c.l.bf16 %v728
        %v731 = vunpack.c.l.bf16 %v729
        %v732 = vmul.f32 %v730, %v383
        %v733 = vmul.f32 %v731, %v383
        %v734 = vadd.f32 %v732, %v402
        %v735 = vadd.f32 %v733, %v402
        %v736 = vmax.f32 %v734, 0.0
        %v737 = vmax.f32 %v735, 0.0
        %v738 = vpack.c.bf16 %v736, %v736
        %v739 = vpack.c.bf16 %v737, %v737
        %v741 = vshrl.u32 %v738, 16
        %v743 = vrot.slane %v741, 7
        %v744 = vshll.u32 %v738, 16
        %v746 = vor.u32 %v743, %v744
        %v747 = vrot.slane %v743, 4
        %v749 = vshrl.u32 %v739, 16
        %v751 = vrot.slane %v749, 7
        %v752 = vshll.u32 %v739, 16
        %v754 = vor.u32 %v751, %v752
        %v755 = vsel %vm453, %v747, %v754
        %v756 = vrot.slane %v751, 4
        %v760 = vld [vmem:[%s343] sm:$0xf]
        %v761 = vsel %vm616, %v746, %v760
        %762 = vst [vmem:[%s343] sm:$0xf] %v761
        %763 = vst [vmem:[%s343 + $0x4] sm:$0xf] %v755
        %v764 = vld [vmem:[%s343 + $0x8] sm:$0x1]
        %v765 = vsel %vm277, %v756, %v764
        %766 = vst [vmem:[%s343 + $0x8] sm:$0x1] %v765
      $region44: #{bottleneck_forward.5} parent=35 // pred_fallthru
        _
      %v767 = vld [vmem:[#allocation2] sm:$0xf]
      %v768 = vld [vmem:[#allocation2 + $0x4] sm:$0xf]
      %v769 = vld [vmem:[#allocation2 + $0xc] sm:$0xf]
      %v770 = vld [vmem:[#allocation2 + $0x10] sm:$0xf]
      %v771 = vld [vmem:[#allocation2 + $0x18] sm:$0xf]
      %v772 = vld [vmem:[#allocation2 + $0x1c] sm:$0xf]
      %v773 = vld [vmem:[#allocation2 + $0x24] sm:$0xf]
      %v774 = vld [vmem:[#allocation2 + $0x28] sm:$0xf]
      %v775 = vld [vmem:[#allocation2 + $0x30] sm:$0xf]
      %v776 = vld [vmem:[#allocation2 + $0x34] sm:$0xf]
      %v777 = vld [vmem:[#allocation2 + $0x3c] sm:$0xf]
      %v778 = vld [vmem:[#allocation2 + $0x40] sm:$0xf]
      %v779 = vld [vmem:[#allocation2 + $0x48] sm:$0xf]
      %v780 = vld [vmem:[#allocation2 + $0x4c] sm:$0xf]
      %v781 = vld [vmem:[#allocation2 + $0x54] sm:$0xf]
      %v782 = vld [vmem:[#allocation2 + $0x58] sm:$0xf]
      %v783 = vld [vmem:[#allocation2 + $0x8] sm:$0x1]
      %v784 = vld [vmem:[#allocation2 + $0x14] sm:$0x1]
      %v785 = vld [vmem:[#allocation2 + $0x20] sm:$0x1]
      %v786 = vld [vmem:[#allocation2 + $0x2c] sm:$0x1]
      %v787 = vld [vmem:[#allocation2 + $0x38] sm:$0x1]
      %v788 = vld [vmem:[#allocation2 + $0x44] sm:$0x1]
      %v789 = vld [vmem:[#allocation2 + $0x50] sm:$0x1]
      %v790 = vld [vmem:[#allocation2 + $0x5c] sm:$0x1]
      %vm791 = vsmask.f32 3328
      %vm792 = vsmask.f32 7440
      %vm793 = vmor %vm791, %vm792
      %v795 = vshrl.u32 %v767, 16
      %v797 = vrot.slane %v795, 4
      %v798 = vshll.u32 %v767, 16
      %v800 = vrot.slane %v798, 5
      %v801 = vor.u32 %v797, %v800
      %v802 = vrot.slane %v801, 4
      %v804 = vshll.u32 %v768, 16
      %v806 = vrot.slane %v804, 5
      %v807 = vsel %vm793, %v802, %v806
      %v808 = vshrl.u32 %v768, 16
      %v810 = vrot.slane %v808, 4
      %v811 = vor.u32 %v810, %v806
      %v812 = vrot.slane %v811, 4
      %v814 = vshll.u32 %v783, 16
      %v816 = vrot.slane %v814, 5
      %v817 = vsel %vm793, %v812, %v816
      %v819 = vshrl.u32 %v769, 16
      %v821 = vrot.slane %v819, 4
      %v822 = vshll.u32 %v769, 16
      %v824 = vrot.slane %v822, 5
      %v825 = vor.u32 %v821, %v824
      %v826 = vrot.slane %v825, 4
      %v828 = vshll.u32 %v770, 16
      %v830 = vrot.slane %v828, 5
      %v831 = vsel %vm793, %v826, %v830
      %v832 = vshrl.u32 %v770, 16
      %v834 = vrot.slane %v832, 4
      %v835 = vor.u32 %v834, %v830
      %v836 = vrot.slane %v835, 4
      %v838 = vshll.u32 %v784, 16
      %v840 = vrot.slane %v838, 5
      %v841 = vsel %vm793, %v836, %v840
      %v843 = vshrl.u32 %v771, 16
      %v845 = vrot.slane %v843, 4
      %v846 = vshll.u32 %v771, 16
      %v848 = vrot.slane %v846, 5
      %v849 = vor.u32 %v845, %v848
      %v850 = vrot.slane %v849, 4
      %v852 = vshll.u32 %v772, 16
      %v854 = vrot.slane %v852, 5
      %v855 = vsel %vm793, %v850, %v854
      %v856 = vshrl.u32 %v772, 16
      %v858 = vrot.slane %v856, 4
      %v859 = vor.u32 %v858, %v854
      %v860 = vrot.slane %v859, 4
      %v862 = vshll.u32 %v785, 16
      %v864 = vrot.slane %v862, 5
      %v865 = vsel %vm793, %v860, %v864
      %v867 = vshrl.u32 %v773, 16
      %v869 = vrot.slane %v867, 4
      %v870 = vshll.u32 %v773, 16
      %v872 = vrot.slane %v870, 5
      %v873 = vor.u32 %v869, %v872
      %v874 = vrot.slane %v873, 4
      %v876 = vshll.u32 %v774, 16
      %v878 = vrot.slane %v876, 5
      %v879 = vsel %vm793, %v874, %v878
      %v880 = vshrl.u32 %v774, 16
      %v882 = vrot.slane %v880, 4
      %v883 = vor.u32 %v882, %v878
      %v884 = vrot.slane %v883, 4
      %v886 = vshll.u32 %v786, 16
      %v888 = vrot.slane %v886, 5
      %v889 = vsel %vm793, %v884, %v888
      %v891 = vshrl.u32 %v775, 16
      %v893 = vrot.slane %v891, 4
      %v894 = vshll.u32 %v775, 16
      %v896 = vrot.slane %v894, 5
      %v897 = vor.u32 %v893, %v896
      %v898 = vrot.slane %v897, 4
      %v900 = vshll.u32 %v776, 16
      %v902 = vrot.slane %v900, 5
      %v903 = vsel %vm793, %v898, %v902
      %v904 = vshrl.u32 %v776, 16
      %v906 = vrot.slane %v904, 4
      %v907 = vor.u32 %v906, %v902
      %v908 = vrot.slane %v907, 4
      %v910 = vshll.u32 %v787, 16
      %v912 = vrot.slane %v910, 5
      %v913 = vsel %vm793, %v908, %v912
      %v915 = vshrl.u32 %v777, 16
      %v917 = vrot.slane %v915, 4
      %v918 = vshll.u32 %v777, 16
      %v920 = vrot.slane %v918, 5
      %v921 = vor.u32 %v917, %v920
      %v922 = vrot.slane %v921, 4
      %v924 = vshll.u32 %v778, 16
      %v926 = vrot.slane %v924, 5
      %v927 = vsel %vm793, %v922, %v926
      %v928 = vshrl.u32 %v778, 16
      %v930 = vrot.slane %v928, 4
      %v931 = vor.u32 %v930, %v926
      %v932 = vrot.slane %v931, 4
      %v934 = vshll.u32 %v788, 16
      %v936 = vrot.slane %v934, 5
      %v937 = vsel %vm793, %v932, %v936
      %v939 = vshrl.u32 %v779, 16
      %v941 = vrot.slane %v939, 4
      %v942 = vshll.u32 %v779, 16
      %v944 = vrot.slane %v942, 5
      %v945 = vor.u32 %v941, %v944
      %v946 = vrot.slane %v945, 4
      %v948 = vshll.u32 %v780, 16
      %v950 = vrot.slane %v948, 5
      %v951 = vsel %vm793, %v946, %v950
      %v952 = vshrl.u32 %v780, 16
      %v954 = vrot.slane %v952, 4
      %v955 = vor.u32 %v954, %v950
      %v956 = vrot.slane %v955, 4
      %v958 = vshll.u32 %v789, 16
      %v960 = vrot.slane %v958, 5
      %v961 = vsel %vm793, %v956, %v960
      %v963 = vshrl.u32 %v781, 16
      %v965 = vrot.slane %v963, 4
      %v966 = vshll.u32 %v781, 16
      %v968 = vrot.slane %v966, 5
      %v969 = vor.u32 %v965, %v968
      %v970 = vrot.slane %v969, 4
      %v972 = vshll.u32 %v782, 16
      %v974 = vrot.slane %v972, 5
      %v975 = vsel %vm793, %v970, %v974
      %v976 = vshrl.u32 %v782, 16
      %v978 = vrot.slane %v976, 4
      %v979 = vor.u32 %v978, %v974
      %v980 = vrot.slane %v979, 4
      %v982 = vshll.u32 %v790, 16
      %v984 = vrot.slane %v982, 5
      %v985 = vsel %vm793, %v980, %v984
      %v1002 = vunpack.c.l.b16 %v767
      %v1003 = vunpack.c.l.b16 %v768
      %v1004 = vunpack.c.l.b16 %v769
      %v1005 = vunpack.c.l.b16 %v770
      %v1006 = vunpack.c.l.b16 %v771
      %v1007 = vunpack.c.l.b16 %v772
      %v1008 = vunpack.c.l.b16 %v773
      %v1009 = vunpack.c.l.b16 %v774
      %v1010 = vunpack.c.l.b16 %v775
      %v1011 = vunpack.c.l.b16 %v776
      %v1012 = vunpack.c.l.b16 %v777
      %v1013 = vunpack.c.l.b16 %v778
      %v1014 = vunpack.c.l.b16 %v779
      %v1015 = vunpack.c.l.b16 %v780
      %v1016 = vunpack.c.l.b16 %v781
      %v1017 = vunpack.c.l.b16 %v782
      %v1018 = vpack.c.b16 %v1003, %v1002
      %v1019 = vpack.c.b16 %v1005, %v1004
      %v1020 = vpack.c.b16 %v1007, %v1006
      %v1021 = vpack.c.b16 %v1009, %v1008
      %v1022 = vpack.c.b16 %v1011, %v1010
      %v1023 = vpack.c.b16 %v1013, %v1012
      %v1024 = vpack.c.b16 %v1015, %v1014
      %v1025 = vpack.c.b16 %v1017, %v1016
      %v1034 = vunpack.c.l.b16 %v807
      %v1035 = vunpack.c.l.b16 %v817
      %v1036 = vunpack.c.l.b16 %v831
      %v1037 = vunpack.c.l.b16 %v841
      %v1038 = vunpack.c.l.b16 %v855
      %v1039 = vunpack.c.l.b16 %v865
      %v1040 = vunpack.c.l.b16 %v879
      %v1041 = vunpack.c.l.b16 %v889
      %v1042 = vunpack.c.l.b16 %v903
      %v1043 = vunpack.c.l.b16 %v913
      %v1044 = vunpack.c.l.b16 %v927
      %v1045 = vunpack.c.l.b16 %v937
      %v1046 = vunpack.c.l.b16 %v951
      %v1047 = vunpack.c.l.b16 %v961
      %v1048 = vunpack.c.l.b16 %v975
      %v1049 = vunpack.c.l.b16 %v985
      %v1050 = vpack.c.b16 %v1035, %v1034
      %v1051 = vpack.c.b16 %v1037, %v1036
      %v1052 = vpack.c.b16 %v1039, %v1038
      %v1053 = vpack.c.b16 %v1041, %v1040
      %v1054 = vpack.c.b16 %v1043, %v1042
      %v1055 = vpack.c.b16 %v1045, %v1044
      %v1056 = vpack.c.b16 %v1047, %v1046
      %v1057 = vpack.c.b16 %v1049, %v1048
      %v1066 = vld [vmem:[%s3] sm:$0xf]
      %v1067 = vld [vmem:[%s3 + $0x4] sm:$0xf]
      %v1068 = vld [vmem:[%s3 + $0x8] sm:$0xf]
      %v1069 = vld [vmem:[%s3 + $0xc] sm:$0xf]
      %v1070 = vld [vmem:[%s3 + $0x10] sm:$0xf]
      %v1071 = vld [vmem:[%s3 + $0x14] sm:$0xf]
      %v1072 = vld [vmem:[%s3 + $0x18] sm:$0xf]
      %v1073 = vld [vmem:[%s3 + $0x1c] sm:$0xf]
      %v1074 = vld [vmem:[%s3 + $0x20] sm:$0xf]
      %v1075 = vld [vmem:[%s3 + $0x24] sm:$0xf]
      %v1076 = vld [vmem:[%s3 + $0x28] sm:$0xf]
      %v1077 = vld [vmem:[%s3 + $0x2c] sm:$0xf]
      %v1078 = vld [vmem:[%s3 + $0x30] sm:$0xf]
      %v1079 = vld [vmem:[%s3 + $0x34] sm:$0xf]
      %v1080 = vld [vmem:[%s3 + $0x38] sm:$0xf]
      %v1081 = vld [vmem:[%s3 + $0x3c] sm:$0xf]
      %v1082 = vld [vmem:[%s3 + $0x40] sm:$0xf]
      %v1083 = vld [vmem:[%s3 + $0x44] sm:$0xf]
      %v1084 = vld [vmem:[%s3 + $0x48] sm:$0xf]
      %v1085 = vld [vmem:[%s3 + $0x4c] sm:$0xf]
      %v1086 = vld [vmem:[%s3 + $0x50] sm:$0xf]
      %v1087 = vld [vmem:[%s3 + $0x54] sm:$0xf]
      %v1088 = vld [vmem:[%s3 + $0x58] sm:$0xf]
      %v1089 = vld [vmem:[%s3 + $0x5c] sm:$0xf]
      %v1090 = vld [vmem:[%s3 + $0x60] sm:$0xf]
      %v1091 = vld [vmem:[%s3 + $0x64] sm:$0xf]
      %v1092 = vld [vmem:[%s3 + $0x68] sm:$0xf]
      %v1093 = vld [vmem:[%s3 + $0x6c] sm:$0xf]
      %v1094 = vld [vmem:[%s3 + $0x70] sm:$0xf]
      %v1095 = vld [vmem:[%s3 + $0x74] sm:$0xf]
      %v1096 = vld [vmem:[%s3 + $0x78] sm:$0xf]
      %v1097 = vld [vmem:[%s3 + $0x7c] sm:$0xf]
      %v1098 = vld [vmem:[#allocation2] sm:$0xe]
      %v1099 = vld [vmem:[#allocation2 + $0xc] sm:$0xe]
      %v1100 = vld [vmem:[#allocation2 + $0x18] sm:$0xe]
      %v1101 = vld [vmem:[#allocation2 + $0x24] sm:$0xe]
      %v1102 = vld [vmem:[#allocation2 + $0x30] sm:$0xe]
      %v1103 = vld [vmem:[#allocation2 + $0x3c] sm:$0xe]
      %v1104 = vld [vmem:[#allocation2 + $0x48] sm:$0xe]
      %v1105 = vld [vmem:[#allocation2 + $0x54] sm:$0xe]
      %vm1122 = vcmask 1042432
      %vm1123 = vcmask 1046532
      %vm1124 = vmor %vm1122, %vm1123
      %v1125 = vrot.slane %v1098, 5
      %v1126 = vrot.slane %v1125, 4
      %v1127 = vrot.slane %v768, 5
      %v1128 = vsel %vm1124, %v1126, %v1127
      %v1129 = vrot.slane %v1127, 4
      %v1130 = vrot.slane %v783, 5
      %v1131 = vsel %vm1124, %v1129, %v1130
      %v1132 = vrot.slane %v1099, 5
      %v1133 = vrot.slane %v1132, 4
      %v1134 = vrot.slane %v770, 5
      %v1135 = vsel %vm1124, %v1133, %v1134
      %v1136 = vrot.slane %v1134, 4
      %v1137 = vrot.slane %v784, 5
      %v1138 = vsel %vm1124, %v1136, %v1137
      %v1139 = vrot.slane %v1100, 5
      %v1140 = vrot.slane %v1139, 4
      %v1141 = vrot.slane %v772, 5
      %v1142 = vsel %vm1124, %v1140, %v1141
      %v1143 = vrot.slane %v1141, 4
      %v1144 = vrot.slane %v785, 5
      %v1145 = vsel %vm1124, %v1143, %v1144
      %v1146 = vrot.slane %v1101, 5
      %v1147 = vrot.slane %v1146, 4
      %v1148 = vrot.slane %v774, 5
      %v1149 = vsel %vm1124, %v1147, %v1148
      %v1150 = vrot.slane %v1148, 4
      %v1151 = vrot.slane %v786, 5
      %v1152 = vsel %vm1124, %v1150, %v1151
      %v1153 = vrot.slane %v1102, 5
      %v1154 = vrot.slane %v1153, 4
      %v1155 = vrot.slane %v776, 5
      %v1156 = vsel %vm1124, %v1154, %v1155
      %v1157 = vrot.slane %v1155, 4
      %v1158 = vrot.slane %v787, 5
      %v1159 = vsel %vm1124, %v1157, %v1158
      %v1160 = vrot.slane %v1103, 5
      %v1161 = vrot.slane %v1160, 4
      %v1162 = vrot.slane %v778, 5
      %v1163 = vsel %vm1124, %v1161, %v1162
      %v1164 = vrot.slane %v1162, 4
      %v1165 = vrot.slane %v788, 5
      %v1166 = vsel %vm1124, %v1164, %v1165
      %v1167 = vrot.slane %v1104, 5
      %v1168 = vrot.slane %v1167, 4
      %v1169 = vrot.slane %v780, 5
      %v1170 = vsel %vm1124, %v1168, %v1169
      %v1171 = vrot.slane %v1169, 4
      %v1172 = vrot.slane %v789, 5
      %v1173 = vsel %vm1124, %v1171, %v1172
      %v1174 = vrot.slane %v1105, 5
      %v1175 = vrot.slane %v1174, 4
      %v1176 = vrot.slane %v782, 5
      %v1177 = vsel %vm1124, %v1175, %v1176
      %v1178 = vrot.slane %v1176, 4
      %v1179 = vrot.slane %v790, 5
      %v1180 = vsel %vm1124, %v1178, %v1179
      %v1181 = vld [vmem:[%s614] sm:$0xf]
      %v1182 = vld [vmem:[%s614 + $0x4] sm:$0xf]
      %v1183 = vld [vmem:[%s614 + $0xc] sm:$0xf]
      %v1184 = vld [vmem:[%s614 + $0x10] sm:$0xf]
      %v1185 = vld [vmem:[%s614 + $0x18] sm:$0xf]
      %v1186 = vld [vmem:[%s614 + $0x1c] sm:$0xf]
      %v1187 = vld [vmem:[%s614 + $0x24] sm:$0xf]
      %v1188 = vld [vmem:[%s614 + $0x28] sm:$0xf]
      %v1189 = vld [vmem:[%s614 + $0x30] sm:$0xf]
      %v1190 = vld [vmem:[%s614 + $0x34] sm:$0xf]
      %v1191 = vld [vmem:[%s614 + $0x3c] sm:$0xf]
      %v1192 = vld [vmem:[%s614 + $0x40] sm:$0xf]
      %v1193 = vld [vmem:[%s614 + $0x48] sm:$0xf]
      %v1194 = vld [vmem:[%s614 + $0x4c] sm:$0xf]
      %v1195 = vld [vmem:[%s614 + $0x54] sm:$0xf]
      %v1196 = vld [vmem:[%s614 + $0x58] sm:$0xf]
      %v1197 = vunpack.c.l.b16 %v1128
      %v1198 = vunpack.c.l.b16 %v1131
      %v1199 = vunpack.c.l.b16 %v1135
      %v1200 = vunpack.c.l.b16 %v1138
      %v1201 = vunpack.c.l.b16 %v1142
      %v1202 = vunpack.c.l.b16 %v1145
      %v1203 = vunpack.c.l.b16 %v1149
      %v1204 = vunpack.c.l.b16 %v1152
      %v1205 = vunpack.c.l.b16 %v1156
      %v1206 = vunpack.c.l.b16 %v1159
      %v1207 = vunpack.c.l.b16 %v1163
      %v1208 = vunpack.c.l.b16 %v1166
      %v1209 = vunpack.c.l.b16 %v1170
      %v1210 = vunpack.c.l.b16 %v1173
      %v1211 = vunpack.c.l.b16 %v1177
      %v1212 = vunpack.c.l.b16 %v1180
      %v1213 = vpack.c.b16 %v1198, %v1197
      %v1214 = vpack.c.b16 %v1200, %v1199
      %v1215 = vpack.c.b16 %v1202, %v1201
      %v1216 = vpack.c.b16 %v1204, %v1203
      %v1217 = vpack.c.b16 %v1206, %v1205
      %v1218 = vpack.c.b16 %v1208, %v1207
      %v1219 = vpack.c.b16 %v1210, %v1209
      %v1220 = vpack.c.b16 %v1212, %v1211
      %v1245 = vunpack.c.l.b16 %v1181
      %v1246 = vunpack.c.l.b16 %v1182
      %v1247 = vunpack.c.l.b16 %v1183
      %v1248 = vunpack.c.l.b16 %v1184
      %v1249 = vunpack.c.l.b16 %v1185
      %v1250 = vunpack.c.l.b16 %v1186
      %v1251 = vunpack.c.l.b16 %v1187
      %v1252 = vunpack.c.l.b16 %v1188
      %v1253 = vunpack.c.l.b16 %v1189
      %v1254 = vunpack.c.l.b16 %v1190
      %v1255 = vunpack.c.l.b16 %v1191
      %v1256 = vunpack.c.l.b16 %v1192
      %v1257 = vunpack.c.l.b16 %v1193
      %v1258 = vunpack.c.l.b16 %v1194
      %v1259 = vunpack.c.l.b16 %v1195
      %v1260 = vunpack.c.l.b16 %v1196
      %v1261 = vpack.c.b16 %v1246, %v1245
      %v1262 = vpack.c.b16 %v1248, %v1247
      %v1263 = vpack.c.b16 %v1250, %v1249
      %v1264 = vpack.c.b16 %v1252, %v1251
      %v1265 = vpack.c.b16 %v1254, %v1253
      %v1266 = vpack.c.b16 %v1256, %v1255
      %v1267 = vpack.c.b16 %v1258, %v1257
      %v1268 = vpack.c.b16 %v1260, %v1259
      %v1277 = vld [vmem:[%s3 + $0x80] sm:$0xf]
      %v1278 = vld [vmem:[%s3 + $0x84] sm:$0xf]
      %v1279 = vld [vmem:[%s3 + $0x88] sm:$0xf]
      %v1280 = vld [vmem:[%s3 + $0x8c] sm:$0xf]
      %v1281 = vld [vmem:[%s3 + $0x90] sm:$0xf]
      %v1282 = vld [vmem:[%s3 + $0x94] sm:$0xf]
      %v1283 = vld [vmem:[%s3 + $0x98] sm:$0xf]
      %v1284 = vld [vmem:[%s3 + $0x9c] sm:$0xf]
      %v1285 = vld [vmem:[%s3 + $0xa0] sm:$0xf]
      %v1286 = vld [vmem:[%s3 + $0xa4] sm:$0xf]
      %v1287 = vld [vmem:[%s3 + $0xa8] sm:$0xf]
      %v1288 = vld [vmem:[%s3 + $0xac] sm:$0xf]
      %v1289 = vld [vmem:[%s3 + $0xb0] sm:$0xf]
      %v1290 = vld [vmem:[%s3 + $0xb4] sm:$0xf]
      %v1291 = vld [vmem:[%s3 + $0xb8] sm:$0xf]
      %v1292 = vld [vmem:[%s3 + $0xbc] sm:$0xf]
      %v1293 = vld [vmem:[%s3 + $0xc0] sm:$0xf]
      %v1294 = vld [vmem:[%s3 + $0xc4] sm:$0xf]
      %v1295 = vld [vmem:[%s3 + $0xc8] sm:$0xf]
      %v1296 = vld [vmem:[%s3 + $0xcc] sm:$0xf]
      %v1297 = vld [vmem:[%s3 + $0xd0] sm:$0xf]
      %v1298 = vld [vmem:[%s3 + $0xd4] sm:$0xf]
      %v1299 = vld [vmem:[%s3 + $0xd8] sm:$0xf]
      %v1300 = vld [vmem:[%s3 + $0xdc] sm:$0xf]
      %v1301 = vld [vmem:[%s3 + $0xe0] sm:$0xf]
      %v1302 = vld [vmem:[%s3 + $0xe4] sm:$0xf]
      %v1303 = vld [vmem:[%s3 + $0xe8] sm:$0xf]
      %v1304 = vld [vmem:[%s3 + $0xec] sm:$0xf]
      %v1305 = vld [vmem:[%s3 + $0xf0] sm:$0xf]
      %v1306 = vld [vmem:[%s3 + $0xf4] sm:$0xf]
      %v1307 = vld [vmem:[%s3 + $0xf8] sm:$0xf]
      %v1308 = vld [vmem:[%s3 + $0xfc] sm:$0xf]
      %v1341 = vunpack.c.l.b16 %v1277
      %v1342 = vunpack.c.l.b16 %v1278
      %v1343 = vunpack.c.l.b16 %v1279
      %v1344 = vunpack.c.l.b16 %v1280
      %v1345 = vunpack.c.l.b16 %v1281
      %v1346 = vunpack.c.l.b16 %v1282
      %v1347 = vunpack.c.l.b16 %v1283
      %v1348 = vunpack.c.l.b16 %v1284
      %v1349 = vunpack.c.l.b16 %v1285
      %v1350 = vunpack.c.l.b16 %v1286
      %v1351 = vunpack.c.l.b16 %v1287
      %v1352 = vunpack.c.l.b16 %v1288
      %v1353 = vunpack.c.l.b16 %v1289
      %v1354 = vunpack.c.l.b16 %v1290
      %v1355 = vunpack.c.l.b16 %v1291
      %v1356 = vunpack.c.l.b16 %v1292
      %v1357 = vunpack.c.l.b16 %v1293
      %v1358 = vunpack.c.l.b16 %v1294
      %v1359 = vunpack.c.l.b16 %v1295
      %v1360 = vunpack.c.l.b16 %v1296
      %v1361 = vunpack.c.l.b16 %v1297
      %v1362 = vunpack.c.l.b16 %v1298
      %v1363 = vunpack.c.l.b16 %v1299
      %v1364 = vunpack.c.l.b16 %v1300
      %v1365 = vunpack.c.l.b16 %v1301
      %v1366 = vunpack.c.l.b16 %v1302
      %v1367 = vunpack.c.l.b16 %v1303
      %v1368 = vunpack.c.l.b16 %v1304
      %v1369 = vunpack.c.l.b16 %v1305
      %v1370 = vunpack.c.l.b16 %v1306
      %v1371 = vunpack.c.l.b16 %v1307
      %v1372 = vunpack.c.l.b16 %v1308
      %v1373 = vpack.c.b16 %v1342, %v1341
      %v1374 = vpack.c.b16 %v1344, %v1343
      %v1375 = vpack.c.b16 %v1346, %v1345
      %v1376 = vpack.c.b16 %v1348, %v1347
      %v1377 = vpack.c.b16 %v1350, %v1349
      %v1378 = vpack.c.b16 %v1352, %v1351
      %v1379 = vpack.c.b16 %v1354, %v1353
      %v1380 = vpack.c.b16 %v1356, %v1355
      %v1381 = vpack.c.b16 %v1358, %v1357
      %v1382 = vpack.c.b16 %v1360, %v1359
      %v1383 = vpack.c.b16 %v1362, %v1361
      %v1384 = vpack.c.b16 %v1364, %v1363
      %v1385 = vpack.c.b16 %v1366, %v1365
      %v1386 = vpack.c.b16 %v1368, %v1367
      %v1387 = vpack.c.b16 %v1370, %v1369
      %v1388 = vpack.c.b16 %v1372, %v1371
      %1405 = vmatpush.bf16.msra.mxu0 %v1380
      %1406 = vmatpush.bf16.msra.mxu0 %v1379
      %1407 = vmatpush.bf16.msra.mxu0 %v1378
      %1408 = vmatpush.bf16.msra.mxu0 %v1377
      %1409 = vmatpush.bf16.msra.mxu0 %v1376
      %1410 = vmatpush.bf16.msra.mxu0 %v1375
      %1411 = vmatpush.bf16.msra.mxu0 %v1374
      %1412 = vmatpush.bf16.msra.mxu0 %v1373
      %1413 = vmatmul.bf16.gmra.mxu0 %v1213
      %v1414 = vpop.f32.mrf.mxu0
      %v1415 = vadd.f32 0.0, %v1414
      %v1416 = vpop.f32.mrf.mxu0
      %v1417 = vadd.f32 0.0, %v1416
      %1418 = vmatmul.bf16.gmra.mxu0 %v1214
      %v1419 = vpop.f32.mrf.mxu0
      %v1420 = vadd.f32 0.0, %v1419
      %v1421 = vpop.f32.mrf.mxu0
      %v1422 = vadd.f32 0.0, %v1421
      %1423 = vmatmul.bf16.gmra.mxu0 %v1215
      %v1424 = vpop.f32.mrf.mxu0
      %v1425 = vadd.f32 0.0, %v1424
      %v1426 = vpop.f32.mrf.mxu0
      %v1427 = vadd.f32 0.0, %v1426
      %1428 = vmatmul.bf16.gmra.mxu0 %v1216
      %v1429 = vpop.f32.mrf.mxu0
      %v1430 = vadd.f32 0.0, %v1429
      %v1431 = vpop.f32.mrf.mxu0
      %v1432 = vadd.f32 0.0, %v1431
      %1433 = vmatmul.bf16.gmra.mxu0 %v1217
      %v1434 = vpop.f32.mrf.mxu0
      %v1435 = vadd.f32 0.0, %v1434
      %v1436 = vpop.f32.mrf.mxu0
      %v1437 = vadd.f32 0.0, %v1436
      %1438 = vmatmul.bf16.gmra.mxu0 %v1218
      %v1439 = vpop.f32.mrf.mxu0
      %v1440 = vadd.f32 0.0, %v1439
      %v1441 = vpop.f32.mrf.mxu0
      %v1442 = vadd.f32 0.0, %v1441
      %1443 = vmatmul.bf16.gmra.mxu0 %v1219
      %v1444 = vpop.f32.mrf.mxu0
      %v1445 = vadd.f32 0.0, %v1444
      %v1446 = vpop.f32.mrf.mxu0
      %v1447 = vadd.f32 0.0, %v1446
      %1448 = vmatmul.bf16.gmra.mxu0 %v1220
      %v1449 = vpop.f32.mrf.mxu0
      %v1450 = vadd.f32 0.0, %v1449
      %v1451 = vpop.f32.mrf.mxu0
      %v1452 = vadd.f32 0.0, %v1451
      %1453 = vdwg.mxu0
      %1454 = vmatpush.bf16.msra.mxu0 %v1388
      %1455 = vmatpush.bf16.msra.mxu0 %v1387
      %1456 = vmatpush.bf16.msra.mxu0 %v1386
      %1457 = vmatpush.bf16.msra.mxu0 %v1385
      %1458 = vmatpush.bf16.msra.mxu0 %v1384
      %1459 = vmatpush.bf16.msra.mxu0 %v1383
      %1460 = vmatpush.bf16.msra.mxu0 %v1382
      %1461 = vmatpush.bf16.msra.mxu0 %v1381
      %1462 = vmatmul.bf16.gmra.mxu0 %v1261
      %v1463 = vpop.f32.mrf.mxu0
      %v1464 = vadd.f32 %v1415, %v1463
      %v1465 = vpop.f32.mrf.mxu0
      %v1466 = vadd.f32 %v1417, %v1465
      %1467 = vmatmul.bf16.gmra.mxu0 %v1262
      %v1468 = vpop.f32.mrf.mxu0
      %v1469 = vadd.f32 %v1420, %v1468
      %v1470 = vpop.f32.mrf.mxu0
      %v1471 = vadd.f32 %v1422, %v1470
      %1472 = vmatmul.bf16.gmra.mxu0 %v1263
      %v1473 = vpop.f32.mrf.mxu0
      %v1474 = vadd.f32 %v1425, %v1473
      %v1475 = vpop.f32.mrf.mxu0
      %v1476 = vadd.f32 %v1427, %v1475
      %1477 = vmatmul.bf16.gmra.mxu0 %v1264
      %v1478 = vpop.f32.mrf.mxu0
      %v1479 = vadd.f32 %v1430, %v1478
      %v1480 = vpop.f32.mrf.mxu0
      %v1481 = vadd.f32 %v1432, %v1480
      %1482 = vmatmul.bf16.gmra.mxu0 %v1265
      %v1483 = vpop.f32.mrf.mxu0
      %v1484 = vadd.f32 %v1435, %v1483
      %v1485 = vpop.f32.mrf.mxu0
      %v1486 = vadd.f32 %v1437, %v1485
      %1487 = vmatmul.bf16.gmra.mxu0 %v1266
      %v1488 = vpop.f32.mrf.mxu0
      %v1489 = vadd.f32 %v1440, %v1488
      %v1490 = vpop.f32.mrf.mxu0
      %v1491 = vadd.f32 %v1442, %v1490
      %1492 = vmatmul.bf16.gmra.mxu0 %v1267
      %v1493 = vpop.f32.mrf.mxu0
      %v1494 = vadd.f32 %v1445, %v1493
      %v1495 = vpop.f32.mrf.mxu0
      %v1496 = vadd.f32 %v1447, %v1495
      %1497 = vmatmul.bf16.gmra.mxu0 %v1268
      %v1498 = vpop.f32.mrf.mxu0
      %v1499 = vadd.f32 %v1450, %v1498
      %v1500 = vpop.f32.mrf.mxu0
      %v1501 = vadd.f32 %v1452, %v1500
      %1502 = vdwg.mxu0
      %v1535 = vunpack.c.l.b16 %v1066
      %v1536 = vunpack.c.l.b16 %v1067
      %v1537 = vunpack.c.l.b16 %v1068
      %v1538 = vunpack.c.l.b16 %v1069
      %v1539 = vunpack.c.l.b16 %v1070
      %v1540 = vunpack.c.l.b16 %v1071
      %v1541 = vunpack.c.l.b16 %v1072
      %v1542 = vunpack.c.l.b16 %v1073
      %v1543 = vunpack.c.l.b16 %v1074
      %v1544 = vunpack.c.l.b16 %v1075
      %v1545 = vunpack.c.l.b16 %v1076
      %v1546 = vunpack.c.l.b16 %v1077
      %v1547 = vunpack.c.l.b16 %v1078
      %v1548 = vunpack.c.l.b16 %v1079
      %v1549 = vunpack.c.l.b16 %v1080
      %v1550 = vunpack.c.l.b16 %v1081
      %v1551 = vunpack.c.l.b16 %v1082
      %v1552 = vunpack.c.l.b16 %v1083
      %v1553 = vunpack.c.l.b16 %v1084
      %v1554 = vunpack.c.l.b16 %v1085
      %v1555 = vunpack.c.l.b16 %v1086
      %v1556 = vunpack.c.l.b16 %v1087
      %v1557 = vunpack.c.l.b16 %v1088
      %v1558 = vunpack.c.l.b16 %v1089
      %v1559 = vunpack.c.l.b16 %v1090
      %v1560 = vunpack.c.l.b16 %v1091
      %v1561 = vunpack.c.l.b16 %v1092
      %v1562 = vunpack.c.l.b16 %v1093
      %v1563 = vunpack.c.l.b16 %v1094
      %v1564 = vunpack.c.l.b16 %v1095
      %v1565 = vunpack.c.l.b16 %v1096
      %v1566 = vunpack.c.l.b16 %v1097
      %v1567 = vpack.c.b16 %v1536, %v1535
      %v1568 = vpack.c.b16 %v1538, %v1537
      %v1569 = vpack.c.b16 %v1540, %v1539
      %v1570 = vpack.c.b16 %v1542, %v1541
      %v1571 = vpack.c.b16 %v1544, %v1543
      %v1572 = vpack.c.b16 %v1546, %v1545
      %v1573 = vpack.c.b16 %v1548, %v1547
      %v1574 = vpack.c.b16 %v1550, %v1549
      %v1575 = vpack.c.b16 %v1552, %v1551
      %v1576 = vpack.c.b16 %v1554, %v1553
      %v1577 = vpack.c.b16 %v1556, %v1555
      %v1578 = vpack.c.b16 %v1558, %v1557
      %v1579 = vpack.c.b16 %v1560, %v1559
      %v1580 = vpack.c.b16 %v1562, %v1561
      %v1581 = vpack.c.b16 %v1564, %v1563
      %v1582 = vpack.c.b16 %v1566, %v1565
      %1599 = vmatpush.bf16.msra.mxu0 %v1574
      %1600 = vmatpush.bf16.msra.mxu0 %v1573
      %1601 = vmatpush.bf16.msra.mxu0 %v1572
      %1602 = vmatpush.bf16.msra.mxu0 %v1571
      %1603 = vmatpush.bf16.msra.mxu0 %v1570
      %1604 = vmatpush.bf16.msra.mxu0 %v1569
      %1605 = vmatpush.bf16.msra.mxu0 %v1568
      %1606 = vmatpush.bf16.msra.mxu0 %v1567
      %1607 = vmatmul.bf16.gmra.mxu0 %v1018
      %v1608 = vpop.f32.mrf.mxu0
      %v1609 = vadd.f32 %v1464, %v1608
      %v1610 = vpop.f32.mrf.mxu0
      %v1611 = vadd.f32 %v1466, %v1610
      %1612 = vmatmul.bf16.gmra.mxu0 %v1019
      %v1613 = vpop.f32.mrf.mxu0
      %v1614 = vadd.f32 %v1469, %v1613
      %v1615 = vpop.f32.mrf.mxu0
      %v1616 = vadd.f32 %v1471, %v1615
      %1617 = vmatmul.bf16.gmra.mxu0 %v1020
      %v1618 = vpop.f32.mrf.mxu0
      %v1619 = vadd.f32 %v1474, %v1618
      %v1620 = vpop.f32.mrf.mxu0
      %v1621 = vadd.f32 %v1476, %v1620
      %1622 = vmatmul.bf16.gmra.mxu0 %v1021
      %v1623 = vpop.f32.mrf.mxu0
      %v1624 = vadd.f32 %v1479, %v1623
      %v1625 = vpop.f32.mrf.mxu0
      %v1626 = vadd.f32 %v1481, %v1625
      %1627 = vmatmul.bf16.gmra.mxu0 %v1022
      %v1628 = vpop.f32.mrf.mxu0
      %v1629 = vadd.f32 %v1484, %v1628
      %v1630 = vpop.f32.mrf.mxu0
      %v1631 = vadd.f32 %v1486, %v1630
      %1632 = vmatmul.bf16.gmra.mxu0 %v1023
      %v1633 = vpop.f32.mrf.mxu0
      %v1634 = vadd.f32 %v1489, %v1633
      %v1635 = vpop.f32.mrf.mxu0
      %v1636 = vadd.f32 %v1491, %v1635
      %1637 = vmatmul.bf16.gmra.mxu0 %v1024
      %v1638 = vpop.f32.mrf.mxu0
      %v1639 = vadd.f32 %v1494, %v1638
      %v1640 = vpop.f32.mrf.mxu0
      %v1641 = vadd.f32 %v1496, %v1640
      %1642 = vmatmul.bf16.gmra.mxu0 %v1025
      %v1643 = vpop.f32.mrf.mxu0
      %v1644 = vadd.f32 %v1499, %v1643
      %v1645 = vpop.f32.mrf.mxu0
      %v1646 = vadd.f32 %v1501, %v1645
      %1647 = vdwg.mxu0
      %1648 = vmatpush.bf16.msra.mxu0 %v1582
      %1649 = vmatpush.bf16.msra.mxu0 %v1581
      %1650 = vmatpush.bf16.msra.mxu0 %v1580
      %1651 = vmatpush.bf16.msra.mxu0 %v1579
      %1652 = vmatpush.bf16.msra.mxu0 %v1578
      %1653 = vmatpush.bf16.msra.mxu0 %v1577
      %1654 = vmatpush.bf16.msra.mxu0 %v1576
      %1655 = vmatpush.bf16.msra.mxu0 %v1575
      %1656 = vmatmul.bf16.gmra.mxu0 %v1050
      %v1657 = vpop.f32.mrf.mxu0
      %v1658 = vadd.f32 %v1609, %v1657
      %v1659 = vpop.f32.mrf.mxu0
      %v1660 = vadd.f32 %v1611, %v1659
      %1661 = vmatmul.bf16.gmra.mxu0 %v1051
      %v1662 = vpop.f32.mrf.mxu0
      %v1663 = vadd.f32 %v1614, %v1662
      %v1664 = vpop.f32.mrf.mxu0
      %v1665 = vadd.f32 %v1616, %v1664
      %1666 = vmatmul.bf16.gmra.mxu0 %v1052
      %v1667 = vpop.f32.mrf.mxu0
      %v1668 = vadd.f32 %v1619, %v1667
      %v1669 = vpop.f32.mrf.mxu0
      %v1670 = vadd.f32 %v1621, %v1669
      %1671 = vmatmul.bf16.gmra.mxu0 %v1053
      %v1672 = vpop.f32.mrf.mxu0
      %v1673 = vadd.f32 %v1624, %v1672
      %v1674 = vpop.f32.mrf.mxu0
      %v1675 = vadd.f32 %v1626, %v1674
      %1676 = vmatmul.bf16.gmra.mxu0 %v1054
      %v1677 = vpop.f32.mrf.mxu0
      %v1678 = vadd.f32 %v1629, %v1677
      %v1679 = vpop.f32.mrf.mxu0
      %v1680 = vadd.f32 %v1631, %v1679
      %1681 = vmatmul.bf16.gmra.mxu0 %v1055
      %v1682 = vpop.f32.mrf.mxu0
      %v1683 = vadd.f32 %v1634, %v1682
      %v1684 = vpop.f32.mrf.mxu0
      %v1685 = vadd.f32 %v1636, %v1684
      %1686 = vmatmul.bf16.gmra.mxu0 %v1056
      %v1687 = vpop.f32.mrf.mxu0
      %v1688 = vadd.f32 %v1639, %v1687
      %v1689 = vpop.f32.mrf.mxu0
      %v1690 = vadd.f32 %v1641, %v1689
      %1691 = vmatmul.bf16.gmra.mxu0 %v1057
      %v1692 = vpop.f32.mrf.mxu0
      %v1693 = vadd.f32 %v1644, %v1692
      %v1694 = vpop.f32.mrf.mxu0
      %v1695 = vadd.f32 %v1646, %v1694
      %1696 = vdwg.mxu0
      %v1697 = vld [vmem:[%s614] sm:$0xf]
      %v1698 = vld [vmem:[%s614 + $0x4] sm:$0xf]
      %v1699 = vld [vmem:[%s614 + $0x8] sm:$0x1]
      %v1700 = vld [vmem:[%s614 + $0xc] sm:$0xf]
      %v1701 = vld [vmem:[%s614 + $0x10] sm:$0xf]
      %v1702 = vld [vmem:[%s614 + $0x14] sm:$0x1]
      %v1703 = vld [vmem:[%s614 + $0x18] sm:$0xf]
      %v1704 = vld [vmem:[%s614 + $0x1c] sm:$0xf]
      %v1705 = vld [vmem:[%s614 + $0x20] sm:$0x1]
      %v1706 = vld [vmem:[%s614 + $0x24] sm:$0xf]
      %v1707 = vld [vmem:[%s614 + $0x28] sm:$0xf]
      %v1708 = vld [vmem:[%s614 + $0x2c] sm:$0x1]
      %v1709 = vld [vmem:[%s614 + $0x30] sm:$0xf]
      %v1710 = vld [vmem:[%s614 + $0x34] sm:$0xf]
      %v1711 = vld [vmem:[%s614 + $0x38] sm:$0x1]
      %v1712 = vld [vmem:[%s614 + $0x3c] sm:$0xf]
      %v1713 = vld [vmem:[%s614 + $0x40] sm:$0xf]
      %v1714 = vld [vmem:[%s614 + $0x44] sm:$0x1]
      %v1715 = vld [vmem:[%s614 + $0x48] sm:$0xf]
      %v1716 = vld [vmem:[%s614 + $0x4c] sm:$0xf]
      %v1717 = vld [vmem:[%s614 + $0x50] sm:$0x1]
      %v1718 = vld [vmem:[%s614 + $0x54] sm:$0xf]
      %v1719 = vld [vmem:[%s614 + $0x58] sm:$0xf]
      %v1720 = vld [vmem:[%s614 + $0x5c] sm:$0x1]
      %v1722 = vshrl.u32 %v1697, 16
      %v1724 = vrot.slane %v1722, 4
      %v1725 = vshll.u32 %v1697, 16
      %v1727 = vrot.slane %v1725, 5
      %v1728 = vor.u32 %v1724, %v1727
      %v1729 = vrot.slane %v1728, 4
      %v1731 = vshll.u32 %v1698, 16
      %v1733 = vrot.slane %v1731, 5
      %v1734 = vsel %vm793, %v1729, %v1733
      %v1735 = vshrl.u32 %v1698, 16
      %v1737 = vrot.slane %v1735, 4
      %v1738 = vor.u32 %v1737, %v1733
      %v1739 = vrot.slane %v1738, 4
      %v1741 = vshll.u32 %v1699, 16
      %v1743 = vrot.slane %v1741, 5
      %v1744 = vsel %vm793, %v1739, %v1743
      %v1746 = vshrl.u32 %v1700, 16
      %v1748 = vrot.slane %v1746, 4
      %v1749 = vshll.u32 %v1700, 16
      %v1751 = vrot.slane %v1749, 5
      %v1752 = vor.u32 %v1748, %v1751
      %v1753 = vrot.slane %v1752, 4
      %v1755 = vshll.u32 %v1701, 16
      %v1757 = vrot.slane %v1755, 5
      %v1758 = vsel %vm793, %v1753, %v1757
      %v1759 = vshrl.u32 %v1701, 16
      %v1761 = vrot.slane %v1759, 4
      %v1762 = vor.u32 %v1761, %v1757
      %v1763 = vrot.slane %v1762, 4
      %v1765 = vshll.u32 %v1702, 16
      %v1767 = vrot.slane %v1765, 5
      %v1768 = vsel %vm793, %v1763, %v1767
      %v1770 = vshrl.u32 %v1703, 16
      %v1772 = vrot.slane %v1770, 4
      %v1773 = vshll.u32 %v1703, 16
      %v1775 = vrot.slane %v1773, 5
      %v1776 = vor.u32 %v1772, %v1775
      %v1777 = vrot.slane %v1776, 4
      %v1779 = vshll.u32 %v1704, 16
      %v1781 = vrot.slane %v1779, 5
      %v1782 = vsel %vm793, %v1777, %v1781
      %v1783 = vshrl.u32 %v1704, 16
      %v1785 = vrot.slane %v1783, 4
      %v1786 = vor.u32 %v1785, %v1781
      %v1787 = vrot.slane %v1786, 4
      %v1789 = vshll.u32 %v1705, 16
      %v1791 = vrot.slane %v1789, 5
      %v1792 = vsel %vm793, %v1787, %v1791
      %v1794 = vshrl.u32 %v1706, 16
      %v1796 = vrot.slane %v1794, 4
      %v1797 = vshll.u32 %v1706, 16
      %v1799 = vrot.slane %v1797, 5
      %v1800 = vor.u32 %v1796, %v1799
      %v1801 = vrot.slane %v1800, 4
      %v1803 = vshll.u32 %v1707, 16
      %v1805 = vrot.slane %v1803, 5
      %v1806 = vsel %vm793, %v1801, %v1805
      %v1807 = vshrl.u32 %v1707, 16
      %v1809 = vrot.slane %v1807, 4
      %v1810 = vor.u32 %v1809, %v1805
      %v1811 = vrot.slane %v1810, 4
      %v1813 = vshll.u32 %v1708, 16
      %v1815 = vrot.slane %v1813, 5
      %v1816 = vsel %vm793, %v1811, %v1815
      %v1818 = vshrl.u32 %v1709, 16
      %v1820 = vrot.slane %v1818, 4
      %v1821 = vshll.u32 %v1709, 16
      %v1823 = vrot.slane %v1821, 5
      %v1824 = vor.u32 %v1820, %v1823
      %v1825 = vrot.slane %v1824, 4
      %v1827 = vshll.u32 %v1710, 16
      %v1829 = vrot.slane %v1827, 5
      %v1830 = vsel %vm793, %v1825, %v1829
      %v1831 = vshrl.u32 %v1710, 16
      %v1833 = vrot.slane %v1831, 4
      %v1834 = vor.u32 %v1833, %v1829
      %v1835 = vrot.slane %v1834, 4
      %v1837 = vshll.u32 %v1711, 16
      %v1839 = vrot.slane %v1837, 5
      %v1840 = vsel %vm793, %v1835, %v1839
      %v1842 = vshrl.u32 %v1712, 16
      %v1844 = vrot.slane %v1842, 4
      %v1845 = vshll.u32 %v1712, 16
      %v1847 = vrot.slane %v1845, 5
      %v1848 = vor.u32 %v1844, %v1847
      %v1849 = vrot.slane %v1848, 4
      %v1851 = vshll.u32 %v1713, 16
      %v1853 = vrot.slane %v1851, 5
      %v1854 = vsel %vm793, %v1849, %v1853
      %v1855 = vshrl.u32 %v1713, 16
      %v1857 = vrot.slane %v1855, 4
      %v1858 = vor.u32 %v1857, %v1853
      %v1859 = vrot.slane %v1858, 4
      %v1861 = vshll.u32 %v1714, 16
      %v1863 = vrot.slane %v1861, 5
      %v1864 = vsel %vm793, %v1859, %v1863
      %v1866 = vshrl.u32 %v1715, 16
      %v1868 = vrot.slane %v1866, 4
      %v1869 = vshll.u32 %v1715, 16
      %v1871 = vrot.slane %v1869, 5
      %v1872 = vor.u32 %v1868, %v1871
      %v1873 = vrot.slane %v1872, 4
      %v1875 = vshll.u32 %v1716, 16
      %v1877 = vrot.slane %v1875, 5
      %v1878 = vsel %vm793, %v1873, %v1877
      %v1879 = vshrl.u32 %v1716, 16
      %v1881 = vrot.slane %v1879, 4
      %v1882 = vor.u32 %v1881, %v1877
      %v1883 = vrot.slane %v1882, 4
      %v1885 = vshll.u32 %v1717, 16
      %v1887 = vrot.slane %v1885, 5
      %v1888 = vsel %vm793, %v1883, %v1887
      %v1890 = vshrl.u32 %v1718, 16
      %v1892 = vrot.slane %v1890, 4
      %v1893 = vshll.u32 %v1718, 16
      %v1895 = vrot.slane %v1893, 5
      %v1896 = vor.u32 %v1892, %v1895
      %v1897 = vrot.slane %v1896, 4
      %v1899 = vshll.u32 %v1719, 16
      %v1901 = vrot.slane %v1899, 5
      %v1902 = vsel %vm793, %v1897, %v1901
      %v1903 = vshrl.u32 %v1719, 16
      %v1905 = vrot.slane %v1903, 4
      %v1906 = vor.u32 %v1905, %v1901
      %v1907 = vrot.slane %v1906, 4
      %v1909 = vshll.u32 %v1720, 16
      %v1911 = vrot.slane %v1909, 5
      %v1912 = vsel %vm793, %v1907, %v1911
      %v1913 = vld [vmem:[%s614] sm:$0xe]
      %v1914 = vld [vmem:[%s614 + $0xc] sm:$0xe]
      %v1915 = vld [vmem:[%s614 + $0x18] sm:$0xe]
      %v1916 = vld [vmem:[%s614 + $0x24] sm:$0xe]
      %v1917 = vld [vmem:[%s614 + $0x30] sm:$0xe]
      %v1918 = vld [vmem:[%s614 + $0x3c] sm:$0xe]
      %v1919 = vld [vmem:[%s614 + $0x48] sm:$0xe]
      %v1920 = vld [vmem:[%s614 + $0x54] sm:$0xe]
      %v1945 = vrot.slane %v1913, 5
      %v1946 = vrot.slane %v1945, 4
      %v1947 = vrot.slane %v1698, 5
      %v1948 = vsel %vm1124, %v1946, %v1947
      %v1949 = vrot.slane %v1947, 4
      %v1950 = vrot.slane %v1699, 5
      %v1951 = vsel %vm1124, %v1949, %v1950
      %v1952 = vrot.slane %v1914, 5
      %v1953 = vrot.slane %v1952, 4
      %v1954 = vrot.slane %v1701, 5
      %v1955 = vsel %vm1124, %v1953, %v1954
      %v1956 = vrot.slane %v1954, 4
      %v1957 = vrot.slane %v1702, 5
      %v1958 = vsel %vm1124, %v1956, %v1957
      %v1959 = vrot.slane %v1915, 5
      %v1960 = vrot.slane %v1959, 4
      %v1961 = vrot.slane %v1704, 5
      %v1962 = vsel %vm1124, %v1960, %v1961
      %v1963 = vrot.slane %v1961, 4
      %v1964 = vrot.slane %v1705, 5
      %v1965 = vsel %vm1124, %v1963, %v1964
      %v1966 = vrot.slane %v1916, 5
      %v1967 = vrot.slane %v1966, 4
      %v1968 = vrot.slane %v1707, 5
      %v1969 = vsel %vm1124, %v1967, %v1968
      %v1970 = vrot.slane %v1968, 4
      %v1971 = vrot.slane %v1708, 5
      %v1972 = vsel %vm1124, %v1970, %v1971
      %v1973 = vrot.slane %v1917, 5
      %v1974 = vrot.slane %v1973, 4
      %v1975 = vrot.slane %v1710, 5
      %v1976 = vsel %vm1124, %v1974, %v1975
      %v1977 = vrot.slane %v1975, 4
      %v1978 = vrot.slane %v1711, 5
      %v1979 = vsel %vm1124, %v1977, %v1978
      %v1980 = vrot.slane %v1918, 5
      %v1981 = vrot.slane %v1980, 4
      %v1982 = vrot.slane %v1713, 5
      %v1983 = vsel %vm1124, %v1981, %v1982
      %v1984 = vrot.slane %v1982, 4
      %v1985 = vrot.slane %v1714, 5
      %v1986 = vsel %vm1124, %v1984, %v1985
      %v1987 = vrot.slane %v1919, 5
      %v1988 = vrot.slane %v1987, 4
      %v1989 = vrot.slane %v1716, 5
      %v1990 = vsel %vm1124, %v1988, %v1989
      %v1991 = vrot.slane %v1989, 4
      %v1992 = vrot.slane %v1717, 5
      %v1993 = vsel %vm1124, %v1991, %v1992
      %v1994 = vrot.slane %v1920, 5
      %v1995 = vrot.slane %v1994, 4
      %v1996 = vrot.slane %v1719, 5
      %v1997 = vsel %vm1124, %v1995, %v1996
      %v1998 = vrot.slane %v1996, 4
      %v1999 = vrot.slane %v1720, 5
      %v2000 = vsel %vm1124, %v1998, %v1999
      %v2001 = vunpack.c.l.b16 %v1734
      %v2002 = vunpack.c.l.b16 %v1744
      %v2003 = vunpack.c.l.b16 %v1758
      %v2004 = vunpack.c.l.b16 %v1768
      %v2005 = vunpack.c.l.b16 %v1782
      %v2006 = vunpack.c.l.b16 %v1792
      %v2007 = vunpack.c.l.b16 %v1806
      %v2008 = vunpack.c.l.b16 %v1816
      %v2009 = vunpack.c.l.b16 %v1830
      %v2010 = vunpack.c.l.b16 %v1840
      %v2011 = vunpack.c.l.b16 %v1854
      %v2012 = vunpack.c.l.b16 %v1864
      %v2013 = vunpack.c.l.b16 %v1878
      %v2014 = vunpack.c.l.b16 %v1888
      %v2015 = vunpack.c.l.b16 %v1902
      %v2016 = vunpack.c.l.b16 %v1912
      %v2017 = vpack.c.b16 %v2002, %v2001
      %v2018 = vpack.c.b16 %v2004, %v2003
      %v2019 = vpack.c.b16 %v2006, %v2005
      %v2020 = vpack.c.b16 %v2008, %v2007
      %v2021 = vpack.c.b16 %v2010, %v2009
      %v2022 = vpack.c.b16 %v2012, %v2011
      %v2023 = vpack.c.b16 %v2014, %v2013
      %v2024 = vpack.c.b16 %v2016, %v2015
      %v2033 = vunpack.c.l.b16 %v1948
      %v2034 = vunpack.c.l.b16 %v1951
      %v2035 = vunpack.c.l.b16 %v1955
      %v2036 = vunpack.c.l.b16 %v1958
      %v2037 = vunpack.c.l.b16 %v1962
      %v2038 = vunpack.c.l.b16 %v1965
      %v2039 = vunpack.c.l.b16 %v1969
      %v2040 = vunpack.c.l.b16 %v1972
      %v2041 = vunpack.c.l.b16 %v1976
      %v2042 = vunpack.c.l.b16 %v1979
      %v2043 = vunpack.c.l.b16 %v1983
      %v2044 = vunpack.c.l.b16 %v1986
      %v2045 = vunpack.c.l.b16 %v1990
      %v2046 = vunpack.c.l.b16 %v1993
      %v2047 = vunpack.c.l.b16 %v1997
      %v2048 = vunpack.c.l.b16 %v2000
      %v2049 = vpack.c.b16 %v2034, %v2033
      %v2050 = vpack.c.b16 %v2036, %v2035
      %v2051 = vpack.c.b16 %v2038, %v2037
      %v2052 = vpack.c.b16 %v2040, %v2039
      %v2053 = vpack.c.b16 %v2042, %v2041
      %v2054 = vpack.c.b16 %v2044, %v2043
      %v2055 = vpack.c.b16 %v2046, %v2045
      %v2056 = vpack.c.b16 %v2048, %v2047
      %v2065 = vld [vmem:[%s3 + $0x100] sm:$0xf]
      %v2066 = vld [vmem:[%s3 + $0x104] sm:$0xf]
      %v2067 = vld [vmem:[%s3 + $0x108] sm:$0xf]
      %v2068 = vld [vmem:[%s3 + $0x10c] sm:$0xf]
      %v2069 = vld [vmem:[%s3 + $0x110] sm:$0xf]
      %v2070 = vld [vmem:[%s3 + $0x114] sm:$0xf]
      %v2071 = vld [vmem:[%s3 + $0x118] sm:$0xf]
      %v2072 = vld [vmem:[%s3 + $0x11c] sm:$0xf]
      %v2073 = vld [vmem:[%s3 + $0x120] sm:$0xf]
      %v2074 = vld [vmem:[%s3 + $0x124] sm:$0xf]
      %v2075 = vld [vmem:[%s3 + $0x128] sm:$0xf]
      %v2076 = vld [vmem:[%s3 + $0x12c] sm:$0xf]
      %v2077 = vld [vmem:[%s3 + $0x130] sm:$0xf]
      %v2078 = vld [vmem:[%s3 + $0x134] sm:$0xf]
      %v2079 = vld [vmem:[%s3 + $0x138] sm:$0xf]
      %v2080 = vld [vmem:[%s3 + $0x13c] sm:$0xf]
      %v2081 = vld [vmem:[%s3 + $0x140] sm:$0xf]
      %v2082 = vld [vmem:[%s3 + $0x144] sm:$0xf]
      %v2083 = vld [vmem:[%s3 + $0x148] sm:$0xf]
      %v2084 = vld [vmem:[%s3 + $0x14c] sm:$0xf]
      %v2085 = vld [vmem:[%s3 + $0x150] sm:$0xf]
      %v2086 = vld [vmem:[%s3 + $0x154] sm:$0xf]
      %v2087 = vld [vmem:[%s3 + $0x158] sm:$0xf]
      %v2088 = vld [vmem:[%s3 + $0x15c] sm:$0xf]
      %v2089 = vld [vmem:[%s3 + $0x160] sm:$0xf]
      %v2090 = vld [vmem:[%s3 + $0x164] sm:$0xf]
      %v2091 = vld [vmem:[%s3 + $0x168] sm:$0xf]
      %v2092 = vld [vmem:[%s3 + $0x16c] sm:$0xf]
      %v2093 = vld [vmem:[%s3 + $0x170] sm:$0xf]
      %v2094 = vld [vmem:[%s3 + $0x174] sm:$0xf]
      %v2095 = vld [vmem:[%s3 + $0x178] sm:$0xf]
      %v2096 = vld [vmem:[%s3 + $0x17c] sm:$0xf]
      %v2129 = vunpack.c.l.b16 %v2065
      %v2130 = vunpack.c.l.b16 %v2066
      %v2131 = vunpack.c.l.b16 %v2067
      %v2132 = vunpack.c.l.b16 %v2068
      %v2133 = vunpack.c.l.b16 %v2069
      %v2134 = vunpack.c.l.b16 %v2070
      %v2135 = vunpack.c.l.b16 %v2071
      %v2136 = vunpack.c.l.b16 %v2072
      %v2137 = vunpack.c.l.b16 %v2073
      %v2138 = vunpack.c.l.b16 %v2074
      %v2139 = vunpack.c.l.b16 %v2075
      %v2140 = vunpack.c.l.b16 %v2076
      %v2141 = vunpack.c.l.b16 %v2077
      %v2142 = vunpack.c.l.b16 %v2078
      %v2143 = vunpack.c.l.b16 %v2079
      %v2144 = vunpack.c.l.b16 %v2080
      %v2145 = vunpack.c.l.b16 %v2081
      %v2146 = vunpack.c.l.b16 %v2082
      %v2147 = vunpack.c.l.b16 %v2083
      %v2148 = vunpack.c.l.b16 %v2084
      %v2149 = vunpack.c.l.b16 %v2085
      %v2150 = vunpack.c.l.b16 %v2086
      %v2151 = vunpack.c.l.b16 %v2087
      %v2152 = vunpack.c.l.b16 %v2088
      %v2153 = vunpack.c.l.b16 %v2089
      %v2154 = vunpack.c.l.b16 %v2090
      %v2155 = vunpack.c.l.b16 %v2091
      %v2156 = vunpack.c.l.b16 %v2092
      %v2157 = vunpack.c.l.b16 %v2093
      %v2158 = vunpack.c.l.b16 %v2094
      %v2159 = vunpack.c.l.b16 %v2095
      %v2160 = vunpack.c.l.b16 %v2096
      %v2161 = vpack.c.b16 %v2130, %v2129
      %v2162 = vpack.c.b16 %v2132, %v2131
      %v2163 = vpack.c.b16 %v2134, %v2133
      %v2164 = vpack.c.b16 %v2136, %v2135
      %v2165 = vpack.c.b16 %v2138, %v2137
      %v2166 = vpack.c.b16 %v2140, %v2139
      %v2167 = vpack.c.b16 %v2142, %v2141
      %v2168 = vpack.c.b16 %v2144, %v2143
      %v2169 = vpack.c.b16 %v2146, %v2145
      %v2170 = vpack.c.b16 %v2148, %v2147
      %v2171 = vpack.c.b16 %v2150, %v2149
      %v2172 = vpack.c.b16 %v2152, %v2151
      %v2173 = vpack.c.b16 %v2154, %v2153
      %v2174 = vpack.c.b16 %v2156, %v2155
      %v2175 = vpack.c.b16 %v2158, %v2157
      %v2176 = vpack.c.b16 %v2160, %v2159
      %2193 = vmatpush.bf16.msra.mxu0 %v2168
      %2194 = vmatpush.bf16.msra.mxu0 %v2167
      %2195 = vmatpush.bf16.msra.mxu0 %v2166
      %2196 = vmatpush.bf16.msra.mxu0 %v2165
      %2197 = vmatpush.bf16.msra.mxu0 %v2164
      %2198 = vmatpush.bf16.msra.mxu0 %v2163
      %2199 = vmatpush.bf16.msra.mxu0 %v2162
      %2200 = vmatpush.bf16.msra.mxu0 %v2161
      %2201 = vmatmul.bf16.gmra.mxu0 %v2017
      %v2202 = vpop.f32.mrf.mxu0
      %v2203 = vadd.f32 0.0, %v2202
      %v2204 = vpop.f32.mrf.mxu0
      %v2205 = vadd.f32 0.0, %v2204
      %2206 = vmatmul.bf16.gmra.mxu0 %v2018
      %v2207 = vpop.f32.mrf.mxu0
      %v2208 = vadd.f32 0.0, %v2207
      %v2209 = vpop.f32.mrf.mxu0
      %v2210 = vadd.f32 0.0, %v2209
      %2211 = vmatmul.bf16.gmra.mxu0 %v2019
      %v2212 = vpop.f32.mrf.mxu0
      %v2213 = vadd.f32 0.0, %v2212
      %v2214 = vpop.f32.mrf.mxu0
      %v2215 = vadd.f32 0.0, %v2214
      %2216 = vmatmul.bf16.gmra.mxu0 %v2020
      %v2217 = vpop.f32.mrf.mxu0
      %v2218 = vadd.f32 0.0, %v2217
      %v2219 = vpop.f32.mrf.mxu0
      %v2220 = vadd.f32 0.0, %v2219
      %2221 = vmatmul.bf16.gmra.mxu0 %v2021
      %v2222 = vpop.f32.mrf.mxu0
      %v2223 = vadd.f32 0.0, %v2222
      %v2224 = vpop.f32.mrf.mxu0
      %v2225 = vadd.f32 0.0, %v2224
      %2226 = vmatmul.bf16.gmra.mxu0 %v2022
      %v2227 = vpop.f32.mrf.mxu0
      %v2228 = vadd.f32 0.0, %v2227
      %v2229 = vpop.f32.mrf.mxu0
      %v2230 = vadd.f32 0.0, %v2229
      %2231 = vmatmul.bf16.gmra.mxu0 %v2023
      %v2232 = vpop.f32.mrf.mxu0
      %v2233 = vadd.f32 0.0, %v2232
      %v2234 = vpop.f32.mrf.mxu0
      %v2235 = vadd.f32 0.0, %v2234
      %2236 = vmatmul.bf16.gmra.mxu0 %v2024
      %v2237 = vpop.f32.mrf.mxu0
      %v2238 = vadd.f32 0.0, %v2237
      %v2239 = vpop.f32.mrf.mxu0
      %v2240 = vadd.f32 0.0, %v2239
      %2241 = vdwg.mxu0
      %2242 = vmatpush.bf16.msra.mxu0 %v2176
      %2243 = vmatpush.bf16.msra.mxu0 %v2175
      %2244 = vmatpush.bf16.msra.mxu0 %v2174
      %2245 = vmatpush.bf16.msra.mxu0 %v2173
      %2246 = vmatpush.bf16.msra.mxu0 %v2172
      %2247 = vmatpush.bf16.msra.mxu0 %v2171
      %2248 = vmatpush.bf16.msra.mxu0 %v2170
      %2249 = vmatpush.bf16.msra.mxu0 %v2169
      %2250 = vmatmul.bf16.gmra.mxu0 %v2049
      %v2251 = vpop.f32.mrf.mxu0
      %v2252 = vadd.f32 %v2203, %v2251
      %v2253 = vpop.f32.mrf.mxu0
      %v2254 = vadd.f32 %v2205, %v2253
      %2255 = vmatmul.bf16.gmra.mxu0 %v2050
      %v2256 = vpop.f32.mrf.mxu0
      %v2257 = vadd.f32 %v2208, %v2256
      %v2258 = vpop.f32.mrf.mxu0
      %v2259 = vadd.f32 %v2210, %v2258
      %2260 = vmatmul.bf16.gmra.mxu0 %v2051
      %v2261 = vpop.f32.mrf.mxu0
      %v2262 = vadd.f32 %v2213, %v2261
      %v2263 = vpop.f32.mrf.mxu0
      %v2264 = vadd.f32 %v2215, %v2263
      %2265 = vmatmul.bf16.gmra.mxu0 %v2052
      %v2266 = vpop.f32.mrf.mxu0
      %v2267 = vadd.f32 %v2218, %v2266
      %v2268 = vpop.f32.mrf.mxu0
      %v2269 = vadd.f32 %v2220, %v2268
      %2270 = vmatmul.bf16.gmra.mxu0 %v2053
      %v2271 = vpop.f32.mrf.mxu0
      %v2272 = vadd.f32 %v2223, %v2271
      %v2273 = vpop.f32.mrf.mxu0
      %v2274 = vadd.f32 %v2225, %v2273
      %2275 = vmatmul.bf16.gmra.mxu0 %v2054
      %v2276 = vpop.f32.mrf.mxu0
      %v2277 = vadd.f32 %v2228, %v2276
      %v2278 = vpop.f32.mrf.mxu0
      %v2279 = vadd.f32 %v2230, %v2278
      %2280 = vmatmul.bf16.gmra.mxu0 %v2055
      %v2281 = vpop.f32.mrf.mxu0
      %v2282 = vadd.f32 %v2233, %v2281
      %v2283 = vpop.f32.mrf.mxu0
      %v2284 = vadd.f32 %v2235, %v2283
      %2285 = vmatmul.bf16.gmra.mxu0 %v2056
      %v2286 = vpop.f32.mrf.mxu0
      %v2287 = vadd.f32 %v2238, %v2286
      %v2288 = vpop.f32.mrf.mxu0
      %v2289 = vadd.f32 %v2240, %v2288
      %2290 = vdwg.mxu0
      %v2291 = vadd.f32 %v1658, %v2252
      %v2292 = vadd.f32 %v1660, %v2254
      %v2293 = vadd.f32 %v1663, %v2257
      %v2294 = vadd.f32 %v1665, %v2259
      %v2295 = vadd.f32 %v1668, %v2262
      %v2296 = vadd.f32 %v1670, %v2264
      %v2297 = vadd.f32 %v1673, %v2267
      %v2298 = vadd.f32 %v1675, %v2269
      %v2299 = vadd.f32 %v1678, %v2272
      %v2300 = vadd.f32 %v1680, %v2274
      %v2301 = vadd.f32 %v1683, %v2277
      %v2302 = vadd.f32 %v1685, %v2279
      %v2303 = vadd.f32 %v1688, %v2282
      %v2304 = vadd.f32 %v1690, %v2284
      %v2305 = vadd.f32 %v1693, %v2287
      %v2306 = vadd.f32 %v1695, %v2289
      %s2307 = scalar_lea.vmem [#allocation2], 24
      %v2308 = vld [vmem:[%s2307] sm:$0xf]
      %v2309 = vld [vmem:[%s2307 + $0x4] sm:$0xf]
      %v2310 = vld [vmem:[%s2307 + $0xc] sm:$0xf]
      %v2311 = vld [vmem:[%s2307 + $0x10] sm:$0xf]
      %v2312 = vld [vmem:[%s2307 + $0x18] sm:$0xf]
      %v2313 = vld [vmem:[%s2307 + $0x1c] sm:$0xf]
      %v2314 = vld [vmem:[%s2307 + $0x24] sm:$0xf]
      %v2315 = vld [vmem:[%s2307 + $0x28] sm:$0xf]
      %v2316 = vld [vmem:[%s2307 + $0x30] sm:$0xf]
      %v2317 = vld [vmem:[%s2307 + $0x34] sm:$0xf]
      %v2318 = vld [vmem:[%s2307 + $0x3c] sm:$0xf]
      %v2319 = vld [vmem:[%s2307 + $0x40] sm:$0xf]
      %v2320 = vld [vmem:[%s2307 + $0x48] sm:$0xf]
      %v2321 = vld [vmem:[%s2307 + $0x4c] sm:$0xf]
      %v2322 = vld [vmem:[%s2307 + $0x54] sm:$0xf]
      %v2323 = vld [vmem:[%s2307 + $0x58] sm:$0xf]
      %v2324 = vld [vmem:[%s2307 + $0x8] sm:$0x1]
      %v2325 = vld [vmem:[%s2307 + $0x14] sm:$0x1]
      %v2326 = vld [vmem:[%s2307 + $0x20] sm:$0x1]
      %v2327 = vld [vmem:[%s2307 + $0x2c] sm:$0x1]
      %v2328 = vld [vmem:[%s2307 + $0x38] sm:$0x1]
      %v2329 = vld [vmem:[%s2307 + $0x44] sm:$0x1]
      %v2330 = vld [vmem:[%s2307 + $0x50] sm:$0x1]
      %v2331 = vld [vmem:[%s2307 + $0x5c] sm:$0x1]
      %v2333 = vshrl.u32 %v2308, 16
      %v2335 = vrot.slane %v2333, 4
      %v2336 = vshll.u32 %v2308, 16
      %v2338 = vrot.slane %v2336, 5
      %v2339 = vor.u32 %v2335, %v2338
      %v2340 = vrot.slane %v2339, 4
      %v2342 = vshll.u32 %v2309, 16
      %v2344 = vrot.slane %v2342, 5
      %v2345 = vsel %vm793, %v2340, %v2344
      %v2346 = vshrl.u32 %v2309, 16
      %v2348 = vrot.slane %v2346, 4
      %v2349 = vor.u32 %v2348, %v2344
      %v2350 = vrot.slane %v2349, 4
      %v2352 = vshll.u32 %v2324, 16
      %v2354 = vrot.slane %v2352, 5
      %v2355 = vsel %vm793, %v2350, %v2354
      %v2357 = vshrl.u32 %v2310, 16
      %v2359 = vrot.slane %v2357, 4
      %v2360 = vshll.u32 %v2310, 16
      %v2362 = vrot.slane %v2360, 5
      %v2363 = vor.u32 %v2359, %v2362
      %v2364 = vrot.slane %v2363, 4
      %v2366 = vshll.u32 %v2311, 16
      %v2368 = vrot.slane %v2366, 5
      %v2369 = vsel %vm793, %v2364, %v2368
      %v2370 = vshrl.u32 %v2311, 16
      %v2372 = vrot.slane %v2370, 4
      %v2373 = vor.u32 %v2372, %v2368
      %v2374 = vrot.slane %v2373, 4
      %v2376 = vshll.u32 %v2325, 16
      %v2378 = vrot.slane %v2376, 5
      %v2379 = vsel %vm793, %v2374, %v2378
      %v2381 = vshrl.u32 %v2312, 16
      %v2383 = vrot.slane %v2381, 4
      %v2384 = vshll.u32 %v2312, 16
      %v2386 = vrot.slane %v2384, 5
      %v2387 = vor.u32 %v2383, %v2386
      %v2388 = vrot.slane %v2387, 4
      %v2390 = vshll.u32 %v2313, 16
      %v2392 = vrot.slane %v2390, 5
      %v2393 = vsel %vm793, %v2388, %v2392
      %v2394 = vshrl.u32 %v2313, 16
      %v2396 = vrot.slane %v2394, 4
      %v2397 = vor.u32 %v2396, %v2392
      %v2398 = vrot.slane %v2397, 4
      %v2400 = vshll.u32 %v2326, 16
      %v2402 = vrot.slane %v2400, 5
      %v2403 = vsel %vm793, %v2398, %v2402
      %v2405 = vshrl.u32 %v2314, 16
      %v2407 = vrot.slane %v2405, 4
      %v2408 = vshll.u32 %v2314, 16
      %v2410 = vrot.slane %v2408, 5
      %v2411 = vor.u32 %v2407, %v2410
      %v2412 = vrot.slane %v2411, 4
      %v2414 = vshll.u32 %v2315, 16
      %v2416 = vrot.slane %v2414, 5
      %v2417 = vsel %vm793, %v2412, %v2416
      %v2418 = vshrl.u32 %v2315, 16
      %v2420 = vrot.slane %v2418, 4
      %v2421 = vor.u32 %v2420, %v2416
      %v2422 = vrot.slane %v2421, 4
      %v2424 = vshll.u32 %v2327, 16
      %v2426 = vrot.slane %v2424, 5
      %v2427 = vsel %vm793, %v2422, %v2426
      %v2429 = vshrl.u32 %v2316, 16
      %v2431 = vrot.slane %v2429, 4
      %v2432 = vshll.u32 %v2316, 16
      %v2434 = vrot.slane %v2432, 5
      %v2435 = vor.u32 %v2431, %v2434
      %v2436 = vrot.slane %v2435, 4
      %v2438 = vshll.u32 %v2317, 16
      %v2440 = vrot.slane %v2438, 5
      %v2441 = vsel %vm793, %v2436, %v2440
      %v2442 = vshrl.u32 %v2317, 16
      %v2444 = vrot.slane %v2442, 4
      %v2445 = vor.u32 %v2444, %v2440
      %v2446 = vrot.slane %v2445, 4
      %v2448 = vshll.u32 %v2328, 16
      %v2450 = vrot.slane %v2448, 5
      %v2451 = vsel %vm793, %v2446, %v2450
      %v2453 = vshrl.u32 %v2318, 16
      %v2455 = vrot.slane %v2453, 4
      %v2456 = vshll.u32 %v2318, 16
      %v2458 = vrot.slane %v2456, 5
      %v2459 = vor.u32 %v2455, %v2458
      %v2460 = vrot.slane %v2459, 4
      %v2462 = vshll.u32 %v2319, 16
      %v2464 = vrot.slane %v2462, 5
      %v2465 = vsel %vm793, %v2460, %v2464
      %v2466 = vshrl.u32 %v2319, 16
      %v2468 = vrot.slane %v2466, 4
      %v2469 = vor.u32 %v2468, %v2464
      %v2470 = vrot.slane %v2469, 4
      %v2472 = vshll.u32 %v2329, 16
      %v2474 = vrot.slane %v2472, 5
      %v2475 = vsel %vm793, %v2470, %v2474
      %v2477 = vshrl.u32 %v2320, 16
      %v2479 = vrot.slane %v2477, 4
      %v2480 = vshll.u32 %v2320, 16
      %v2482 = vrot.slane %v2480, 5
      %v2483 = vor.u32 %v2479, %v2482
      %v2484 = vrot.slane %v2483, 4
      %v2486 = vshll.u32 %v2321, 16
      %v2488 = vrot.slane %v2486, 5
      %v2489 = vsel %vm793, %v2484, %v2488
      %v2490 = vshrl.u32 %v2321, 16
      %v2492 = vrot.slane %v2490, 4
      %v2493 = vor.u32 %v2492, %v2488
      %v2494 = vrot.slane %v2493, 4
      %v2496 = vshll.u32 %v2330, 16
      %v2498 = vrot.slane %v2496, 5
      %v2499 = vsel %vm793, %v2494, %v2498
      %v2501 = vshrl.u32 %v2322, 16
      %v2503 = vrot.slane %v2501, 4
      %v2504 = vshll.u32 %v2322, 16
      %v2506 = vrot.slane %v2504, 5
      %v2507 = vor.u32 %v2503, %v2506
      %v2508 = vrot.slane %v2507, 4
      %v2510 = vshll.u32 %v2323, 16
      %v2512 = vrot.slane %v2510, 5
      %v2513 = vsel %vm793, %v2508, %v2512
      %v2514 = vshrl.u32 %v2323, 16
      %v2516 = vrot.slane %v2514, 4
      %v2517 = vor.u32 %v2516, %v2512
      %v2518 = vrot.slane %v2517, 4
      %v2520 = vshll.u32 %v2331, 16
      %v2522 = vrot.slane %v2520, 5
      %v2523 = vsel %vm793, %v2518, %v2522
      %v2540 = vunpack.c.l.b16 %v2308
      %v2541 = vunpack.c.l.b16 %v2309
      %v2542 = vunpack.c.l.b16 %v2310
      %v2543 = vunpack.c.l.b16 %v2311
      %v2544 = vunpack.c.l.b16 %v2312
      %v2545 = vunpack.c.l.b16 %v2313
      %v2546 = vunpack.c.l.b16 %v2314
      %v2547 = vunpack.c.l.b16 %v2315
      %v2548 = vunpack.c.l.b16 %v2316
      %v2549 = vunpack.c.l.b16 %v2317
      %v2550 = vunpack.c.l.b16 %v2318
      %v2551 = vunpack.c.l.b16 %v2319
      %v2552 = vunpack.c.l.b16 %v2320
      %v2553 = vunpack.c.l.b16 %v2321
      %v2554 = vunpack.c.l.b16 %v2322
      %v2555 = vunpack.c.l.b16 %v2323
      %v2556 = vpack.c.b16 %v2541, %v2540
      %v2557 = vpack.c.b16 %v2543, %v2542
      %v2558 = vpack.c.b16 %v2545, %v2544
      %v2559 = vpack.c.b16 %v2547, %v2546
      %v2560 = vpack.c.b16 %v2549, %v2548
      %v2561 = vpack.c.b16 %v2551, %v2550
      %v2562 = vpack.c.b16 %v2553, %v2552
      %v2563 = vpack.c.b16 %v2555, %v2554
      %v2572 = vunpack.c.l.b16 %v2345
      %v2573 = vunpack.c.l.b16 %v2355
      %v2574 = vunpack.c.l.b16 %v2369
      %v2575 = vunpack.c.l.b16 %v2379
      %v2576 = vunpack.c.l.b16 %v2393
      %v2577 = vunpack.c.l.b16 %v2403
      %v2578 = vunpack.c.l.b16 %v2417
      %v2579 = vunpack.c.l.b16 %v2427
      %v2580 = vunpack.c.l.b16 %v2441
      %v2581 = vunpack.c.l.b16 %v2451
      %v2582 = vunpack.c.l.b16 %v2465
      %v2583 = vunpack.c.l.b16 %v2475
      %v2584 = vunpack.c.l.b16 %v2489
      %v2585 = vunpack.c.l.b16 %v2499
      %v2586 = vunpack.c.l.b16 %v2513
      %v2587 = vunpack.c.l.b16 %v2523
      %v2588 = vpack.c.b16 %v2573, %v2572
      %v2589 = vpack.c.b16 %v2575, %v2574
      %v2590 = vpack.c.b16 %v2577, %v2576
      %v2591 = vpack.c.b16 %v2579, %v2578
      %v2592 = vpack.c.b16 %v2581, %v2580
      %v2593 = vpack.c.b16 %v2583, %v2582
      %v2594 = vpack.c.b16 %v2585, %v2584
      %v2595 = vpack.c.b16 %v2587, %v2586
      %v2604 = vld [vmem:[%s3 + $0x180] sm:$0xf]
      %v2605 = vld [vmem:[%s3 + $0x184] sm:$0xf]
      %v2606 = vld [vmem:[%s3 + $0x188] sm:$0xf]
      %v2607 = vld [vmem:[%s3 + $0x18c] sm:$0xf]
      %v2608 = vld [vmem:[%s3 + $0x190] sm:$0xf]
      %v2609 = vld [vmem:[%s3 + $0x194] sm:$0xf]
      %v2610 = vld [vmem:[%s3 + $0x198] sm:$0xf]
      %v2611 = vld [vmem:[%s3 + $0x19c] sm:$0xf]
      %v2612 = vld [vmem:[%s3 + $0x1a0] sm:$0xf]
      %v2613 = vld [vmem:[%s3 + $0x1a4] sm:$0xf]
      %v2614 = vld [vmem:[%s3 + $0x1a8] sm:$0xf]
      %v2615 = vld [vmem:[%s3 + $0x1ac] sm:$0xf]
      %v2616 = vld [vmem:[%s3 + $0x1b0] sm:$0xf]
      %v2617 = vld [vmem:[%s3 + $0x1b4] sm:$0xf]
      %v2618 = vld [vmem:[%s3 + $0x1b8] sm:$0xf]
      %v2619 = vld [vmem:[%s3 + $0x1bc] sm:$0xf]
      %v2620 = vld [vmem:[%s3 + $0x1c0] sm:$0xf]
      %v2621 = vld [vmem:[%s3 + $0x1c4] sm:$0xf]
      %v2622 = vld [vmem:[%s3 + $0x1c8] sm:$0xf]
      %v2623 = vld [vmem:[%s3 + $0x1cc] sm:$0xf]
      %v2624 = vld [vmem:[%s3 + $0x1d0] sm:$0xf]
      %v2625 = vld [vmem:[%s3 + $0x1d4] sm:$0xf]
      %v2626 = vld [vmem:[%s3 + $0x1d8] sm:$0xf]
      %v2627 = vld [vmem:[%s3 + $0x1dc] sm:$0xf]
      %v2628 = vld [vmem:[%s3 + $0x1e0] sm:$0xf]
      %v2629 = vld [vmem:[%s3 + $0x1e4] sm:$0xf]
      %v2630 = vld [vmem:[%s3 + $0x1e8] sm:$0xf]
      %v2631 = vld [vmem:[%s3 + $0x1ec] sm:$0xf]
      %v2632 = vld [vmem:[%s3 + $0x1f0] sm:$0xf]
      %v2633 = vld [vmem:[%s3 + $0x1f4] sm:$0xf]
      %v2634 = vld [vmem:[%s3 + $0x1f8] sm:$0xf]
      %v2635 = vld [vmem:[%s3 + $0x1fc] sm:$0xf]
      %v2668 = vunpack.c.l.b16 %v2604
      %v2669 = vunpack.c.l.b16 %v2605
      %v2670 = vunpack.c.l.b16 %v2606
      %v2671 = vunpack.c.l.b16 %v2607
      %v2672 = vunpack.c.l.b16 %v2608
      %v2673 = vunpack.c.l.b16 %v2609
      %v2674 = vunpack.c.l.b16 %v2610
      %v2675 = vunpack.c.l.b16 %v2611
      %v2676 = vunpack.c.l.b16 %v2612
      %v2677 = vunpack.c.l.b16 %v2613
      %v2678 = vunpack.c.l.b16 %v2614
      %v2679 = vunpack.c.l.b16 %v2615
      %v2680 = vunpack.c.l.b16 %v2616
      %v2681 = vunpack.c.l.b16 %v2617
      %v2682 = vunpack.c.l.b16 %v2618
      %v2683 = vunpack.c.l.b16 %v2619
      %v2684 = vunpack.c.l.b16 %v2620
      %v2685 = vunpack.c.l.b16 %v2621
      %v2686 = vunpack.c.l.b16 %v2622
      %v2687 = vunpack.c.l.b16 %v2623
      %v2688 = vunpack.c.l.b16 %v2624
      %v2689 = vunpack.c.l.b16 %v2625
      %v2690 = vunpack.c.l.b16 %v2626
      %v2691 = vunpack.c.l.b16 %v2627
      %v2692 = vunpack.c.l.b16 %v2628
      %v2693 = vunpack.c.l.b16 %v2629
      %v2694 = vunpack.c.l.b16 %v2630
      %v2695 = vunpack.c.l.b16 %v2631
      %v2696 = vunpack.c.l.b16 %v2632
      %v2697 = vunpack.c.l.b16 %v2633
      %v2698 = vunpack.c.l.b16 %v2634
      %v2699 = vunpack.c.l.b16 %v2635
      %v2700 = vpack.c.b16 %v2669, %v2668
      %v2701 = vpack.c.b16 %v2671, %v2670
      %v2702 = vpack.c.b16 %v2673, %v2672
      %v2703 = vpack.c.b16 %v2675, %v2674
      %v2704 = vpack.c.b16 %v2677, %v2676
      %v2705 = vpack.c.b16 %v2679, %v2678
      %v2706 = vpack.c.b16 %v2681, %v2680
      %v2707 = vpack.c.b16 %v2683, %v2682
      %v2708 = vpack.c.b16 %v2685, %v2684
      %v2709 = vpack.c.b16 %v2687, %v2686
      %v2710 = vpack.c.b16 %v2689, %v2688
      %v2711 = vpack.c.b16 %v2691, %v2690
      %v2712 = vpack.c.b16 %v2693, %v2692
      %v2713 = vpack.c.b16 %v2695, %v2694
      %v2714 = vpack.c.b16 %v2697, %v2696
      %v2715 = vpack.c.b16 %v2699, %v2698
      %2732 = vmatpush.bf16.msra.mxu0 %v2707
      %2733 = vmatpush.bf16.msra.mxu0 %v2706
      %2734 = vmatpush.bf16.msra.mxu0 %v2705
      %2735 = vmatpush.bf16.msra.mxu0 %v2704
      %2736 = vmatpush.bf16.msra.mxu0 %v2703
      %2737 = vmatpush.bf16.msra.mxu0 %v2702
      %2738 = vmatpush.bf16.msra.mxu0 %v2701
      %2739 = vmatpush.bf16.msra.mxu0 %v2700
      %2740 = vmatmul.bf16.gmra.mxu0 %v2556
      %v2741 = vpop.f32.mrf.mxu0
      %v2742 = vadd.f32 0.0, %v2741
      %v2743 = vpop.f32.mrf.mxu0
      %v2744 = vadd.f32 0.0, %v2743
      %2745 = vmatmul.bf16.gmra.mxu0 %v2557
      %v2746 = vpop.f32.mrf.mxu0
      %v2747 = vadd.f32 0.0, %v2746
      %v2748 = vpop.f32.mrf.mxu0
      %v2749 = vadd.f32 0.0, %v2748
      %2750 = vmatmul.bf16.gmra.mxu0 %v2558
      %v2751 = vpop.f32.mrf.mxu0
      %v2752 = vadd.f32 0.0, %v2751
      %v2753 = vpop.f32.mrf.mxu0
      %v2754 = vadd.f32 0.0, %v2753
      %2755 = vmatmul.bf16.gmra.mxu0 %v2559
      %v2756 = vpop.f32.mrf.mxu0
      %v2757 = vadd.f32 0.0, %v2756
      %v2758 = vpop.f32.mrf.mxu0
      %v2759 = vadd.f32 0.0, %v2758
      %2760 = vmatmul.bf16.gmra.mxu0 %v2560
      %v2761 = vpop.f32.mrf.mxu0
      %v2762 = vadd.f32 0.0, %v2761
      %v2763 = vpop.f32.mrf.mxu0
      %v2764 = vadd.f32 0.0, %v2763
      %2765 = vmatmul.bf16.gmra.mxu0 %v2561
      %v2766 = vpop.f32.mrf.mxu0
      %v2767 = vadd.f32 0.0, %v2766
      %v2768 = vpop.f32.mrf.mxu0
      %v2769 = vadd.f32 0.0, %v2768
      %2770 = vmatmul.bf16.gmra.mxu0 %v2562
      %v2771 = vpop.f32.mrf.mxu0
      %v2772 = vadd.f32 0.0, %v2771
      %v2773 = vpop.f32.mrf.mxu0
      %v2774 = vadd.f32 0.0, %v2773
      %2775 = vmatmul.bf16.gmra.mxu0 %v2563
      %v2776 = vpop.f32.mrf.mxu0
      %v2777 = vadd.f32 0.0, %v2776
      %v2778 = vpop.f32.mrf.mxu0
      %v2779 = vadd.f32 0.0, %v2778
      %2780 = vdwg.mxu0
      %2781 = vmatpush.bf16.msra.mxu0 %v2715
      %2782 = vmatpush.bf16.msra.mxu0 %v2714
      %2783 = vmatpush.bf16.msra.mxu0 %v2713
      %2784 = vmatpush.bf16.msra.mxu0 %v2712
      %2785 = vmatpush.bf16.msra.mxu0 %v2711
      %2786 = vmatpush.bf16.msra.mxu0 %v2710
      %2787 = vmatpush.bf16.msra.mxu0 %v2709
      %2788 = vmatpush.bf16.msra.mxu0 %v2708
      %2789 = vmatmul.bf16.gmra.mxu0 %v2588
      %v2790 = vpop.f32.mrf.mxu0
      %v2791 = vadd.f32 %v2742, %v2790
      %v2792 = vpop.f32.mrf.mxu0
      %v2793 = vadd.f32 %v2744, %v2792
      %2794 = vmatmul.bf16.gmra.mxu0 %v2589
      %v2795 = vpop.f32.mrf.mxu0
      %v2796 = vadd.f32 %v2747, %v2795
      %v2797 = vpop.f32.mrf.mxu0
      %v2798 = vadd.f32 %v2749, %v2797
      %2799 = vmatmul.bf16.gmra.mxu0 %v2590
      %v2800 = vpop.f32.mrf.mxu0
      %v2801 = vadd.f32 %v2752, %v2800
      %v2802 = vpop.f32.mrf.mxu0
      %v2803 = vadd.f32 %v2754, %v2802
      %2804 = vmatmul.bf16.gmra.mxu0 %v2591
      %v2805 = vpop.f32.mrf.mxu0
      %v2806 = vadd.f32 %v2757, %v2805
      %v2807 = vpop.f32.mrf.mxu0
      %v2808 = vadd.f32 %v2759, %v2807
      %2809 = vmatmul.bf16.gmra.mxu0 %v2592
      %v2810 = vpop.f32.mrf.mxu0
      %v2811 = vadd.f32 %v2762, %v2810
      %v2812 = vpop.f32.mrf.mxu0
      %v2813 = vadd.f32 %v2764, %v2812
      %2814 = vmatmul.bf16.gmra.mxu0 %v2593
      %v2815 = vpop.f32.mrf.mxu0
      %v2816 = vadd.f32 %v2767, %v2815
      %v2817 = vpop.f32.mrf.mxu0
      %v2818 = vadd.f32 %v2769, %v2817
      %2819 = vmatmul.bf16.gmra.mxu0 %v2594
      %v2820 = vpop.f32.mrf.mxu0
      %v2821 = vadd.f32 %v2772, %v2820
      %v2822 = vpop.f32.mrf.mxu0
      %v2823 = vadd.f32 %v2774, %v2822
      %2824 = vmatmul.bf16.gmra.mxu0 %v2595
      %v2825 = vpop.f32.mrf.mxu0
      %v2826 = vadd.f32 %v2777, %v2825
      %v2827 = vpop.f32.mrf.mxu0
      %v2828 = vadd.f32 %v2779, %v2827
      %2829 = vdwg.mxu0
      %v2830 = vadd.f32 %v2291, %v2791
      %v2831 = vadd.f32 %v2292, %v2793
      %v2832 = vadd.f32 %v2293, %v2796
      %v2833 = vadd.f32 %v2294, %v2798
      %v2834 = vadd.f32 %v2295, %v2801
      %v2835 = vadd.f32 %v2296, %v2803
      %v2836 = vadd.f32 %v2297, %v2806
      %v2837 = vadd.f32 %v2298, %v2808
      %v2838 = vadd.f32 %v2299, %v2811
      %v2839 = vadd.f32 %v2300, %v2813
      %v2840 = vadd.f32 %v2301, %v2816
      %v2841 = vadd.f32 %v2302, %v2818
      %v2842 = vadd.f32 %v2303, %v2821
      %v2843 = vadd.f32 %v2304, %v2823
      %v2844 = vadd.f32 %v2305, %v2826
      %v2845 = vadd.f32 %v2306, %v2828
      %v2846 = vld [vmem:[%s2307] sm:$0xe]
      %v2847 = vld [vmem:[%s2307 + $0xc] sm:$0xe]
      %v2848 = vld [vmem:[%s2307 + $0x18] sm:$0xe]
      %v2849 = vld [vmem:[%s2307 + $0x24] sm:$0xe]
      %v2850 = vld [vmem:[%s2307 + $0x30] sm:$0xe]
      %v2851 = vld [vmem:[%s2307 + $0x3c] sm:$0xe]
      %v2852 = vld [vmem:[%s2307 + $0x48] sm:$0xe]
      %v2853 = vld [vmem:[%s2307 + $0x54] sm:$0xe]
      %v2870 = vrot.slane %v2846, 5
      %v2871 = vrot.slane %v2870, 4
      %v2872 = vrot.slane %v2309, 5
      %v2873 = vsel %vm1124, %v2871, %v2872
      %v2874 = vrot.slane %v2872, 4
      %v2875 = vrot.slane %v2324, 5
      %v2876 = vsel %vm1124, %v2874, %v2875
      %v2877 = vrot.slane %v2847, 5
      %v2878 = vrot.slane %v2877, 4
      %v2879 = vrot.slane %v2311, 5
      %v2880 = vsel %vm1124, %v2878, %v2879
      %v2881 = vrot.slane %v2879, 4
      %v2882 = vrot.slane %v2325, 5
      %v2883 = vsel %vm1124, %v2881, %v2882
      %v2884 = vrot.slane %v2848, 5
      %v2885 = vrot.slane %v2884, 4
      %v2886 = vrot.slane %v2313, 5
      %v2887 = vsel %vm1124, %v2885, %v2886
      %v2888 = vrot.slane %v2886, 4
      %v2889 = vrot.slane %v2326, 5
      %v2890 = vsel %vm1124, %v2888, %v2889
      %v2891 = vrot.slane %v2849, 5
      %v2892 = vrot.slane %v2891, 4
      %v2893 = vrot.slane %v2315, 5
      %v2894 = vsel %vm1124, %v2892, %v2893
      %v2895 = vrot.slane %v2893, 4
      %v2896 = vrot.slane %v2327, 5
      %v2897 = vsel %vm1124, %v2895, %v2896
      %v2898 = vrot.slane %v2850, 5
      %v2899 = vrot.slane %v2898, 4
      %v2900 = vrot.slane %v2317, 5
      %v2901 = vsel %vm1124, %v2899, %v2900
      %v2902 = vrot.slane %v2900, 4
      %v2903 = vrot.slane %v2328, 5
      %v2904 = vsel %vm1124, %v2902, %v2903
      %v2905 = vrot.slane %v2851, 5
      %v2906 = vrot.slane %v2905, 4
      %v2907 = vrot.slane %v2319, 5
      %v2908 = vsel %vm1124, %v2906, %v2907
      %v2909 = vrot.slane %v2907, 4
      %v2910 = vrot.slane %v2329, 5
      %v2911 = vsel %vm1124, %v2909, %v2910
      %v2912 = vrot.slane %v2852, 5
      %v2913 = vrot.slane %v2912, 4
      %v2914 = vrot.slane %v2321, 5
      %v2915 = vsel %vm1124, %v2913, %v2914
      %v2916 = vrot.slane %v2914, 4
      %v2917 = vrot.slane %v2330, 5
      %v2918 = vsel %vm1124, %v2916, %v2917
      %v2919 = vrot.slane %v2853, 5
      %v2920 = vrot.slane %v2919, 4
      %v2921 = vrot.slane %v2323, 5
      %v2922 = vsel %vm1124, %v2920, %v2921
      %v2923 = vrot.slane %v2921, 4
      %v2924 = vrot.slane %v2331, 5
      %v2925 = vsel %vm1124, %v2923, %v2924
      %v2926 = vld [vmem:[%s3 + $0x200] sm:$0xf]
      %v2927 = vld [vmem:[%s3 + $0x204] sm:$0xf]
      %v2928 = vld [vmem:[%s3 + $0x208] sm:$0xf]
      %v2929 = vld [vmem:[%s3 + $0x20c] sm:$0xf]
      %v2930 = vld [vmem:[%s3 + $0x210] sm:$0xf]
      %v2931 = vld [vmem:[%s3 + $0x214] sm:$0xf]
      %v2932 = vld [vmem:[%s3 + $0x218] sm:$0xf]
      %v2933 = vld [vmem:[%s3 + $0x21c] sm:$0xf]
      %v2934 = vld [vmem:[%s3 + $0x220] sm:$0xf]
      %v2935 = vld [vmem:[%s3 + $0x224] sm:$0xf]
      %v2936 = vld [vmem:[%s3 + $0x228] sm:$0xf]
      %v2937 = vld [vmem:[%s3 + $0x22c] sm:$0xf]
      %v2938 = vld [vmem:[%s3 + $0x230] sm:$0xf]
      %v2939 = vld [vmem:[%s3 + $0x234] sm:$0xf]
      %v2940 = vld [vmem:[%s3 + $0x238] sm:$0xf]
      %v2941 = vld [vmem:[%s3 + $0x23c] sm:$0xf]
      %v2942 = vunpack.c.l.b16 %v2873
      %v2943 = vunpack.c.l.b16 %v2876
      %v2944 = vunpack.c.l.b16 %v2880
      %v2945 = vunpack.c.l.b16 %v2883
      %v2946 = vunpack.c.l.b16 %v2887
      %v2947 = vunpack.c.l.b16 %v2890
      %v2948 = vunpack.c.l.b16 %v2894
      %v2949 = vunpack.c.l.b16 %v2897
      %v2950 = vunpack.c.l.b16 %v2901
      %v2951 = vunpack.c.l.b16 %v2904
      %v2952 = vunpack.c.l.b16 %v2908
      %v2953 = vunpack.c.l.b16 %v2911
      %v2954 = vunpack.c.l.b16 %v2915
      %v2955 = vunpack.c.l.b16 %v2918
      %v2956 = vunpack.c.l.b16 %v2922
      %v2957 = vunpack.c.l.b16 %v2925
      %v2958 = vpack.c.b16 %v2943, %v2942
      %v2959 = vpack.c.b16 %v2945, %v2944
      %v2960 = vpack.c.b16 %v2947, %v2946
      %v2961 = vpack.c.b16 %v2949, %v2948
      %v2962 = vpack.c.b16 %v2951, %v2950
      %v2963 = vpack.c.b16 %v2953, %v2952
      %v2964 = vpack.c.b16 %v2955, %v2954
      %v2965 = vpack.c.b16 %v2957, %v2956
      %v2990 = vunpack.c.l.b16 %v2926
      %v2991 = vunpack.c.l.b16 %v2927
      %v2992 = vunpack.c.l.b16 %v2928
      %v2993 = vunpack.c.l.b16 %v2929
      %v2994 = vunpack.c.l.b16 %v2930
      %v2995 = vunpack.c.l.b16 %v2931
      %v2996 = vunpack.c.l.b16 %v2932
      %v2997 = vunpack.c.l.b16 %v2933
      %v2998 = vunpack.c.l.b16 %v2934
      %v2999 = vunpack.c.l.b16 %v2935
      %v3000 = vunpack.c.l.b16 %v2936
      %v3001 = vunpack.c.l.b16 %v2937
      %v3002 = vunpack.c.l.b16 %v2938
      %v3003 = vunpack.c.l.b16 %v2939
      %v3004 = vunpack.c.l.b16 %v2940
      %v3005 = vunpack.c.l.b16 %v2941
      %v3006 = vpack.c.b16 %v2991, %v2990
      %v3007 = vpack.c.b16 %v2993, %v2992
      %v3008 = vpack.c.b16 %v2995, %v2994
      %v3009 = vpack.c.b16 %v2997, %v2996
      %v3010 = vpack.c.b16 %v2999, %v2998
      %v3011 = vpack.c.b16 %v3001, %v3000
      %v3012 = vpack.c.b16 %v3003, %v3002
      %v3013 = vpack.c.b16 %v3005, %v3004
      %3022 = vmatpush.bf16.msra.mxu0 %v3013
      %3023 = vmatpush.bf16.msra.mxu0 %v3012
      %3024 = vmatpush.bf16.msra.mxu0 %v3011
      %3025 = vmatpush.bf16.msra.mxu0 %v3010
      %3026 = vmatpush.bf16.msra.mxu0 %v3009
      %3027 = vmatpush.bf16.msra.mxu0 %v3008
      %3028 = vmatpush.bf16.msra.mxu0 %v3007
      %3029 = vmatpush.bf16.msra.mxu0 %v3006
      %3030 = vmatmul.bf16.gmra.mxu0 %v2958
      %v3031 = vpop.f32.mrf.mxu0
      %v3032 = vadd.f32 0.0, %v3031
      %v3033 = vpop.f32.mrf.mxu0
      %v3034 = vadd.f32 0.0, %v3033
      %3035 = vmatmul.bf16.gmra.mxu0 %v2959
      %v3036 = vpop.f32.mrf.mxu0
      %v3037 = vadd.f32 0.0, %v3036
      %v3038 = vpop.f32.mrf.mxu0
      %v3039 = vadd.f32 0.0, %v3038
      %3040 = vmatmul.bf16.gmra.mxu0 %v2960
      %v3041 = vpop.f32.mrf.mxu0
      %v3042 = vadd.f32 0.0, %v3041
      %v3043 = vpop.f32.mrf.mxu0
      %v3044 = vadd.f32 0.0, %v3043
      %3045 = vmatmul.bf16.gmra.mxu0 %v2961
      %v3046 = vpop.f32.mrf.mxu0
      %v3047 = vadd.f32 0.0, %v3046
      %v3048 = vpop.f32.mrf.mxu0
      %v3049 = vadd.f32 0.0, %v3048
      %3050 = vmatmul.bf16.gmra.mxu0 %v2962
      %v3051 = vpop.f32.mrf.mxu0
      %v3052 = vadd.f32 0.0, %v3051
      %v3053 = vpop.f32.mrf.mxu0
      %v3054 = vadd.f32 0.0, %v3053
      %3055 = vmatmul.bf16.gmra.mxu0 %v2963
      %v3056 = vpop.f32.mrf.mxu0
      %v3057 = vadd.f32 0.0, %v3056
      %v3058 = vpop.f32.mrf.mxu0
      %v3059 = vadd.f32 0.0, %v3058
      %3060 = vmatmul.bf16.gmra.mxu0 %v2964
      %v3061 = vpop.f32.mrf.mxu0
      %v3062 = vadd.f32 0.0, %v3061
      %v3063 = vpop.f32.mrf.mxu0
      %v3064 = vadd.f32 0.0, %v3063
      %3065 = vmatmul.bf16.gmra.mxu0 %v2965
      %v3066 = vpop.f32.mrf.mxu0
      %v3067 = vadd.f32 0.0, %v3066
      %v3068 = vpop.f32.mrf.mxu0
      %v3069 = vadd.f32 0.0, %v3068
      %3070 = vdwg.mxu0
      %v3071 = vadd.f32 %v2830, %v3032
      %v3072 = vadd.f32 %v2831, %v3034
      %v3073 = vadd.f32 %v2832, %v3037
      %v3074 = vadd.f32 %v2833, %v3039
      %v3075 = vadd.f32 %v2834, %v3042
      %v3076 = vadd.f32 %v2835, %v3044
      %v3077 = vadd.f32 %v2836, %v3047
      %v3078 = vadd.f32 %v2837, %v3049
      %v3079 = vadd.f32 %v2838, %v3052
      %v3080 = vadd.f32 %v2839, %v3054
      %v3081 = vadd.f32 %v2840, %v3057
      %v3082 = vadd.f32 %v2841, %v3059
      %v3083 = vadd.f32 %v2842, %v3062
      %v3084 = vadd.f32 %v2843, %v3064
      %v3085 = vadd.f32 %v2844, %v3067
      %v3086 = vadd.f32 %v2845, %v3069
      %v3087 = vpack.c.bf16 %v3071, %v3071
      %v3088 = vpack.c.bf16 %v3072, %v3072
      %v3089 = vpack.c.bf16 %v3073, %v3073
      %v3090 = vpack.c.bf16 %v3074, %v3074
      %v3091 = vpack.c.bf16 %v3075, %v3075
      %v3092 = vpack.c.bf16 %v3076, %v3076
      %v3093 = vpack.c.bf16 %v3077, %v3077
      %v3094 = vpack.c.bf16 %v3078, %v3078
      %v3095 = vpack.c.bf16 %v3079, %v3079
      %v3096 = vpack.c.bf16 %v3080, %v3080
      %v3097 = vpack.c.bf16 %v3081, %v3081
      %v3098 = vpack.c.bf16 %v3082, %v3082
      %v3099 = vpack.c.bf16 %v3083, %v3083
      %v3100 = vpack.c.bf16 %v3084, %v3084
      %v3101 = vpack.c.bf16 %v3085, %v3085
      %v3102 = vpack.c.bf16 %v3086, %v3086
      %3103 = vst [vmem:[%s261] sm:$0xf] %v3087
      %3104 = vst [vmem:[%s261 + $0x4] sm:$0xf] %v3088
      %3105 = vst [vmem:[%s261 + $0x8] sm:$0xf] %v3089
      %3106 = vst [vmem:[%s261 + $0xc] sm:$0xf] %v3090
      %3107 = vst [vmem:[%s261 + $0x10] sm:$0xf] %v3091
      %3108 = vst [vmem:[%s261 + $0x14] sm:$0xf] %v3092
      %3109 = vst [vmem:[%s261 + $0x18] sm:$0xf] %v3093
      %3110 = vst [vmem:[%s261 + $0x1c] sm:$0xf] %v3094
      %3111 = vst [vmem:[%s261 + $0x20] sm:$0xf] %v3095
      %3112 = vst [vmem:[%s261 + $0x24] sm:$0xf] %v3096
      %3113 = vst [vmem:[%s261 + $0x28] sm:$0xf] %v3097
      %3114 = vst [vmem:[%s261 + $0x2c] sm:$0xf] %v3098
      %3115 = vst [vmem:[%s261 + $0x30] sm:$0xf] %v3099
      %3116 = vst [vmem:[%s261 + $0x34] sm:$0xf] %v3100
      %3117 = vst [vmem:[%s261 + $0x38] sm:$0xf] %v3101
      %3118 = vst [vmem:[%s261 + $0x3c] sm:$0xf] %v3102
      %v3119 = vadd.f32 %v3071, %v3072
      %v3120 = vadd.f32 %v3119, %v3073
      %v3121 = vadd.f32 %v3120, %v3074
      %v3122 = vadd.f32 %v3121, %v3075
      %v3123 = vadd.f32 %v3122, %v3076
      %v3124 = vadd.f32 %v3123, %v3077
      %v3125 = vadd.f32 %v3124, %v3078
      %v3126 = vadd.f32 %v3125, %v3079
      %v3127 = vadd.f32 %v3126, %v3080
      %v3128 = vadd.f32 %v3127, %v3081
      %v3129 = vadd.f32 %v3128, %v3082
      %v3130 = vadd.f32 %v3129, %v3083
      %v3131 = vadd.f32 %v3130, %v3084
      %v3132 = vadd.f32 %v3131, %v3085
      %v3133 = vadd.f32 %v3132, %v3086
      %v3134 = vrot.slane %v3133, 4
      %v3135 = vadd.f32 %v3133, %v3134
      %v3136 = vrot.slane %v3135, 2
      %v3137 = vadd.f32 %v3135, %v3136
      %v3138 = vrot.slane %v3137, 1
      %v3139 = vadd.f32 %v3137, %v3138
      %v3140 = vmul.f32 %v3071, %v3071
      %v3141 = vmul.f32 %v3072, %v3072
      %v3142 = vmul.f32 %v3073, %v3073
      %v3143 = vmul.f32 %v3074, %v3074
      %v3144 = vmul.f32 %v3075, %v3075
      %v3145 = vmul.f32 %v3076, %v3076
      %v3146 = vmul.f32 %v3077, %v3077
      %v3147 = vmul.f32 %v3078, %v3078
      %v3148 = vmul.f32 %v3079, %v3079
      %v3149 = vmul.f32 %v3080, %v3080
      %v3150 = vmul.f32 %v3081, %v3081
      %v3151 = vmul.f32 %v3082, %v3082
      %v3152 = vmul.f32 %v3083, %v3083
      %v3153 = vmul.f32 %v3084, %v3084
      %v3154 = vmul.f32 %v3085, %v3085
      %v3155 = vmul.f32 %v3086, %v3086
      %v3156 = vadd.f32 %v3140, %v3141
      %v3157 = vadd.f32 %v3156, %v3142
      %v3158 = vadd.f32 %v3157, %v3143
      %v3159 = vadd.f32 %v3158, %v3144
      %v3160 = vadd.f32 %v3159, %v3145
      %v3161 = vadd.f32 %v3160, %v3146
      %v3162 = vadd.f32 %v3161, %v3147
      %v3163 = vadd.f32 %v3162, %v3148
      %v3164 = vadd.f32 %v3163, %v3149
      %v3165 = vadd.f32 %v3164, %v3150
      %v3166 = vadd.f32 %v3165, %v3151
      %v3167 = vadd.f32 %v3166, %v3152
      %v3168 = vadd.f32 %v3167, %v3153
      %v3169 = vadd.f32 %v3168, %v3154
      %v3170 = vadd.f32 %v3169, %v3155
      %v3171 = vrot.slane %v3170, 4
      %v3172 = vadd.f32 %v3170, %v3171
      %v3173 = vrot.slane %v3172, 2
      %v3174 = vadd.f32 %v3172, %v3173
      %v3175 = vrot.slane %v3174, 1
      %v3176 = vadd.f32 %v3174, %v3175
      %vm3177 = vcmask 1040384
      %v3178 = vsel %vm3177, %v3139, %v3176
      %3179 = vst [vmem:[%s270] sm:$0x3] %v3178
      %s3180 = smul.u32 8, %s22
      %p3181 = scmp.lt.s32.totalorder %s21, 1
      %s3182 = scalar_select %p3181, %s21, 1
      %p3183 = scmp.lt.s32.totalorder %s3180, 15
      %s3184 = scalar_select %p3183, %s3180, 15
      %s3185 = smul.addr %s3184, 2
      %s3186 = smul.addr %s3182, 32
      %s3187 = sadd.s32 %s3185, %s3186
      %s3188 = smul.addr %s3187, 4
      %s3189 = scalar_lea.vmem %s4, %s3188
      %p3190 = scmp.lt.s32.totalorder %s21, 1
      %s3191 = scalar_select %p3190, %s21, 1
      %p3192 = scmp.lt.s32.totalorder %s22, 1
      %s3193 = scalar_select %p3192, %s22, 1
      %s3194 = smul.addr %s3191, 2
      %s3195 = sadd.s32 %s3193, %s3194
      %s3196 = smul.addr %s3195, 2
      %s3197 = scalar_lea.vmem %s5, %s3196
      // Predicated region
      $region45: #{bottleneck_forward.5} parent=35 // pred_check
        %p3198 = pneg %p138
      $region46: #{bottleneck_forward.5} parent=35 // pred_check_branch
        %3200 = sbr.rel (%p3198) target = $region48
      $region47: #{bottleneck_forward.5} parent=35 // pred_region
        %s3201 = smul.u32 8, %s22
      $region48: #{bottleneck_forward.5} parent=35 // pred_fallthru
        _
      // Predicated region
      $region49: #{bottleneck_forward.5} parent=35 // pred_check
        %p3202 = pneg %p166
      $region50: #{bottleneck_forward.5} parent=35 // pred_check_branch
        %3204 = sbr.rel (%p3202) target = $region52
      $region51: #{bottleneck_forward.5} parent=35 // pred_region
        _
      $region52: #{bottleneck_forward.5} parent=35 // pred_fallthru
        _
    $region36: #{bottleneck_forward.5} parent=5 // pred_fallthru
      _
    %p3205 = scmp.le.s32.totalorder 2, %s12
    // Predicated region
    $region53: #{bottleneck_forward.5} parent=5 // pred_check
      %p3206 = pneg %p3205
    $region54: #{bottleneck_forward.5} parent=5 // pred_check_branch
      %3208 = sbr.rel (%p3206) target = $region56
    $region55: #{bottleneck_forward.5} parent=5 // pred_region
      %s3209 = ssub.s32 %s12, 2
      // Predicated region
      $region57: #{bottleneck_forward.5} parent=55 // pred_check
        %p3210 = pneg %p144
      $region58: #{bottleneck_forward.5} parent=55 // pred_check_branch
        %3212 = sbr.rel (%p3210) target = $region60
      $region59: #{bottleneck_forward.5} parent=55 // pred_region
        %s3213 = smul.u32 8, %s24
        %p3214 = scmp.lt.s32.totalorder %s23, 1
        %s3215 = scalar_select %p3214, %s23, 1
        %p3216 = scmp.lt.s32.totalorder %s3213, 15
        %s3217 = scalar_select %p3216, %s3213, 15
        %s3218 = smul.addr %s3217, 2
        %s3219 = smul.addr %s3215, 32
        %s3220 = sadd.s32 %s3218, %s3219
        %s3221 = smul.addr %s3220, 4
        %s3222 = scalar_lea.vmem %s4, %s3221
      $region60: #{bottleneck_forward.5} parent=55 // pred_fallthru
        _
      // Predicated region
      $region61: #{bottleneck_forward.5} parent=55 // pred_check
        %p3223 = pneg %p172
      $region62: #{bottleneck_forward.5} parent=55 // pred_check_branch
        %3225 = sbr.rel (%p3223) target = $region64
      $region63: #{bottleneck_forward.5} parent=55 // pred_region
        %p3226 = scmp.lt.s32.totalorder %s23, 1
        %s3227 = scalar_select %p3226, %s23, 1
        %p3228 = scmp.lt.s32.totalorder %s24, 1
        %s3229 = scalar_select %p3228, %s24, 1
        %s3230 = smul.addr %s3227, 2
        %s3231 = sadd.s32 %s3229, %s3230
        %s3232 = smul.addr %s3231, 2
        %s3233 = scalar_lea.vmem %s5, %s3232
      $region64: #{bottleneck_forward.5} parent=55 // pred_fallthru
        _
    $region56: #{bottleneck_forward.5} parent=5 // pred_fallthru
      _
  $region6: #{bottleneck_forward.5} parent=0 // loop_footer
    %s16 = sadd.s32 1, %s12
  $region7: #{bottleneck_forward.5} parent=0 // loop_footer_branch
    %11 = sbr.rel target = $region3
  $region8: #{bottleneck_forward.5} parent=0 // loop_exit
    _

</llo_original>
